<compile_context>
chip_gen: v6e
topology: v6e:2x2x1
jax: 0.10.0
libtpu: 0.0.40
codegen_flags: <defaults>
</compile_context>

<pallas_src>
import jax
import jax.numpy as jnp
from jax import lax
from jax.experimental import pallas as pl
from jax.experimental.pallas import tpu as pltpu

D_MODEL = 32      # d_model (must equal dim_inner for the SSM broadcast)
DT_RANK = 8
DIM_INNER = 32
D_STATE = 8
N_LAYERS = 2      # Encoder N


def _pick_act_dtype():
    """bf16 transcendentals on v6e/v7x (bf16 EUP/VPU), f32 on v5e and older."""
    try:
        kind = jax.devices()[0].device_kind.lower()
    except Exception:
        return jnp.float32
    if ("v6" in kind) or ("v7" in kind) or ("7x" in kind):
        return jnp.bfloat16
    return jnp.float32


def _make_kernel(act_dtype):
    def wave_act(x, w_sin, w_cos):
        # w1*sin(x) + w2*cos(x); sin/cos in act_dtype, scalar weights are f32 so the
        # result promotes back to f32.
        xa = x.astype(act_dtype)
        return w_sin * jnp.sin(xa) + w_cos * jnp.cos(xa)

    def softplus(x):
        # numerically-stable log(1 + exp(x)); transcendental part in act_dtype.
        xa = x.astype(act_dtype)
        return (jnp.log1p(jnp.exp(-jnp.abs(xa))) + jnp.maximum(xa, 0.0)).astype(jnp.float32)

    def kernel(x_ref, w1_ref, b1_ref, w2_ref, b2_ref, nega_ref, dpar_ref,
               wo_ref, bo_ref, waves_ref, out_ref, da_scr, bx_scr, hs_scr):
        TB, S, D = x_ref.shape
        unroll = S if S <= 8 else 8
        xf = x_ref[...].reshape(TB * S, D)                      # (rows, D)

        for l in range(N_LAYERS):                               # static unroll (N=2)
            # ---- fused [z_proj | conv1d(x_proj)] : one matmul, shared LHS ----
            p1 = jnp.dot(xf, w1_ref[l], preferred_element_type=jnp.float32) + b1_ref[l]
            z = wave_act(p1[:, :D], waves_ref[4 * l + 0], waves_ref[4 * l + 1])
            xs = wave_act(softplus(p1[:, D:]), waves_ref[4 * l + 2], waves_ref[4 * l + 3])

            # ---- fused SSM input projection: [delta (dt_proj folded) | B | C] ----
            p2 = jnp.dot(xs, w2_ref[l], preferred_element_type=jnp.float32) + b2_ref[l]
            delta = softplus(p2[:, :DIM_INNER])                 # (rows, dim_inner)
            Bm = p2[:, DIM_INNER:DIM_INNER + D_STATE].reshape(TB, S, D_STATE)
            Cm = p2[:, DIM_INNER + D_STATE:].reshape(TB, S, D_STATE)

            negA = nega_ref[l]                                  # (d_state, dim_inner)
            xs3 = xs.reshape(TB, S, D)
            z3 = z.reshape(TB, S, D)
            delta3 = delta.reshape(TB, S, D)

            # ---- bulk precompute: EUP exp + lane->sublane broadcasts off the scan ----
            da_scr[...] = jnp.exp(delta3[:, :, None, :] * negA[None, None, :, :])
            bx_scr[...] = (delta3 * xs3)[:, :, None, :] * Bm[:, :, :, None]

            # ---- sequential selective scan: only h = dA*h + BX is serial ----
            def scan_body(t, h):
                h = da_scr[:, pl.ds(t, 1)] * h + bx_scr[:, pl.ds(t, 1)]
                hs_scr[:, pl.ds(t, 1)] = h
                return h

            h0 = jnp.zeros((TB, 1, D_STATE, DIM_INNER), jnp.float32)
            lax.fori_loop(0, S, scan_body, h0, unroll=unroll)

            # ---- vectorized epilogue: C-contract, +D*x, z-gate, out_proj, residual ----
            y = jnp.sum(hs_scr[...] * Cm[:, :, :, None], axis=2)        # (TB, S, D)
            g = ((y + dpar_ref[l] * xs3) * z3).reshape(TB * S, D)
            xf = xf + jnp.dot(g, wo_ref[l], preferred_element_type=jnp.float32) + bo_ref[l]

        # ---- final Encoder WaveAct (fused, no extra launch) ----
        out = wave_act(xf, waves_ref[4 * N_LAYERS + 0], waves_ref[4 * N_LAYERS + 1])
        out_ref[...] = out.astype(jnp.float32).reshape(TB, S, D)

    return kernel


def encoder_forward(x, fused, *, block_b=None):
    B, S, D = x.shape
    assert D == D_MODEL and DIM_INNER == D_MODEL, \
        "the SSM broadcast (BX = deltaB * x[..., None]) requires dim_inner == d_model"

    if block_b is None:
        # ~256 tokens per block keeps block buffers + scratch + temporaries well inside
        # the scoped-VMEM defaults (16 MiB v5e / 32 MiB v6e) and v7x's 64 MiB VMEM.
        target = max(1, 256 // max(S, 1))
        block_b = 1
        for cand in range(min(B, target), 0, -1):
            if B % cand == 0:
                block_b = cand
                break
    assert B % block_b == 0
    grid = (B // block_b,)
    tokens = block_b * S

    weight_keys = ("w1", "b1", "w2", "b2", "negA", "dpar", "wo", "bo")
    n_waves = int(fused["waves"].shape[0])

    def resident(arr):
        # full-array block with a constant index_map -> stays resident in VMEM
        nd = arr.ndim
        return pl.BlockSpec(tuple(arr.shape), lambda i, _nd=nd: (0,) * _nd)

    in_specs = [pl.BlockSpec((block_b, S, D), lambda i: (i, 0, 0))]
    in_specs += [resident(fused[k]) for k in weight_keys]
    in_specs += [pl.BlockSpec((n_waves,), lambda i: (0,),
                              memory_space=pltpu.MemorySpace.SMEM)]
    out_spec = pl.BlockSpec((block_b, S, D), lambda i: (i, 0, 0))

    # dA, BX, hs slabs for the scan (d_state on sublanes, dim_inner on lanes).
    scratch = [pltpu.VMEM((block_b, S, D_STATE, DIM_INNER), jnp.float32)
               for _ in range(3)]

    # rough VMEM budget for this block (includes the 32->128 lane padding of the
    # (.., d_state, dim_inner) scratch tiles) plus headroom for temporaries.
    w_bytes = sum(int(fused[k].size) for k in weight_keys) * 4
    scratch_bytes = 3 * tokens * D_STATE * 128 * 4
    act_bytes = 16 * tokens * 128 * 4
    vmem_limit = int(min(max(2 * (w_bytes + scratch_bytes + act_bytes), 8 << 20), 32 << 20))

    flops_tok = N_LAYERS * (2 * D * (2 * D) + 2 * D * (DIM_INNER + 2 * D_STATE)
                            + 2 * D * D + 12 * D_STATE * DIM_INNER + 24 * D) + 8 * D
    transc_tok = N_LAYERS * (4 * D + 2 * (D + DIM_INNER) + D_STATE * DIM_INNER) + 2 * D
    cost = pl.CostEstimate(
        flops=int(B * S * flops_tok),
        transcendentals=int(B * S * transc_tok),
        bytes_accessed=int(2 * B * S * D * 4 + w_bytes + n_waves * 4),
    )

    kernel = _make_kernel(_pick_act_dtype())
    return pl.pallas_call(
        kernel,
        out_shape=jax.ShapeDtypeStruct((B, S, D), jnp.float32),
        grid=grid,
        in_specs=in_specs,
        out_specs=out_spec,
        scratch_shapes=scratch,
        compiler_params=pltpu.CompilerParams(
            dimension_semantics=("parallel",),
            vmem_limit_bytes=vmem_limit),
        cost_estimate=cost,
        input_output_aliases={0: 0},
    )(x, *[fused[k] for k in weight_keys], fused["waves"])


def init_layer_params(key):
    """Raw parameters matching the PyTorch EncoderLayer(d_model, heads, 8, 32, 8)."""
    ks = jax.random.split(key, 6)

    def lin(k, fin, fout):
        kw, kb = jax.random.split(k)
        bound = 1.0 / jnp.sqrt(jnp.float32(fin))
        W = jax.random.uniform(kw, (fin, fout), jnp.float32, -bound, bound)
        b = jax.random.uniform(kb, (1, fout), jnp.float32, -bound, bound)
        return W, b

    wz, bz = lin(ks[0], D_MODEL, D_MODEL)                    # z_proj
    wx, bx = lin(ks[1], D_MODEL, D_MODEL)                    # x_proj
    wc, bc = lin(ks[2], D_MODEL, D_MODEL)                    # Conv1d(d, d, 1) == per-pos linear
    wdbc, bdbc = lin(ks[3], D_MODEL, DT_RANK + 2 * D_STATE)  # deltaBC_layer
    wdt, bdt = lin(ks[4], DT_RANK, DIM_INNER)                # dt_proj_layer
    wo, bo = lin(ks[5], D_MODEL, D_MODEL)                    # out_proj
    A_log = jnp.log(jnp.tile(jnp.arange(1, D_STATE + 1, dtype=jnp.float32),
                             (DIM_INNER, 1)))                # (dim_inner, d_state)
    Dp = jnp.ones((DIM_INNER,), jnp.float32)                 # SSM D parameter
    wave = jnp.ones((4,), jnp.float32)                       # [act1.w1, act1.w2, act2.w1, act2.w2]
    return dict(wz=wz, bz=bz, wx=wx, bx=bx, wc=wc, bc=bc, wdbc=wdbc, bdbc=bdbc,
                wdt=wdt, bdt=bdt, wo=wo, bo=bo, A_log=A_log, D=Dp, wave=wave)


def prepare_fused_params(layer_params, final_wave):
    """Trace-time folding / merging of weights + stacking across layers.
    (Weights here are (fin, fout) for right-multiplication; loading a real PyTorch
    state_dict would need transposes and Conv1d weight squeezing.)"""
    w1s, b1s, w2s, b2s, negAs, dpars, wos, bos, waves = [], [], [], [], [], [], [], [], []
    for p in layer_params:
        # x_proj followed by conv1d(k=1) (no nonlinearity between) -> one linear
        w_xc = p["wx"] @ p["wc"]
        b_xc = p["bx"] @ p["wc"] + p["bc"]
        w1s.append(jnp.concatenate([p["wz"], w_xc], axis=1))        # (32, 64)
        b1s.append(jnp.concatenate([p["bz"], b_xc], axis=1))        # (1, 64)

        # deltaBC columns: [dt_rank | B | C]; fold the delta columns with dt_proj
        wd = p["wdbc"][:, :DT_RANK]
        bd = p["bdbc"][:, :DT_RANK]
        wB = p["wdbc"][:, DT_RANK:DT_RANK + D_STATE]
        bB = p["bdbc"][:, DT_RANK:DT_RANK + D_STATE]
        wC = p["wdbc"][:, DT_RANK + D_STATE:]
        bC = p["bdbc"][:, DT_RANK + D_STATE:]
        w_delta = wd @ p["wdt"]
        b_delta = bd @ p["wdt"] + p["bdt"]
        w2s.append(jnp.concatenate([w_delta, wB, wC], axis=1))      # (32, 48)
        b2s.append(jnp.concatenate([b_delta, bB, bC], axis=1))      # (1, 48)

        negAs.append(-jnp.exp(p["A_log"]).T)                        # (d_state, dim_inner)
        dpars.append(p["D"].reshape(1, DIM_INNER))
        wos.append(p["wo"])
        bos.append(p["bo"])
        waves.append(p["wave"])

    waves = jnp.concatenate(waves + [final_wave])                   # (4*N + 2,)
    return dict(w1=jnp.stack(w1s), b1=jnp.stack(b1s),
                w2=jnp.stack(w2s), b2=jnp.stack(b2s),
                negA=jnp.stack(negAs), dpar=jnp.stack(dpars),
                wo=jnp.stack(wos), bo=jnp.stack(bos), waves=waves)


if __name__ == "__main__":
    key = jax.random.PRNGKey(0)
    B, S = 4, 8
    keys = jax.random.split(key, N_LAYERS + 1)
    x = jax.random.normal(keys[0], (B, S, D_MODEL), jnp.float32)
    layer_params = [init_layer_params(keys[i + 1]) for i in range(N_LAYERS)]
    final_wave = jnp.ones((2,), jnp.float32)          # Encoder.act WaveAct
    fused = prepare_fused_params(layer_params, final_wave)

    # block_b=2 -> grid=(2,): exercises the pipelined batch grid + "parallel" sharding.
    out = encoder_forward(x, fused, block_b=2)
    jax.block_until_ready(out)
    assert out.shape == (B, S, D_MODEL)
    assert bool(jnp.all(jnp.isfinite(out)))
    print("KERNEL_OK")
</pallas_src>

<mosaic_0001>
module attributes {stable_mosaic.version = 11 : i64} {
  func.func @kernel(%arg0: i32, %arg1: memref<2x8x32xf32, #tpu.memory_space<vmem>>, %arg2: memref<2x32x64xf32, #tpu.memory_space<vmem>>, %arg3: memref<2x1x64xf32, #tpu.memory_space<vmem>>, %arg4: memref<2x32x48xf32, #tpu.memory_space<vmem>>, %arg5: memref<2x1x48xf32, #tpu.memory_space<vmem>>, %arg6: memref<2x8x32xf32, #tpu.memory_space<vmem>>, %arg7: memref<2x1x32xf32, #tpu.memory_space<vmem>>, %arg8: memref<2x32x32xf32, #tpu.memory_space<vmem>>, %arg9: memref<2x1x32xf32, #tpu.memory_space<vmem>>, %arg10: memref<10xf32, #tpu.memory_space<smem>>, %arg11: memref<2x8x32xf32, #tpu.memory_space<vmem>>, %arg12: memref<2x8x8x32xf32, #tpu.memory_space<vmem>>, %arg13: memref<2x8x8x32xf32, #tpu.memory_space<vmem>>, %arg14: memref<2x8x8x32xf32, #tpu.memory_space<vmem>>) attributes {dimension_semantics = [#tpu.dimension_semantics<parallel>], iteration_bounds = array<i64: 2>, scalar_prefetch = 0 : i64, scratch_operands = 3 : i64, tpu.core_type = #tpu.core_type<tc>, window_params = [{transform_indices = @transform_0, window_bounds = array<i64: 2, 8, 32>}, {pipeline_mode = #tpu.pipeline_mode<synchronous>, transform_indices = @transform_1, window_bounds = array<i64: 2, 32, 64>}, {pipeline_mode = #tpu.pipeline_mode<synchronous>, transform_indices = @transform_2, window_bounds = array<i64: 2, 1, 64>}, {pipeline_mode = #tpu.pipeline_mode<synchronous>, transform_indices = @transform_3, window_bounds = array<i64: 2, 32, 48>}, {pipeline_mode = #tpu.pipeline_mode<synchronous>, transform_indices = @transform_4, window_bounds = array<i64: 2, 1, 48>}, {pipeline_mode = #tpu.pipeline_mode<synchronous>, transform_indices = @transform_5, window_bounds = array<i64: 2, 8, 32>}, {pipeline_mode = #tpu.pipeline_mode<synchronous>, transform_indices = @transform_6, window_bounds = array<i64: 2, 1, 32>}, {pipeline_mode = #tpu.pipeline_mode<synchronous>, transform_indices = @transform_7, window_bounds = array<i64: 2, 32, 32>}, {pipeline_mode = #tpu.pipeline_mode<synchronous>, transform_indices = @transform_8, window_bounds = array<i64: 2, 1, 32>}, {transform_indices = @transform_9, window_bounds = array<i64: 10>}, {transform_indices = @transform_10, window_bounds = array<i64: 2, 8, 32>}]} {
    %c0 = arith.constant 0 : index
    %c0_0 = arith.constant 0 : index
    %c0_1 = arith.constant 0 : index
    %0 = vector.load %arg1[%c0, %c0_0, %c0_1] : memref<2x8x32xf32, #tpu.memory_space<vmem>>, vector<2x8x32xf32>
    %1 = vector.shape_cast %0 : vector<2x8x32xf32> to vector<16x32xf32>
    %c0_2 = arith.constant 0 : index
    %c0_3 = arith.constant 0 : index
    %c0_4 = arith.constant 0 : index
    %2 = vector.load %arg2[%c0_2, %c0_3, %c0_4] : memref<2x32x64xf32, #tpu.memory_space<vmem>>, vector<1x32x64xf32>
    %3 = vector.shape_cast %2 : vector<1x32x64xf32> to vector<32x64xf32>
    %cst = arith.constant dense<0.000000e+00> : vector<16x64xf32>
    %4 = tpu.matmul %1, %3, %cst {dimension_numbers = #tpu.dot_dimension_numbers<[1], [0], [0], [1], [0, 0, 1, 1], [], []>} : vector<16x32xf32>, vector<32x64xf32>, vector<16x64xf32> -> vector<16x64xf32>
    %c0_5 = arith.constant 0 : index
    %c0_6 = arith.constant 0 : index
    %c0_7 = arith.constant 0 : index
    %5 = vector.load %arg3[%c0_5, %c0_6, %c0_7] : memref<2x1x64xf32, #tpu.memory_space<vmem>>, vector<1x1x64xf32>
    %6 = vector.shape_cast %5 : vector<1x1x64xf32> to vector<1x64xf32>
    %7 = vector.broadcast %6 : vector<1x64xf32> to vector<16x64xf32>
    %8 = arith.addf %4, %7 : vector<16x64xf32>
    %9 = vector.extract_strided_slice %8 {offsets = [0, 0], sizes = [16, 32], strides = [1, 1]} : vector<16x64xf32> to vector<16x32xf32>
    %c0_8 = arith.constant 0 : index
    %10 = memref.load %arg10[%c0_8] : memref<10xf32, #tpu.memory_space<smem>>
    %c1 = arith.constant 1 : index
    %11 = memref.load %arg10[%c1] : memref<10xf32, #tpu.memory_space<smem>>
    %12 = math.sin %9 : vector<16x32xf32>
    %13 = vector.broadcast %10 : f32 to vector<16x32xf32>
    %14 = arith.mulf %13, %12 : vector<16x32xf32>
    %15 = math.cos %9 : vector<16x32xf32>
    %16 = vector.broadcast %11 : f32 to vector<16x32xf32>
    %17 = arith.mulf %16, %15 : vector<16x32xf32>
    %18 = arith.addf %14, %17 : vector<16x32xf32>
    %19 = vector.extract_strided_slice %8 {offsets = [0, 32], sizes = [16, 32], strides = [1, 1]} : vector<16x64xf32> to vector<16x32xf32>
    %20 = math.absf %19 : vector<16x32xf32>
    %cst_9 = arith.constant 0.000000e+00 : f32
    %21 = vector.broadcast %cst_9 : f32 to vector<16x32xf32>
    %22 = arith.subf %21, %20 : vector<16x32xf32>
    %23 = math.exp %22 : vector<16x32xf32>
    %24 = math.log1p %23 : vector<16x32xf32>
    %cst_10 = arith.constant 0.000000e+00 : f32
    %25 = vector.broadcast %cst_10 : f32 to vector<16x32xf32>
    %26 = arith.maximumf %19, %25 : vector<16x32xf32>
    %27 = arith.addf %24, %26 : vector<16x32xf32>
    %c2 = arith.constant 2 : index
    %28 = memref.load %arg10[%c2] : memref<10xf32, #tpu.memory_space<smem>>
    %c3 = arith.constant 3 : index
    %29 = memref.load %arg10[%c3] : memref<10xf32, #tpu.memory_space<smem>>
    %30 = math.sin %27 : vector<16x32xf32>
    %31 = vector.broadcast %28 : f32 to vector<16x32xf32>
    %32 = arith.mulf %31, %30 : vector<16x32xf32>
    %33 = math.cos %27 : vector<16x32xf32>
    %34 = vector.broadcast %29 : f32 to vector<16x32xf32>
    %35 = arith.mulf %34, %33 : vector<16x32xf32>
    %36 = arith.addf %32, %35 : vector<16x32xf32>
    %c0_11 = arith.constant 0 : index
    %c0_12 = arith.constant 0 : index
    %c0_13 = arith.constant 0 : index
    %37 = vector.load %arg4[%c0_11, %c0_12, %c0_13] : memref<2x32x48xf32, #tpu.memory_space<vmem>>, vector<1x32x48xf32>
    %38 = vector.shape_cast %37 : vector<1x32x48xf32> to vector<32x48xf32>
    %cst_14 = arith.constant dense<0.000000e+00> : vector<16x48xf32>
    %39 = tpu.matmul %36, %38, %cst_14 {dimension_numbers = #tpu.dot_dimension_numbers<[1], [0], [0], [1], [0, 0, 1, 1], [], []>} : vector<16x32xf32>, vector<32x48xf32>, vector<16x48xf32> -> vector<16x48xf32>
    %c0_15 = arith.constant 0 : index
    %c0_16 = arith.constant 0 : index
    %c0_17 = arith.constant 0 : index
    %40 = vector.load %arg5[%c0_15, %c0_16, %c0_17] : memref<2x1x48xf32, #tpu.memory_space<vmem>>, vector<1x1x48xf32>
    %41 = vector.shape_cast %40 : vector<1x1x48xf32> to vector<1x48xf32>
    %42 = vector.broadcast %41 : vector<1x48xf32> to vector<16x48xf32>
    %43 = arith.addf %39, %42 : vector<16x48xf32>
    %44 = vector.extract_strided_slice %43 {offsets = [0, 0], sizes = [16, 32], strides = [1, 1]} : vector<16x48xf32> to vector<16x32xf32>
    %45 = math.absf %44 : vector<16x32xf32>
    %cst_18 = arith.constant 0.000000e+00 : f32
    %46 = vector.broadcast %cst_18 : f32 to vector<16x32xf32>
    %47 = arith.subf %46, %45 : vector<16x32xf32>
    %48 = math.exp %47 : vector<16x32xf32>
    %49 = math.log1p %48 : vector<16x32xf32>
    %cst_19 = arith.constant 0.000000e+00 : f32
    %50 = vector.broadcast %cst_19 : f32 to vector<16x32xf32>
    %51 = arith.maximumf %44, %50 : vector<16x32xf32>
    %52 = arith.addf %49, %51 : vector<16x32xf32>
    %53 = vector.extract_strided_slice %43 {offsets = [0, 32], sizes = [16, 8], strides = [1, 1]} : vector<16x48xf32> to vector<16x8xf32>
    %54 = vector.shape_cast %53 : vector<16x8xf32> to vector<2x8x8xf32>
    %55 = vector.extract_strided_slice %43 {offsets = [0, 40], sizes = [16, 8], strides = [1, 1]} : vector<16x48xf32> to vector<16x8xf32>
    %56 = vector.shape_cast %55 : vector<16x8xf32> to vector<2x8x8xf32>
    %c0_20 = arith.constant 0 : index
    %c0_21 = arith.constant 0 : index
    %c0_22 = arith.constant 0 : index
    %57 = vector.load %arg6[%c0_20, %c0_21, %c0_22] : memref<2x8x32xf32, #tpu.memory_space<vmem>>, vector<1x8x32xf32>
    %58 = vector.shape_cast %57 : vector<1x8x32xf32> to vector<8x32xf32>
    %59 = vector.shape_cast %36 : vector<16x32xf32> to vector<2x8x32xf32>
    %60 = vector.shape_cast %18 : vector<16x32xf32> to vector<2x8x32xf32>
    %61 = vector.shape_cast %52 : vector<16x32xf32> to vector<2x8x32xf32>
    %62 = vector.shape_cast %61 : vector<2x8x32xf32> to vector<2x8x1x32xf32>
    %63 = vector.shape_cast %58 : vector<8x32xf32> to vector<1x1x8x32xf32>
    %64 = vector.broadcast %62 : vector<2x8x1x32xf32> to vector<2x8x8x32xf32>
    %65 = vector.broadcast %63 : vector<1x1x8x32xf32> to vector<2x8x8x32xf32>
    %66 = arith.mulf %64, %65 : vector<2x8x8x32xf32>
    %67 = math.exp %66 : vector<2x8x8x32xf32>
    %c0_23 = arith.constant 0 : index
    %c0_24 = arith.constant 0 : index
    %c0_25 = arith.constant 0 : index
    %c0_26 = arith.constant 0 : index
    %68 = vector.load %arg12[%c0_23, %c0_24, %c0_25, %c0_26] : memref<2x8x8x32xf32, #tpu.memory_space<vmem>>, vector<2x8x8x32xf32>
    tpu.vector_store %arg12[%c0_23, %c0_24, %c0_25, %c0_26], %67 {strides = array<i32>} : memref<2x8x8x32xf32, #tpu.memory_space<vmem>>, vector<2x8x8x32xf32>,
    %69 = arith.mulf %61, %59 : vector<2x8x32xf32>
    %70 = vector.shape_cast %69 : vector<2x8x32xf32> to vector<2x8x1x32xf32>
    %71 = vector.shape_cast %54 : vector<2x8x8xf32> to vector<2x8x8x1xf32>
    %72 = vector.broadcast %70 : vector<2x8x1x32xf32> to vector<2x8x8x32xf32>
    %73 = vector.broadcast %71 : vector<2x8x8x1xf32> to vector<2x8x8x32xf32>
    %74 = arith.mulf %72, %73 : vector<2x8x8x32xf32>
    %c0_27 = arith.constant 0 : index
    %c0_28 = arith.constant 0 : index
    %c0_29 = arith.constant 0 : index
    %c0_30 = arith.constant 0 : index
    %75 = vector.load %arg13[%c0_27, %c0_28, %c0_29, %c0_30] : memref<2x8x8x32xf32, #tpu.memory_space<vmem>>, vector<2x8x8x32xf32>
    tpu.vector_store %arg13[%c0_27, %c0_28, %c0_29, %c0_30], %74 {strides = array<i32>} : memref<2x8x8x32xf32, #tpu.memory_space<vmem>>, vector<2x8x8x32xf32>,
    %cst_31 = arith.constant 0.000000e+00 : f32
    %76 = vector.broadcast %cst_31 : f32 to vector<2x1x8x32xf32>
    %c0_i32 = arith.constant 0 : i32
    %c0_32 = arith.constant 0 : index
    %77 = arith.index_cast %c0_i32 : i32 to index
    %c0_33 = arith.constant 0 : index
    %c0_34 = arith.constant 0 : index
    %78 = vector.load %arg12[%c0_32, %77, %c0_33, %c0_34] : memref<2x8x8x32xf32, #tpu.memory_space<vmem>>, vector<2x1x8x32xf32>
    %79 = arith.mulf %78, %76 : vector<2x1x8x32xf32>
    %c0_35 = arith.constant 0 : index
    %80 = arith.index_cast %c0_i32 : i32 to index
    %c0_36 = arith.constant 0 : index
    %c0_37 = arith.constant 0 : index
    %81 = vector.load %arg13[%c0_35, %80, %c0_36, %c0_37] : memref<2x8x8x32xf32, #tpu.memory_space<vmem>>, vector<2x1x8x32xf32>
    %82 = arith.addf %79, %81 : vector<2x1x8x32xf32>
    %c0_38 = arith.constant 0 : index
    %83 = arith.index_cast %c0_i32 : i32 to index
    %c0_39 = arith.constant 0 : index
    %c0_40 = arith.constant 0 : index
    %84 = vector.load %arg14[%c0_38, %83, %c0_39, %c0_40] : memref<2x8x8x32xf32, #tpu.memory_space<vmem>>, vector<2x1x8x32xf32>
    tpu.vector_store %arg14[%c0_38, %83, %c0_39, %c0_40], %82 {strides = array<i32>} : memref<2x8x8x32xf32, #tpu.memory_space<vmem>>, vector<2x1x8x32xf32>,
    %c1_i32 = arith.constant 1 : i32
    %c0_41 = arith.constant 0 : index
    %85 = arith.index_cast %c1_i32 : i32 to index
    %c0_42 = arith.constant 0 : index
    %c0_43 = arith.constant 0 : index
    %86 = vector.load %arg12[%c0_41, %85, %c0_42, %c0_43] : memref<2x8x8x32xf32, #tpu.memory_space<vmem>>, vector<2x1x8x32xf32>
    %87 = arith.mulf %86, %82 : vector<2x1x8x32xf32>
    %c0_44 = arith.constant 0 : index
    %88 = arith.index_cast %c1_i32 : i32 to index
    %c0_45 = arith.constant 0 : index
    %c0_46 = arith.constant 0 : index
    %89 = vector.load %arg13[%c0_44, %88, %c0_45, %c0_46] : memref<2x8x8x32xf32, #tpu.memory_space<vmem>>, vector<2x1x8x32xf32>
    %90 = arith.addf %87, %89 : vector<2x1x8x32xf32>
    %c0_47 = arith.constant 0 : index
    %91 = arith.index_cast %c1_i32 : i32 to index
    %c0_48 = arith.constant 0 : index
    %c0_49 = arith.constant 0 : index
    %92 = vector.load %arg14[%c0_47, %91, %c0_48, %c0_49] : memref<2x8x8x32xf32, #tpu.memory_space<vmem>>, vector<2x1x8x32xf32>
    tpu.vector_store %arg14[%c0_47, %91, %c0_48, %c0_49], %90 {strides = array<i32>} : memref<2x8x8x32xf32, #tpu.memory_space<vmem>>, vector<2x1x8x32xf32>,
    %c2_i32 = arith.constant 2 : i32
    %c0_50 = arith.constant 0 : index
    %93 = arith.index_cast %c2_i32 : i32 to index
    %c0_51 = arith.constant 0 : index
    %c0_52 = arith.constant 0 : index
    %94 = vector.load %arg12[%c0_50, %93, %c0_51, %c0_52] : memref<2x8x8x32xf32, #tpu.memory_space<vmem>>, vector<2x1x8x32xf32>
    %95 = arith.mulf %94, %90 : vector<2x1x8x32xf32>
    %c0_53 = arith.constant 0 : index
    %96 = arith.index_cast %c2_i32 : i32 to index
    %c0_54 = arith.constant 0 : index
    %c0_55 = arith.constant 0 : index
    %97 = vector.load %arg13[%c0_53, %96, %c0_54, %c0_55] : memref<2x8x8x32xf32, #tpu.memory_space<vmem>>, vector<2x1x8x32xf32>
    %98 = arith.addf %95, %97 : vector<2x1x8x32xf32>
    %c0_56 = arith.constant 0 : index
    %99 = arith.index_cast %c2_i32 : i32 to index
    %c0_57 = arith.constant 0 : index
    %c0_58 = arith.constant 0 : index
    %100 = vector.load %arg14[%c0_56, %99, %c0_57, %c0_58] : memref<2x8x8x32xf32, #tpu.memory_space<vmem>>, vector<2x1x8x32xf32>
    tpu.vector_store %arg14[%c0_56, %99, %c0_57, %c0_58], %98 {strides = array<i32>} : memref<2x8x8x32xf32, #tpu.memory_space<vmem>>, vector<2x1x8x32xf32>,
    %c3_i32 = arith.constant 3 : i32
    %c0_59 = arith.constant 0 : index
    %101 = arith.index_cast %c3_i32 : i32 to index
    %c0_60 = arith.constant 0 : index
    %c0_61 = arith.constant 0 : index
    %102 = vector.load %arg12[%c0_59, %101, %c0_60, %c0_61] : memref<2x8x8x32xf32, #tpu.memory_space<vmem>>, vector<2x1x8x32xf32>
    %103 = arith.mulf %102, %98 : vector<2x1x8x32xf32>
    %c0_62 = arith.constant 0 : index
    %104 = arith.index_cast %c3_i32 : i32 to index
    %c0_63 = arith.constant 0 : index
    %c0_64 = arith.constant 0 : index
    %105 = vector.load %arg13[%c0_62, %104, %c0_63, %c0_64] : memref<2x8x8x32xf32, #tpu.memory_space<vmem>>, vector<2x1x8x32xf32>
    %106 = arith.addf %103, %105 : vector<2x1x8x32xf32>
    %c0_65 = arith.constant 0 : index
    %107 = arith.index_cast %c3_i32 : i32 to index
    %c0_66 = arith.constant 0 : index
    %c0_67 = arith.constant 0 : index
    %108 = vector.load %arg14[%c0_65, %107, %c0_66, %c0_67] : memref<2x8x8x32xf32, #tpu.memory_space<vmem>>, vector<2x1x8x32xf32>
    tpu.vector_store %arg14[%c0_65, %107, %c0_66, %c0_67], %106 {strides = array<i32>} : memref<2x8x8x32xf32, #tpu.memory_space<vmem>>, vector<2x1x8x32xf32>,
    %c4_i32 = arith.constant 4 : i32
    %c0_68 = arith.constant 0 : index
    %109 = arith.index_cast %c4_i32 : i32 to index
    %c0_69 = arith.constant 0 : index
    %c0_70 = arith.constant 0 : index
    %110 = vector.load %arg12[%c0_68, %109, %c0_69, %c0_70] : memref<2x8x8x32xf32, #tpu.memory_space<vmem>>, vector<2x1x8x32xf32>
    %111 = arith.mulf %110, %106 : vector<2x1x8x32xf32>
    %c0_71 = arith.constant 0 : index
    %112 = arith.index_cast %c4_i32 : i32 to index
    %c0_72 = arith.constant 0 : index
    %c0_73 = arith.constant 0 : index
    %113 = vector.load %arg13[%c0_71, %112, %c0_72, %c0_73] : memref<2x8x8x32xf32, #tpu.memory_space<vmem>>, vector<2x1x8x32xf32>
    %114 = arith.addf %111, %113 : vector<2x1x8x32xf32>
    %c0_74 = arith.constant 0 : index
    %115 = arith.index_cast %c4_i32 : i32 to index
    %c0_75 = arith.constant 0 : index
    %c0_76 = arith.constant 0 : index
    %116 = vector.load %arg14[%c0_74, %115, %c0_75, %c0_76] : memref<2x8x8x32xf32, #tpu.memory_space<vmem>>, vector<2x1x8x32xf32>
    tpu.vector_store %arg14[%c0_74, %115, %c0_75, %c0_76], %114 {strides = array<i32>} : memref<2x8x8x32xf32, #tpu.memory_space<vmem>>, vector<2x1x8x32xf32>,
    %c5_i32 = arith.constant 5 : i32
    %c0_77 = arith.constant 0 : index
    %117 = arith.index_cast %c5_i32 : i32 to index
    %c0_78 = arith.constant 0 : index
    %c0_79 = arith.constant 0 : index
    %118 = vector.load %arg12[%c0_77, %117, %c0_78, %c0_79] : memref<2x8x8x32xf32, #tpu.memory_space<vmem>>, vector<2x1x8x32xf32>
    %119 = arith.mulf %118, %114 : vector<2x1x8x32xf32>
    %c0_80 = arith.constant 0 : index
    %120 = arith.index_cast %c5_i32 : i32 to index
    %c0_81 = arith.constant 0 : index
    %c0_82 = arith.constant 0 : index
    %121 = vector.load %arg13[%c0_80, %120, %c0_81, %c0_82] : memref<2x8x8x32xf32, #tpu.memory_space<vmem>>, vector<2x1x8x32xf32>
    %122 = arith.addf %119, %121 : vector<2x1x8x32xf32>
    %c0_83 = arith.constant 0 : index
    %123 = arith.index_cast %c5_i32 : i32 to index
    %c0_84 = arith.constant 0 : index
    %c0_85 = arith.constant 0 : index
    %124 = vector.load %arg14[%c0_83, %123, %c0_84, %c0_85] : memref<2x8x8x32xf32, #tpu.memory_space<vmem>>, vector<2x1x8x32xf32>
    tpu.vector_store %arg14[%c0_83, %123, %c0_84, %c0_85], %122 {strides = array<i32>} : memref<2x8x8x32xf32, #tpu.memory_space<vmem>>, vector<2x1x8x32xf32>,
    %c6_i32 = arith.constant 6 : i32
    %c0_86 = arith.constant 0 : index
    %125 = arith.index_cast %c6_i32 : i32 to index
    %c0_87 = arith.constant 0 : index
    %c0_88 = arith.constant 0 : index
    %126 = vector.load %arg12[%c0_86, %125, %c0_87, %c0_88] : memref<2x8x8x32xf32, #tpu.memory_space<vmem>>, vector<2x1x8x32xf32>
    %127 = arith.mulf %126, %122 : vector<2x1x8x32xf32>
    %c0_89 = arith.constant 0 : index
    %128 = arith.index_cast %c6_i32 : i32 to index
    %c0_90 = arith.constant 0 : index
    %c0_91 = arith.constant 0 : index
    %129 = vector.load %arg13[%c0_89, %128, %c0_90, %c0_91] : memref<2x8x8x32xf32, #tpu.memory_space<vmem>>, vector<2x1x8x32xf32>
    %130 = arith.addf %127, %129 : vector<2x1x8x32xf32>
    %c0_92 = arith.constant 0 : index
    %131 = arith.index_cast %c6_i32 : i32 to index
    %c0_93 = arith.constant 0 : index
    %c0_94 = arith.constant 0 : index
    %132 = vector.load %arg14[%c0_92, %131, %c0_93, %c0_94] : memref<2x8x8x32xf32, #tpu.memory_space<vmem>>, vector<2x1x8x32xf32>
    tpu.vector_store %arg14[%c0_92, %131, %c0_93, %c0_94], %130 {strides = array<i32>} : memref<2x8x8x32xf32, #tpu.memory_space<vmem>>, vector<2x1x8x32xf32>,
    %c7_i32 = arith.constant 7 : i32
    %c0_95 = arith.constant 0 : index
    %133 = arith.index_cast %c7_i32 : i32 to index
    %c0_96 = arith.constant 0 : index
    %c0_97 = arith.constant 0 : index
    %134 = vector.load %arg12[%c0_95, %133, %c0_96, %c0_97] : memref<2x8x8x32xf32, #tpu.memory_space<vmem>>, vector<2x1x8x32xf32>
    %135 = arith.mulf %134, %130 : vector<2x1x8x32xf32>
    %c0_98 = arith.constant 0 : index
    %136 = arith.index_cast %c7_i32 : i32 to index
    %c0_99 = arith.constant 0 : index
    %c0_100 = arith.constant 0 : index
    %137 = vector.load %arg13[%c0_98, %136, %c0_99, %c0_100] : memref<2x8x8x32xf32, #tpu.memory_space<vmem>>, vector<2x1x8x32xf32>
    %138 = arith.addf %135, %137 : vector<2x1x8x32xf32>
    %c0_101 = arith.constant 0 : index
    %139 = arith.index_cast %c7_i32 : i32 to index
    %c0_102 = arith.constant 0 : index
    %c0_103 = arith.constant 0 : index
    %140 = vector.load %arg14[%c0_101, %139, %c0_102, %c0_103] : memref<2x8x8x32xf32, #tpu.memory_space<vmem>>, vector<2x1x8x32xf32>
    tpu.vector_store %arg14[%c0_101, %139, %c0_102, %c0_103], %138 {strides = array<i32>} : memref<2x8x8x32xf32, #tpu.memory_space<vmem>>, vector<2x1x8x32xf32>,
    %c8_i32 = arith.constant 8 : i32
    %c0_104 = arith.constant 0 : index
    %c0_105 = arith.constant 0 : index
    %c0_106 = arith.constant 0 : index
    %c0_107 = arith.constant 0 : index
    %141 = vector.load %arg14[%c0_104, %c0_105, %c0_106, %c0_107] : memref<2x8x8x32xf32, #tpu.memory_space<vmem>>, vector<2x8x8x32xf32>
    %142 = vector.shape_cast %56 : vector<2x8x8xf32> to vector<2x8x8x1xf32>
    %143 = vector.broadcast %142 : vector<2x8x8x1xf32> to vector<2x8x8x32xf32>
    %144 = arith.mulf %141, %143 : vector<2x8x8x32xf32>
    %cst_108 = arith.constant dense<0.000000e+00> : vector<2x8x32xf32>
    %145 = vector.multi_reduction <add>, %144, %cst_108 [2] : vector<2x8x8x32xf32> to vector<2x8x32xf32>
    %c0_109 = arith.constant 0 : index
    %c0_110 = arith.constant 0 : index
    %c0_111 = arith.constant 0 : index
    %146 = vector.load %arg7[%c0_109, %c0_110, %c0_111] : memref<2x1x32xf32, #tpu.memory_space<vmem>>, vector<1x1x32xf32>
    %147 = vector.shape_cast %146 : vector<1x1x32xf32> to vector<1x32xf32>
    %148 = vector.shape_cast %147 : vector<1x32xf32> to vector<1x1x32xf32>
    %149 = vector.broadcast %148 : vector<1x1x32xf32> to vector<2x8x32xf32>
    %150 = arith.mulf %149, %59 : vector<2x8x32xf32>
    %151 = arith.addf %145, %150 : vector<2x8x32xf32>
    %152 = arith.mulf %151, %60 : vector<2x8x32xf32>
    %153 = vector.shape_cast %152 : vector<2x8x32xf32> to vector<16x32xf32>
    %c0_112 = arith.constant 0 : index
    %c0_113 = arith.constant 0 : index
    %c0_114 = arith.constant 0 : index
    %154 = vector.load %arg8[%c0_112, %c0_113, %c0_114] : memref<2x32x32xf32, #tpu.memory_space<vmem>>, vector<1x32x32xf32>
    %155 = vector.shape_cast %154 : vector<1x32x32xf32> to vector<32x32xf32>
    %cst_115 = arith.constant dense<0.000000e+00> : vector<16x32xf32>
    %156 = tpu.matmul %153, %155, %cst_115 {dimension_numbers = #tpu.dot_dimension_numbers<[1], [0], [0], [1], [0, 0, 1, 1], [], []>} : vector<16x32xf32>, vector<32x32xf32>, vector<16x32xf32> -> vector<16x32xf32>
    %157 = arith.addf %1, %156 : vector<16x32xf32>
    %c0_116 = arith.constant 0 : index
    %c0_117 = arith.constant 0 : index
    %c0_118 = arith.constant 0 : index
    %158 = vector.load %arg9[%c0_116, %c0_117, %c0_118] : memref<2x1x32xf32, #tpu.memory_space<vmem>>, vector<1x1x32xf32>
    %159 = vector.shape_cast %158 : vector<1x1x32xf32> to vector<1x32xf32>
    %160 = vector.broadcast %159 : vector<1x32xf32> to vector<16x32xf32>
    %161 = arith.addf %157, %160 : vector<16x32xf32>
    %c1_119 = arith.constant 1 : index
    %c0_120 = arith.constant 0 : index
    %c0_121 = arith.constant 0 : index
    %162 = vector.load %arg2[%c1_119, %c0_120, %c0_121] : memref<2x32x64xf32, #tpu.memory_space<vmem>>, vector<1x32x64xf32>
    %163 = vector.shape_cast %162 : vector<1x32x64xf32> to vector<32x64xf32>
    %cst_122 = arith.constant dense<0.000000e+00> : vector<16x64xf32>
    %164 = tpu.matmul %161, %163, %cst_122 {dimension_numbers = #tpu.dot_dimension_numbers<[1], [0], [0], [1], [0, 0, 1, 1], [], []>} : vector<16x32xf32>, vector<32x64xf32>, vector<16x64xf32> -> vector<16x64xf32>
    %c1_123 = arith.constant 1 : index
    %c0_124 = arith.constant 0 : index
    %c0_125 = arith.constant 0 : index
    %165 = vector.load %arg3[%c1_123, %c0_124, %c0_125] : memref<2x1x64xf32, #tpu.memory_space<vmem>>, vector<1x1x64xf32>
    %166 = vector.shape_cast %165 : vector<1x1x64xf32> to vector<1x64xf32>
    %167 = vector.broadcast %166 : vector<1x64xf32> to vector<16x64xf32>
    %168 = arith.addf %164, %167 : vector<16x64xf32>
    %169 = vector.extract_strided_slice %168 {offsets = [0, 0], sizes = [16, 32], strides = [1, 1]} : vector<16x64xf32> to vector<16x32xf32>
    %c4 = arith.constant 4 : index
    %170 = memref.load %arg10[%c4] : memref<10xf32, #tpu.memory_space<smem>>
    %c5 = arith.constant 5 : index
    %171 = memref.load %arg10[%c5] : memref<10xf32, #tpu.memory_space<smem>>
    %172 = math.sin %169 : vector<16x32xf32>
    %173 = vector.broadcast %170 : f32 to vector<16x32xf32>
    %174 = arith.mulf %173, %172 : vector<16x32xf32>
    %175 = math.cos %169 : vector<16x32xf32>
    %176 = vector.broadcast %171 : f32 to vector<16x32xf32>
    %177 = arith.mulf %176, %175 : vector<16x32xf32>
    %178 = arith.addf %174, %177 : vector<16x32xf32>
    %179 = vector.extract_strided_slice %168 {offsets = [0, 32], sizes = [16, 32], strides = [1, 1]} : vector<16x64xf32> to vector<16x32xf32>
    %180 = math.absf %179 : vector<16x32xf32>
    %cst_126 = arith.constant 0.000000e+00 : f32
    %181 = vector.broadcast %cst_126 : f32 to vector<16x32xf32>
    %182 = arith.subf %181, %180 : vector<16x32xf32>
    %183 = math.exp %182 : vector<16x32xf32>
    %184 = math.log1p %183 : vector<16x32xf32>
    %cst_127 = arith.constant 0.000000e+00 : f32
    %185 = vector.broadcast %cst_127 : f32 to vector<16x32xf32>
    %186 = arith.maximumf %179, %185 : vector<16x32xf32>
    %187 = arith.addf %184, %186 : vector<16x32xf32>
    %c6 = arith.constant 6 : index
    %188 = memref.load %arg10[%c6] : memref<10xf32, #tpu.memory_space<smem>>
    %c7 = arith.constant 7 : index
    %189 = memref.load %arg10[%c7] : memref<10xf32, #tpu.memory_space<smem>>
    %190 = math.sin %187 : vector<16x32xf32>
    %191 = vector.broadcast %188 : f32 to vector<16x32xf32>
    %192 = arith.mulf %191, %190 : vector<16x32xf32>
    %193 = math.cos %187 : vector<16x32xf32>
    %194 = vector.broadcast %189 : f32 to vector<16x32xf32>
    %195 = arith.mulf %194, %193 : vector<16x32xf32>
    %196 = arith.addf %192, %195 : vector<16x32xf32>
    %c1_128 = arith.constant 1 : index
    %c0_129 = arith.constant 0 : index
    %c0_130 = arith.constant 0 : index
    %197 = vector.load %arg4[%c1_128, %c0_129, %c0_130] : memref<2x32x48xf32, #tpu.memory_space<vmem>>, vector<1x32x48xf32>
    %198 = vector.shape_cast %197 : vector<1x32x48xf32> to vector<32x48xf32>
    %cst_131 = arith.constant dense<0.000000e+00> : vector<16x48xf32>
    %199 = tpu.matmul %196, %198, %cst_131 {dimension_numbers = #tpu.dot_dimension_numbers<[1], [0], [0], [1], [0, 0, 1, 1], [], []>} : vector<16x32xf32>, vector<32x48xf32>, vector<16x48xf32> -> vector<16x48xf32>
    %c1_132 = arith.constant 1 : index
    %c0_133 = arith.constant 0 : index
    %c0_134 = arith.constant 0 : index
    %200 = vector.load %arg5[%c1_132, %c0_133, %c0_134] : memref<2x1x48xf32, #tpu.memory_space<vmem>>, vector<1x1x48xf32>
    %201 = vector.shape_cast %200 : vector<1x1x48xf32> to vector<1x48xf32>
    %202 = vector.broadcast %201 : vector<1x48xf32> to vector<16x48xf32>
    %203 = arith.addf %199, %202 : vector<16x48xf32>
    %204 = vector.extract_strided_slice %203 {offsets = [0, 0], sizes = [16, 32], strides = [1, 1]} : vector<16x48xf32> to vector<16x32xf32>
    %205 = math.absf %204 : vector<16x32xf32>
    %cst_135 = arith.constant 0.000000e+00 : f32
    %206 = vector.broadcast %cst_135 : f32 to vector<16x32xf32>
    %207 = arith.subf %206, %205 : vector<16x32xf32>
    %208 = math.exp %207 : vector<16x32xf32>
    %209 = math.log1p %208 : vector<16x32xf32>
    %cst_136 = arith.constant 0.000000e+00 : f32
    %210 = vector.broadcast %cst_136 : f32 to vector<16x32xf32>
    %211 = arith.maximumf %204, %210 : vector<16x32xf32>
    %212 = arith.addf %209, %211 : vector<16x32xf32>
    %213 = vector.extract_strided_slice %203 {offsets = [0, 32], sizes = [16, 8], strides = [1, 1]} : vector<16x48xf32> to vector<16x8xf32>
    %214 = vector.shape_cast %213 : vector<16x8xf32> to vector<2x8x8xf32>
    %215 = vector.extract_strided_slice %203 {offsets = [0, 40], sizes = [16, 8], strides = [1, 1]} : vector<16x48xf32> to vector<16x8xf32>
    %216 = vector.shape_cast %215 : vector<16x8xf32> to vector<2x8x8xf32>
    %c1_137 = arith.constant 1 : index
    %c0_138 = arith.constant 0 : index
    %c0_139 = arith.constant 0 : index
    %217 = vector.load %arg6[%c1_137, %c0_138, %c0_139] : memref<2x8x32xf32, #tpu.memory_space<vmem>>, vector<1x8x32xf32>
    %218 = vector.shape_cast %217 : vector<1x8x32xf32> to vector<8x32xf32>
    %219 = vector.shape_cast %196 : vector<16x32xf32> to vector<2x8x32xf32>
    %220 = vector.shape_cast %178 : vector<16x32xf32> to vector<2x8x32xf32>
    %221 = vector.shape_cast %212 : vector<16x32xf32> to vector<2x8x32xf32>
    %222 = vector.shape_cast %221 : vector<2x8x32xf32> to vector<2x8x1x32xf32>
    %223 = vector.shape_cast %218 : vector<8x32xf32> to vector<1x1x8x32xf32>
    %224 = vector.broadcast %222 : vector<2x8x1x32xf32> to vector<2x8x8x32xf32>
    %225 = vector.broadcast %223 : vector<1x1x8x32xf32> to vector<2x8x8x32xf32>
    %226 = arith.mulf %224, %225 : vector<2x8x8x32xf32>
    %227 = math.exp %226 : vector<2x8x8x32xf32>
    %c0_140 = arith.constant 0 : index
    %c0_141 = arith.constant 0 : index
    %c0_142 = arith.constant 0 : index
    %c0_143 = arith.constant 0 : index
    %228 = vector.load %arg12[%c0_140, %c0_141, %c0_142, %c0_143] : memref<2x8x8x32xf32, #tpu.memory_space<vmem>>, vector<2x8x8x32xf32>
    tpu.vector_store %arg12[%c0_140, %c0_141, %c0_142, %c0_143], %227 {strides = array<i32>} : memref<2x8x8x32xf32, #tpu.memory_space<vmem>>, vector<2x8x8x32xf32>,
    %229 = arith.mulf %221, %219 : vector<2x8x32xf32>
    %230 = vector.shape_cast %229 : vector<2x8x32xf32> to vector<2x8x1x32xf32>
    %231 = vector.shape_cast %214 : vector<2x8x8xf32> to vector<2x8x8x1xf32>
    %232 = vector.broadcast %230 : vector<2x8x1x32xf32> to vector<2x8x8x32xf32>
    %233 = vector.broadcast %231 : vector<2x8x8x1xf32> to vector<2x8x8x32xf32>
    %234 = arith.mulf %232, %233 : vector<2x8x8x32xf32>
    %c0_144 = arith.constant 0 : index
    %c0_145 = arith.constant 0 : index
    %c0_146 = arith.constant 0 : index
    %c0_147 = arith.constant 0 : index
    %235 = vector.load %arg13[%c0_144, %c0_145, %c0_146, %c0_147] : memref<2x8x8x32xf32, #tpu.memory_space<vmem>>, vector<2x8x8x32xf32>
    tpu.vector_store %arg13[%c0_144, %c0_145, %c0_146, %c0_147], %234 {strides = array<i32>} : memref<2x8x8x32xf32, #tpu.memory_space<vmem>>, vector<2x8x8x32xf32>,
    %cst_148 = arith.constant 0.000000e+00 : f32
    %236 = vector.broadcast %cst_148 : f32 to vector<2x1x8x32xf32>
    %c0_i32_149 = arith.constant 0 : i32
    %c0_150 = arith.constant 0 : index
    %237 = arith.index_cast %c0_i32_149 : i32 to index
    %c0_151 = arith.constant 0 : index
    %c0_152 = arith.constant 0 : index
    %238 = vector.load %arg12[%c0_150, %237, %c0_151, %c0_152] : memref<2x8x8x32xf32, #tpu.memory_space<vmem>>, vector<2x1x8x32xf32>
    %239 = arith.mulf %238, %236 : vector<2x1x8x32xf32>
    %c0_153 = arith.constant 0 : index
    %240 = arith.index_cast %c0_i32_149 : i32 to index
    %c0_154 = arith.constant 0 : index
    %c0_155 = arith.constant 0 : index
    %241 = vector.load %arg13[%c0_153, %240, %c0_154, %c0_155] : memref<2x8x8x32xf32, #tpu.memory_space<vmem>>, vector<2x1x8x32xf32>
    %242 = arith.addf %239, %241 : vector<2x1x8x32xf32>
    %c0_156 = arith.constant 0 : index
    %243 = arith.index_cast %c0_i32_149 : i32 to index
    %c0_157 = arith.constant 0 : index
    %c0_158 = arith.constant 0 : index
    %244 = vector.load %arg14[%c0_156, %243, %c0_157, %c0_158] : memref<2x8x8x32xf32, #tpu.memory_space<vmem>>, vector<2x1x8x32xf32>
    tpu.vector_store %arg14[%c0_156, %243, %c0_157, %c0_158], %242 {strides = array<i32>} : memref<2x8x8x32xf32, #tpu.memory_space<vmem>>, vector<2x1x8x32xf32>,
    %c1_i32_159 = arith.constant 1 : i32
    %c0_160 = arith.constant 0 : index
    %245 = arith.index_cast %c1_i32_159 : i32 to index
    %c0_161 = arith.constant 0 : index
    %c0_162 = arith.constant 0 : index
    %246 = vector.load %arg12[%c0_160, %245, %c0_161, %c0_162] : memref<2x8x8x32xf32, #tpu.memory_space<vmem>>, vector<2x1x8x32xf32>
    %247 = arith.mulf %246, %242 : vector<2x1x8x32xf32>
    %c0_163 = arith.constant 0 : index
    %248 = arith.index_cast %c1_i32_159 : i32 to index
    %c0_164 = arith.constant 0 : index
    %c0_165 = arith.constant 0 : index
    %249 = vector.load %arg13[%c0_163, %248, %c0_164, %c0_165] : memref<2x8x8x32xf32, #tpu.memory_space<vmem>>, vector<2x1x8x32xf32>
    %250 = arith.addf %247, %249 : vector<2x1x8x32xf32>
    %c0_166 = arith.constant 0 : index
    %251 = arith.index_cast %c1_i32_159 : i32 to index
    %c0_167 = arith.constant 0 : index
    %c0_168 = arith.constant 0 : index
    %252 = vector.load %arg14[%c0_166, %251, %c0_167, %c0_168] : memref<2x8x8x32xf32, #tpu.memory_space<vmem>>, vector<2x1x8x32xf32>
    tpu.vector_store %arg14[%c0_166, %251, %c0_167, %c0_168], %250 {strides = array<i32>} : memref<2x8x8x32xf32, #tpu.memory_space<vmem>>, vector<2x1x8x32xf32>,
    %c2_i32_169 = arith.constant 2 : i32
    %c0_170 = arith.constant 0 : index
    %253 = arith.index_cast %c2_i32_169 : i32 to index
    %c0_171 = arith.constant 0 : index
    %c0_172 = arith.constant 0 : index
    %254 = vector.load %arg12[%c0_170, %253, %c0_171, %c0_172] : memref<2x8x8x32xf32, #tpu.memory_space<vmem>>, vector<2x1x8x32xf32>
    %255 = arith.mulf %254, %250 : vector<2x1x8x32xf32>
    %c0_173 = arith.constant 0 : index
    %256 = arith.index_cast %c2_i32_169 : i32 to index
    %c0_174 = arith.constant 0 : index
    %c0_175 = arith.constant 0 : index
    %257 = vector.load %arg13[%c0_173, %256, %c0_174, %c0_175] : memref<2x8x8x32xf32, #tpu.memory_space<vmem>>, vector<2x1x8x32xf32>
    %258 = arith.addf %255, %257 : vector<2x1x8x32xf32>
    %c0_176 = arith.constant 0 : index
    %259 = arith.index_cast %c2_i32_169 : i32 to index
    %c0_177 = arith.constant 0 : index
    %c0_178 = arith.constant 0 : index
    %260 = vector.load %arg14[%c0_176, %259, %c0_177, %c0_178] : memref<2x8x8x32xf32, #tpu.memory_space<vmem>>, vector<2x1x8x32xf32>
    tpu.vector_store %arg14[%c0_176, %259, %c0_177, %c0_178], %258 {strides = array<i32>} : memref<2x8x8x32xf32, #tpu.memory_space<vmem>>, vector<2x1x8x32xf32>,
    %c3_i32_179 = arith.constant 3 : i32
    %c0_180 = arith.constant 0 : index
    %261 = arith.index_cast %c3_i32_179 : i32 to index
    %c0_181 = arith.constant 0 : index
    %c0_182 = arith.constant 0 : index
    %262 = vector.load %arg12[%c0_180, %261, %c0_181, %c0_182] : memref<2x8x8x32xf32, #tpu.memory_space<vmem>>, vector<2x1x8x32xf32>
    %263 = arith.mulf %262, %258 : vector<2x1x8x32xf32>
    %c0_183 = arith.constant 0 : index
    %264 = arith.index_cast %c3_i32_179 : i32 to index
    %c0_184 = arith.constant 0 : index
    %c0_185 = arith.constant 0 : index
    %265 = vector.load %arg13[%c0_183, %264, %c0_184, %c0_185] : memref<2x8x8x32xf32, #tpu.memory_space<vmem>>, vector<2x1x8x32xf32>
    %266 = arith.addf %263, %265 : vector<2x1x8x32xf32>
    %c0_186 = arith.constant 0 : index
    %267 = arith.index_cast %c3_i32_179 : i32 to index
    %c0_187 = arith.constant 0 : index
    %c0_188 = arith.constant 0 : index
    %268 = vector.load %arg14[%c0_186, %267, %c0_187, %c0_188] : memref<2x8x8x32xf32, #tpu.memory_space<vmem>>, vector<2x1x8x32xf32>
    tpu.vector_store %arg14[%c0_186, %267, %c0_187, %c0_188], %266 {strides = array<i32>} : memref<2x8x8x32xf32, #tpu.memory_space<vmem>>, vector<2x1x8x32xf32>,
    %c4_i32_189 = arith.constant 4 : i32
    %c0_190 = arith.constant 0 : index
    %269 = arith.index_cast %c4_i32_189 : i32 to index
    %c0_191 = arith.constant 0 : index
    %c0_192 = arith.constant 0 : index
    %270 = vector.load %arg12[%c0_190, %269, %c0_191, %c0_192] : memref<2x8x8x32xf32, #tpu.memory_space<vmem>>, vector<2x1x8x32xf32>
    %271 = arith.mulf %270, %266 : vector<2x1x8x32xf32>
    %c0_193 = arith.constant 0 : index
    %272 = arith.index_cast %c4_i32_189 : i32 to index
    %c0_194 = arith.constant 0 : index
    %c0_195 = arith.constant 0 : index
    %273 = vector.load %arg13[%c0_193, %272, %c0_194, %c0_195] : memref<2x8x8x32xf32, #tpu.memory_space<vmem>>, vector<2x1x8x32xf32>
    %274 = arith.addf %271, %273 : vector<2x1x8x32xf32>
    %c0_196 = arith.constant 0 : index
    %275 = arith.index_cast %c4_i32_189 : i32 to index
    %c0_197 = arith.constant 0 : index
    %c0_198 = arith.constant 0 : index
    %276 = vector.load %arg14[%c0_196, %275, %c0_197, %c0_198] : memref<2x8x8x32xf32, #tpu.memory_space<vmem>>, vector<2x1x8x32xf32>
    tpu.vector_store %arg14[%c0_196, %275, %c0_197, %c0_198], %274 {strides = array<i32>} : memref<2x8x8x32xf32, #tpu.memory_space<vmem>>, vector<2x1x8x32xf32>,
    %c5_i32_199 = arith.constant 5 : i32
    %c0_200 = arith.constant 0 : index
    %277 = arith.index_cast %c5_i32_199 : i32 to index
    %c0_201 = arith.constant 0 : index
    %c0_202 = arith.constant 0 : index
    %278 = vector.load %arg12[%c0_200, %277, %c0_201, %c0_202] : memref<2x8x8x32xf32, #tpu.memory_space<vmem>>, vector<2x1x8x32xf32>
    %279 = arith.mulf %278, %274 : vector<2x1x8x32xf32>
    %c0_203 = arith.constant 0 : index
    %280 = arith.index_cast %c5_i32_199 : i32 to index
    %c0_204 = arith.constant 0 : index
    %c0_205 = arith.constant 0 : index
    %281 = vector.load %arg13[%c0_203, %280, %c0_204, %c0_205] : memref<2x8x8x32xf32, #tpu.memory_space<vmem>>, vector<2x1x8x32xf32>
    %282 = arith.addf %279, %281 : vector<2x1x8x32xf32>
    %c0_206 = arith.constant 0 : index
    %283 = arith.index_cast %c5_i32_199 : i32 to index
    %c0_207 = arith.constant 0 : index
    %c0_208 = arith.constant 0 : index
    %284 = vector.load %arg14[%c0_206, %283, %c0_207, %c0_208] : memref<2x8x8x32xf32, #tpu.memory_space<vmem>>, vector<2x1x8x32xf32>
    tpu.vector_store %arg14[%c0_206, %283, %c0_207, %c0_208], %282 {strides = array<i32>} : memref<2x8x8x32xf32, #tpu.memory_space<vmem>>, vector<2x1x8x32xf32>,
    %c6_i32_209 = arith.constant 6 : i32
    %c0_210 = arith.constant 0 : index
    %285 = arith.index_cast %c6_i32_209 : i32 to index
    %c0_211 = arith.constant 0 : index
    %c0_212 = arith.constant 0 : index
    %286 = vector.load %arg12[%c0_210, %285, %c0_211, %c0_212] : memref<2x8x8x32xf32, #tpu.memory_space<vmem>>, vector<2x1x8x32xf32>
    %287 = arith.mulf %286, %282 : vector<2x1x8x32xf32>
    %c0_213 = arith.constant 0 : index
    %288 = arith.index_cast %c6_i32_209 : i32 to index
    %c0_214 = arith.constant 0 : index
    %c0_215 = arith.constant 0 : index
    %289 = vector.load %arg13[%c0_213, %288, %c0_214, %c0_215] : memref<2x8x8x32xf32, #tpu.memory_space<vmem>>, vector<2x1x8x32xf32>
    %290 = arith.addf %287, %289 : vector<2x1x8x32xf32>
    %c0_216 = arith.constant 0 : index
    %291 = arith.index_cast %c6_i32_209 : i32 to index
    %c0_217 = arith.constant 0 : index
    %c0_218 = arith.constant 0 : index
    %292 = vector.load %arg14[%c0_216, %291, %c0_217, %c0_218] : memref<2x8x8x32xf32, #tpu.memory_space<vmem>>, vector<2x1x8x32xf32>
    tpu.vector_store %arg14[%c0_216, %291, %c0_217, %c0_218], %290 {strides = array<i32>} : memref<2x8x8x32xf32, #tpu.memory_space<vmem>>, vector<2x1x8x32xf32>,
    %c7_i32_219 = arith.constant 7 : i32
    %c0_220 = arith.constant 0 : index
    %293 = arith.index_cast %c7_i32_219 : i32 to index
    %c0_221 = arith.constant 0 : index
    %c0_222 = arith.constant 0 : index
    %294 = vector.load %arg12[%c0_220, %293, %c0_221, %c0_222] : memref<2x8x8x32xf32, #tpu.memory_space<vmem>>, vector<2x1x8x32xf32>
    %295 = arith.mulf %294, %290 : vector<2x1x8x32xf32>
    %c0_223 = arith.constant 0 : index
    %296 = arith.index_cast %c7_i32_219 : i32 to index
    %c0_224 = arith.constant 0 : index
    %c0_225 = arith.constant 0 : index
    %297 = vector.load %arg13[%c0_223, %296, %c0_224, %c0_225] : memref<2x8x8x32xf32, #tpu.memory_space<vmem>>, vector<2x1x8x32xf32>
    %298 = arith.addf %295, %297 : vector<2x1x8x32xf32>
    %c0_226 = arith.constant 0 : index
    %299 = arith.index_cast %c7_i32_219 : i32 to index
    %c0_227 = arith.constant 0 : index
    %c0_228 = arith.constant 0 : index
    %300 = vector.load %arg14[%c0_226, %299, %c0_227, %c0_228] : memref<2x8x8x32xf32, #tpu.memory_space<vmem>>, vector<2x1x8x32xf32>
    tpu.vector_store %arg14[%c0_226, %299, %c0_227, %c0_228], %298 {strides = array<i32>} : memref<2x8x8x32xf32, #tpu.memory_space<vmem>>, vector<2x1x8x32xf32>,
    %c8_i32_229 = arith.constant 8 : i32
    %c0_230 = arith.constant 0 : index
    %c0_231 = arith.constant 0 : index
    %c0_232 = arith.constant 0 : index
    %c0_233 = arith.constant 0 : index
    %301 = vector.load %arg14[%c0_230, %c0_231, %c0_232, %c0_233] : memref<2x8x8x32xf32, #tpu.memory_space<vmem>>, vector<2x8x8x32xf32>
    %302 = vector.shape_cast %216 : vector<2x8x8xf32> to vector<2x8x8x1xf32>
    %303 = vector.broadcast %302 : vector<2x8x8x1xf32> to vector<2x8x8x32xf32>
    %304 = arith.mulf %301, %303 : vector<2x8x8x32xf32>
    %cst_234 = arith.constant dense<0.000000e+00> : vector<2x8x32xf32>
    %305 = vector.multi_reduction <add>, %304, %cst_234 [2] : vector<2x8x8x32xf32> to vector<2x8x32xf32>
    %c1_235 = arith.constant 1 : index
    %c0_236 = arith.constant 0 : index
    %c0_237 = arith.constant 0 : index
    %306 = vector.load %arg7[%c1_235, %c0_236, %c0_237] : memref<2x1x32xf32, #tpu.memory_space<vmem>>, vector<1x1x32xf32>
    %307 = vector.shape_cast %306 : vector<1x1x32xf32> to vector<1x32xf32>
    %308 = vector.shape_cast %307 : vector<1x32xf32> to vector<1x1x32xf32>
    %309 = vector.broadcast %308 : vector<1x1x32xf32> to vector<2x8x32xf32>
    %310 = arith.mulf %309, %219 : vector<2x8x32xf32>
    %311 = arith.addf %305, %310 : vector<2x8x32xf32>
    %312 = arith.mulf %311, %220 : vector<2x8x32xf32>
    %313 = vector.shape_cast %312 : vector<2x8x32xf32> to vector<16x32xf32>
    %c1_238 = arith.constant 1 : index
    %c0_239 = arith.constant 0 : index
    %c0_240 = arith.constant 0 : index
    %314 = vector.load %arg8[%c1_238, %c0_239, %c0_240] : memref<2x32x32xf32, #tpu.memory_space<vmem>>, vector<1x32x32xf32>
    %315 = vector.shape_cast %314 : vector<1x32x32xf32> to vector<32x32xf32>
    %cst_241 = arith.constant dense<0.000000e+00> : vector<16x32xf32>
    %316 = tpu.matmul %313, %315, %cst_241 {dimension_numbers = #tpu.dot_dimension_numbers<[1], [0], [0], [1], [0, 0, 1, 1], [], []>} : vector<16x32xf32>, vector<32x32xf32>, vector<16x32xf32> -> vector<16x32xf32>
    %317 = arith.addf %161, %316 : vector<16x32xf32>
    %c1_242 = arith.constant 1 : index
    %c0_243 = arith.constant 0 : index
    %c0_244 = arith.constant 0 : index
    %318 = vector.load %arg9[%c1_242, %c0_243, %c0_244] : memref<2x1x32xf32, #tpu.memory_space<vmem>>, vector<1x1x32xf32>
    %319 = vector.shape_cast %318 : vector<1x1x32xf32> to vector<1x32xf32>
    %320 = vector.broadcast %319 : vector<1x32xf32> to vector<16x32xf32>
    %321 = arith.addf %317, %320 : vector<16x32xf32>
    %c8 = arith.constant 8 : index
    %322 = memref.load %arg10[%c8] : memref<10xf32, #tpu.memory_space<smem>>
    %c9 = arith.constant 9 : index
    %323 = memref.load %arg10[%c9] : memref<10xf32, #tpu.memory_space<smem>>
    %324 = math.sin %321 : vector<16x32xf32>
    %325 = vector.broadcast %322 : f32 to vector<16x32xf32>
    %326 = arith.mulf %325, %324 : vector<16x32xf32>
    %327 = math.cos %321 : vector<16x32xf32>
    %328 = vector.broadcast %323 : f32 to vector<16x32xf32>
    %329 = arith.mulf %328, %327 : vector<16x32xf32>
    %330 = arith.addf %326, %329 : vector<16x32xf32>
    %331 = vector.shape_cast %330 : vector<16x32xf32> to vector<2x8x32xf32>
    %c0_245 = arith.constant 0 : index
    %c0_246 = arith.constant 0 : index
    %c0_247 = arith.constant 0 : index
    %332 = vector.load %arg11[%c0_245, %c0_246, %c0_247] : memref<2x8x32xf32, #tpu.memory_space<vmem>>, vector<2x8x32xf32>
    tpu.vector_store %arg11[%c0_245, %c0_246, %c0_247], %331 {strides = array<i32>} : memref<2x8x32xf32, #tpu.memory_space<vmem>>, vector<2x8x32xf32>,
    return
  }
  func.func @transform_0(%arg0: i32) -> (i32, i32, i32) {
    %c0_i32 = arith.constant 0 : i32
    %c0_i32_0 = arith.constant 0 : i32
    %c0_i32_1 = arith.constant 0 : i32
    return %arg0, %c0_i32, %c0_i32_0 : i32, i32, i32
  }
  func.func @transform_1(%arg0: i32) -> (i32, i32, i32) {
    %c0_i32 = arith.constant 0 : i32
    %c0_i32_0 = arith.constant 0 : i32
    %c0_i32_1 = arith.constant 0 : i32
    %c0_i32_2 = arith.constant 0 : i32
    return %c0_i32, %c0_i32_0, %c0_i32_1 : i32, i32, i32
  }
  func.func @transform_2(%arg0: i32) -> (i32, i32, i32) {
    %c0_i32 = arith.constant 0 : i32
    %c0_i32_0 = arith.constant 0 : i32
    %c0_i32_1 = arith.constant 0 : i32
    %c0_i32_2 = arith.constant 0 : i32
    return %c0_i32, %c0_i32_0, %c0_i32_1 : i32, i32, i32
  }
  func.func @transform_3(%arg0: i32) -> (i32, i32, i32) {
    %c0_i32 = arith.constant 0 : i32
    %c0_i32_0 = arith.constant 0 : i32
    %c0_i32_1 = arith.constant 0 : i32
    %c0_i32_2 = arith.constant 0 : i32
    return %c0_i32, %c0_i32_0, %c0_i32_1 : i32, i32, i32
  }
  func.func @transform_4(%arg0: i32) -> (i32, i32, i32) {
    %c0_i32 = arith.constant 0 : i32
    %c0_i32_0 = arith.constant 0 : i32
    %c0_i32_1 = arith.constant 0 : i32
    %c0_i32_2 = arith.constant 0 : i32
    return %c0_i32, %c0_i32_0, %c0_i32_1 : i32, i32, i32
  }
  func.func @transform_5(%arg0: i32) -> (i32, i32, i32) {
    %c0_i32 = arith.constant 0 : i32
    %c0_i32_0 = arith.constant 0 : i32
    %c0_i32_1 = arith.constant 0 : i32
    %c0_i32_2 = arith.constant 0 : i32
    return %c0_i32, %c0_i32_0, %c0_i32_1 : i32, i32, i32
  }
  func.func @transform_6(%arg0: i32) -> (i32, i32, i32) {
    %c0_i32 = arith.constant 0 : i32
    %c0_i32_0 = arith.constant 0 : i32
    %c0_i32_1 = arith.constant 0 : i32
    %c0_i32_2 = arith.constant 0 : i32
    return %c0_i32, %c0_i32_0, %c0_i32_1 : i32, i32, i32
  }
  func.func @transform_7(%arg0: i32) -> (i32, i32, i32) {
    %c0_i32 = arith.constant 0 : i32
    %c0_i32_0 = arith.constant 0 : i32
    %c0_i32_1 = arith.constant 0 : i32
    %c0_i32_2 = arith.constant 0 : i32
    return %c0_i32, %c0_i32_0, %c0_i32_1 : i32, i32, i32
  }
  func.func @transform_8(%arg0: i32) -> (i32, i32, i32) {
    %c0_i32 = arith.constant 0 : i32
    %c0_i32_0 = arith.constant 0 : i32
    %c0_i32_1 = arith.constant 0 : i32
    %c0_i32_2 = arith.constant 0 : i32
    return %c0_i32, %c0_i32_0, %c0_i32_1 : i32, i32, i32
  }
  func.func @transform_9(%arg0: i32) -> i32 {
    %c0_i32 = arith.constant 0 : i32
    %c0_i32_0 = arith.constant 0 : i32
    return %c0_i32 : i32
  }
  func.func @transform_10(%arg0: i32) -> (i32, i32, i32) {
    %c0_i32 = arith.constant 0 : i32
    %c0_i32_0 = arith.constant 0 : i32
    %c0_i32_1 = arith.constant 0 : i32
    return %arg0, %c0_i32, %c0_i32_0 : i32, i32, i32
  }
}

</mosaic_0001>

<llo_original>
// kernel: tpu_custom_call.1
$region0: #{tpu_custom_call.1}
  #allocation0 [shape = 'u32[]', space=smem, size = 0x4, offset = 0x4, fixed_abs, tag = 'smem constant byte address 0x4 - core index']
  #allocation1 [shape = 'u32[144,128]{1,0:T(1,128)}', space=vmem, size = 0x12000, scoped, tag = 'internal scratch']
  #allocation2 [shape = 'f32[2,8,8,32]{3,2,1,0:T(8,128)}', space=vmem, size = 0x10000, scoped, tag = 'scratch operand']
  #allocation3 [shape = 'f32[2,8,8,32]{3,2,1,0:T(8,128)}', space=vmem, size = 0x10000, scoped, tag = 'scratch operand']
  #allocation4 [shape = 'f32[2,8,8,32]{3,2,1,0:T(8,128)}', space=vmem, size = 0x10000, scoped, tag = 'scratch operand']
  %s0 = inlined_call_operand.hbm [shape: f32[4,8,32], index: 0, kind: input, shape index: {}, may-alias: {0,10}]
  %s1 = inlined_call_operand.vmem [shape: f32[2,32,64], index: 1, kind: input, shape index: {}]
  %s2 = inlined_call_operand.vmem [shape: f32[2,1,64], index: 2, kind: input, shape index: {}]
  %s3 = inlined_call_operand.hbm [shape: f32[2,32,48], index: 3, kind: input, shape index: {}]
  %s4 = inlined_call_operand.vmem [shape: f32[2,1,48], index: 4, kind: input, shape index: {}]
  %s5 = inlined_call_operand.hbm [shape: f32[2,8,32], index: 5, kind: input, shape index: {}]
  %s6 = inlined_call_operand.vmem [shape: f32[2,1,32], index: 6, kind: input, shape index: {}]
  %s7 = inlined_call_operand.hbm [shape: f32[2,32,32], index: 7, kind: input, shape index: {}]
  %s8 = inlined_call_operand.vmem [shape: f32[2,1,32], index: 8, kind: input, shape index: {}]
  %s9 = inlined_call_operand.vmem [shape: f32[10], index: 9, kind: input, shape index: {}]
  %s10 = inlined_call_operand.hbm [shape: f32[4,8,32], index: 10, kind: output, shape index: {}, may-alias: {0,10}]
  %s11 = sld [smem:[#allocation0]]
  $region93: #{tpu_custom_call.1} parent=0
    _
  %s13 = ssub.s32 1, %s11
  %s14 = scalar_select 0, %s13, %s11
  $region1: #{tpu_custom_call.1} parent=0
    #allocation5 [shape = 'u8[16384]{0}', space=vmem, size = 0x4000, scoped, tag = 'input window, operand 0']
    #allocation6 [shape = 's32[2]{0}', space=sflag, size = 0x8, scoped, tag = 'scoped memory for tpu_custom_call.1']
    #allocation7 [shape = 's32[2]{0}', space=sflag, size = 0x8, scoped, tag = 'scoped memory for tpu_custom_call.1']
    #allocation8 [shape = 's32[2]{0}', space=sflag, size = 0x8, scoped, tag = 'scoped memory for tpu_custom_call.1']
    #allocation9 [shape = 'u8[32768]{0}', space=vmem, size = 0x8000, scoped, tag = 'input window, operand 3, single buffered']
    #allocation10 [shape = 's32[1]{0}', space=sflag, size = 0x4, scoped, tag = 'scoped memory for tpu_custom_call.1']
    #allocation11 [shape = 'u8[8192]{0}', space=vmem, size = 0x2000, scoped, tag = 'input window, operand 5, single buffered']
    #allocation12 [shape = 'u8[32768]{0}', space=vmem, size = 0x8000, scoped, tag = 'input window, operand 7, single buffered']
    #allocation13 [shape = 's32[1]{0}', space=sflag, size = 0x4, scoped, tag = 'scoped memory for tpu_custom_call.1']
    #allocation14 [shape = 'u8[512]{0}', space=smem, size = 0x200, scoped, tag = 'input window, operand 9, single buffered']
    #allocation15 [shape = 'u8[16384]{0}', space=vmem, size = 0x4000, scoped, tag = 'output window, operand 0']
    %15 = vsyncpa [#allocation6], 0
    %s16 = scalar_lea.sflag [#allocation6], 1
    %17 = vsyncpa %s16, 0
    %18 = vsyncpa [#allocation10], 0
    %19 = vsyncpa [#allocation13], 0
    %20 = vsyncpa [#allocation8], 0
    %21 = vsyncpa [#allocation7], 0
    %s22 = scalar_lea.sflag [#allocation7], 1
    %23 = vsyncpa %s22, 0
    loop: start=0, step=1, limit=4
    $region2: #{tpu_custom_call.1} parent=1 // loop_pre_header
      _
    $region3: #{tpu_custom_call.1} parent=1 // loop_header
      %s25 = sphi 0, %s29
      %p26 = scmp.ge.s32.totalorder %s25, 4
      %s35 = sphi 0, %s37
      %s38 = sphi 0, %s35
      %s39 = sphi 0, %s38
      %s55 = sphi 0, %s39
      %s59 = sphi 0, %s59
      %s61 = sphi 0, %s59
      %s62 = sphi 0, %s61
      %s76 = sphi 0, %s62
      %s80 = sphi 0, %s80
      %s82 = sphi 0, %s80
      %s83 = sphi 0, %s82
      %s97 = sphi 0, %s83
      %s101 = sphi 0, %s101
      %s103 = sphi 0, %s101
      %s104 = sphi 0, %s103
      %s118 = sphi 0, %s104
      %s122 = sphi 0, %s122
      %s124 = sphi 0, %s122
      %s125 = sphi 0, %s124
      %s139 = sphi 0, %s125
      %s143 = sphi 0, %s143
      %s145 = sphi 0, %s143
      %s146 = sphi 0, %s145
      %s160 = sphi 0, %s146
      %s164 = sphi 0, %s164
      %s166 = sphi 0, %s164
      %s167 = sphi 0, %s166
      %s181 = sphi 0, %s167
      %s185 = sphi 0, %s185
      %s187 = sphi 0, %s185
      %s188 = sphi 0, %s187
      %s202 = sphi 0, %s188
      %s206 = sphi 0, %s206
      %s208 = sphi 0, %s206
      %s209 = sphi 0, %s208
      %s223 = sphi 0, %s209
      %s227 = sphi 0, %s227
      %s229 = sphi 0, %s227
      %s230 = sphi 0, %s229
      %s244 = sphi 0, %s230
      %s250 = sphi 0, %s252
      %s253 = sphi 0, %s250
      %s254 = sphi 0, %s253
      %s270 = sphi 0, %s254
    $region4: #{tpu_custom_call.1} parent=1 // loop_header_branch
      %28 = sbr.rel (%p26) target = $region8
    $region5: #{tpu_custom_call.1} parent=1 // loop_body
      %s30 = ssub.s32 %s25, 1
      %s31 = ssub.s32 %s25, 2
      %s32 = sadd.s32 %s25, 1
      %s33 = ssub.s32 %s25, %s32
      %p34 = scmp.eq.s32.totalorder %s33, 0
      %s36 = sadd.s32 %s35, 1
      %s37 = scalar_select %p34, %s35, %s36
      %p40 = pneg %p34
      %p41 = scmp.eq.s32.totalorder %s25, 1
      %p42 = por %p40, %p41
      %p43 = scmp.ne.s32.totalorder %s35, %s38
      %p44 = scmp.eq.s32.totalorder %s25, 0
      %p45 = por %p43, %p44
      %p46 = scmp.ne.s32.totalorder %s35, %s38
      %p47 = scmp.eq.s32.totalorder %s30, 1
      %p48 = por %p46, %p47
      %p49 = scmp.ne.s32.totalorder %s38, %s39
      %p50 = scmp.eq.s32.totalorder %s30, 0
      %p51 = por %p49, %p50
      %p52 = scmp.ne.s32.totalorder %s38, %s39
      %p53 = scmp.eq.s32.totalorder %s31, 1
      %p54 = por %p52, %p53
      %p56 = scmp.ne.s32.totalorder %s39, %s55
      %p57 = scmp.eq.s32.totalorder %s31, 0
      %p58 = por %p56, %p57
      %s60 = sadd.s32 %s59, 1
      %p63 = scmp.eq.s32.totalorder %s25, 1
      %p64 = scmp.ne.s32.totalorder %s59, %s61
      %p65 = scmp.eq.s32.totalorder %s25, 0
      %p66 = por %p64, %p65
      %p67 = scmp.ne.s32.totalorder %s59, %s61
      %p68 = scmp.eq.s32.totalorder %s30, 1
      %p69 = por %p67, %p68
      %p70 = scmp.ne.s32.totalorder %s61, %s62
      %p71 = scmp.eq.s32.totalorder %s30, 0
      %p72 = por %p70, %p71
      %p73 = scmp.ne.s32.totalorder %s61, %s62
      %p74 = scmp.eq.s32.totalorder %s31, 1
      %p75 = por %p73, %p74
      %p77 = scmp.ne.s32.totalorder %s62, %s76
      %p78 = scmp.eq.s32.totalorder %s31, 0
      %p79 = por %p77, %p78
      %s81 = sadd.s32 %s80, 1
      %p84 = scmp.eq.s32.totalorder %s25, 1
      %p85 = scmp.ne.s32.totalorder %s80, %s82
      %p86 = scmp.eq.s32.totalorder %s25, 0
      %p87 = por %p85, %p86
      %p88 = scmp.ne.s32.totalorder %s80, %s82
      %p89 = scmp.eq.s32.totalorder %s30, 1
      %p90 = por %p88, %p89
      %p91 = scmp.ne.s32.totalorder %s82, %s83
      %p92 = scmp.eq.s32.totalorder %s30, 0
      %p93 = por %p91, %p92
      %p94 = scmp.ne.s32.totalorder %s82, %s83
      %p95 = scmp.eq.s32.totalorder %s31, 1
      %p96 = por %p94, %p95
      %p98 = scmp.ne.s32.totalorder %s83, %s97
      %p99 = scmp.eq.s32.totalorder %s31, 0
      %p100 = por %p98, %p99
      %s102 = sadd.s32 %s101, 1
      %p105 = scmp.eq.s32.totalorder %s25, 1
      %p106 = scmp.ne.s32.totalorder %s101, %s103
      %p107 = scmp.eq.s32.totalorder %s25, 0
      %p108 = por %p106, %p107
      %p109 = scmp.ne.s32.totalorder %s101, %s103
      %p110 = scmp.eq.s32.totalorder %s30, 1
      %p111 = por %p109, %p110
      %p112 = scmp.ne.s32.totalorder %s103, %s104
      %p113 = scmp.eq.s32.totalorder %s30, 0
      %p114 = por %p112, %p113
      %p115 = scmp.ne.s32.totalorder %s103, %s104
      %p116 = scmp.eq.s32.totalorder %s31, 1
      %p117 = por %p115, %p116
      %p119 = scmp.ne.s32.totalorder %s104, %s118
      %p120 = scmp.eq.s32.totalorder %s31, 0
      %p121 = por %p119, %p120
      %s123 = sadd.s32 %s122, 1
      %p126 = scmp.eq.s32.totalorder %s25, 1
      %p127 = scmp.ne.s32.totalorder %s122, %s124
      %p128 = scmp.eq.s32.totalorder %s25, 0
      %p129 = por %p127, %p128
      %p130 = scmp.ne.s32.totalorder %s122, %s124
      %p131 = scmp.eq.s32.totalorder %s30, 1
      %p132 = por %p130, %p131
      %p133 = scmp.ne.s32.totalorder %s124, %s125
      %p134 = scmp.eq.s32.totalorder %s30, 0
      %p135 = por %p133, %p134
      %p136 = scmp.ne.s32.totalorder %s124, %s125
      %p137 = scmp.eq.s32.totalorder %s31, 1
      %p138 = por %p136, %p137
      %p140 = scmp.ne.s32.totalorder %s125, %s139
      %p141 = scmp.eq.s32.totalorder %s31, 0
      %p142 = por %p140, %p141
      %s144 = sadd.s32 %s143, 1
      %p147 = scmp.eq.s32.totalorder %s25, 1
      %p148 = scmp.ne.s32.totalorder %s143, %s145
      %p149 = scmp.eq.s32.totalorder %s25, 0
      %p150 = por %p148, %p149
      %p151 = scmp.ne.s32.totalorder %s143, %s145
      %p152 = scmp.eq.s32.totalorder %s30, 1
      %p153 = por %p151, %p152
      %p154 = scmp.ne.s32.totalorder %s145, %s146
      %p155 = scmp.eq.s32.totalorder %s30, 0
      %p156 = por %p154, %p155
      %p157 = scmp.ne.s32.totalorder %s145, %s146
      %p158 = scmp.eq.s32.totalorder %s31, 1
      %p159 = por %p157, %p158
      %p161 = scmp.ne.s32.totalorder %s146, %s160
      %p162 = scmp.eq.s32.totalorder %s31, 0
      %p163 = por %p161, %p162
      %s165 = sadd.s32 %s164, 1
      %p168 = scmp.eq.s32.totalorder %s25, 1
      %p169 = scmp.ne.s32.totalorder %s164, %s166
      %p170 = scmp.eq.s32.totalorder %s25, 0
      %p171 = por %p169, %p170
      %p172 = scmp.ne.s32.totalorder %s164, %s166
      %p173 = scmp.eq.s32.totalorder %s30, 1
      %p174 = por %p172, %p173
      %p175 = scmp.ne.s32.totalorder %s166, %s167
      %p176 = scmp.eq.s32.totalorder %s30, 0
      %p177 = por %p175, %p176
      %p178 = scmp.ne.s32.totalorder %s166, %s167
      %p179 = scmp.eq.s32.totalorder %s31, 1
      %p180 = por %p178, %p179
      %p182 = scmp.ne.s32.totalorder %s167, %s181
      %p183 = scmp.eq.s32.totalorder %s31, 0
      %p184 = por %p182, %p183
      %s186 = sadd.s32 %s185, 1
      %p189 = scmp.eq.s32.totalorder %s25, 1
      %p190 = scmp.ne.s32.totalorder %s185, %s187
      %p191 = scmp.eq.s32.totalorder %s25, 0
      %p192 = por %p190, %p191
      %p193 = scmp.ne.s32.totalorder %s185, %s187
      %p194 = scmp.eq.s32.totalorder %s30, 1
      %p195 = por %p193, %p194
      %p196 = scmp.ne.s32.totalorder %s187, %s188
      %p197 = scmp.eq.s32.totalorder %s30, 0
      %p198 = por %p196, %p197
      %p199 = scmp.ne.s32.totalorder %s187, %s188
      %p200 = scmp.eq.s32.totalorder %s31, 1
      %p201 = por %p199, %p200
      %p203 = scmp.ne.s32.totalorder %s188, %s202
      %p204 = scmp.eq.s32.totalorder %s31, 0
      %p205 = por %p203, %p204
      %s207 = sadd.s32 %s206, 1
      %p210 = scmp.eq.s32.totalorder %s25, 1
      %p211 = scmp.ne.s32.totalorder %s206, %s208
      %p212 = scmp.eq.s32.totalorder %s25, 0
      %p213 = por %p211, %p212
      %p214 = scmp.ne.s32.totalorder %s206, %s208
      %p215 = scmp.eq.s32.totalorder %s30, 1
      %p216 = por %p214, %p215
      %p217 = scmp.ne.s32.totalorder %s208, %s209
      %p218 = scmp.eq.s32.totalorder %s30, 0
      %p219 = por %p217, %p218
      %p220 = scmp.ne.s32.totalorder %s208, %s209
      %p221 = scmp.eq.s32.totalorder %s31, 1
      %p222 = por %p220, %p221
      %p224 = scmp.ne.s32.totalorder %s209, %s223
      %p225 = scmp.eq.s32.totalorder %s31, 0
      %p226 = por %p224, %p225
      %s228 = sadd.s32 %s227, 1
      %p231 = scmp.eq.s32.totalorder %s25, 1
      %p232 = scmp.ne.s32.totalorder %s227, %s229
      %p233 = scmp.eq.s32.totalorder %s25, 0
      %p234 = por %p232, %p233
      %p235 = scmp.ne.s32.totalorder %s227, %s229
      %p236 = scmp.eq.s32.totalorder %s30, 1
      %p237 = por %p235, %p236
      %p238 = scmp.ne.s32.totalorder %s229, %s230
      %p239 = scmp.eq.s32.totalorder %s30, 0
      %p240 = por %p238, %p239
      %p241 = scmp.ne.s32.totalorder %s229, %s230
      %p242 = scmp.eq.s32.totalorder %s31, 1
      %p243 = por %p241, %p242
      %p245 = scmp.ne.s32.totalorder %s230, %s244
      %p246 = scmp.eq.s32.totalorder %s31, 0
      %p247 = por %p245, %p246
      %s248 = ssub.s32 %s25, %s32
      %p249 = scmp.eq.s32.totalorder %s248, 0
      %s251 = sadd.s32 %s250, 1
      %s252 = scalar_select %p249, %s250, %s251
      %p255 = pneg %p249
      %p256 = scmp.eq.s32.totalorder %s25, 1
      %p257 = por %p255, %p256
      %p258 = scmp.ne.s32.totalorder %s250, %s253
      %p259 = scmp.eq.s32.totalorder %s25, 0
      %p260 = por %p258, %p259
      %p261 = scmp.ne.s32.totalorder %s250, %s253
      %p262 = scmp.eq.s32.totalorder %s30, 1
      %p263 = por %p261, %p262
      %p264 = scmp.ne.s32.totalorder %s253, %s254
      %p265 = scmp.eq.s32.totalorder %s30, 0
      %p266 = por %p264, %p265
      %p267 = scmp.ne.s32.totalorder %s253, %s254
      %p268 = scmp.eq.s32.totalorder %s31, 1
      %p269 = por %p267, %p268
      %p271 = scmp.ne.s32.totalorder %s254, %s270
      %p272 = scmp.eq.s32.totalorder %s31, 0
      %p273 = por %p271, %p272
      %p274 = scmp.le.s32.totalorder 1, %s25
      %p275 = scmp.lt.s32.totalorder %s25, 3
      %p276 = pnand %p274, %p275
      %p277 = pneg %p276
      // Predicated region
      $region9: #{tpu_custom_call.1} parent=5 // pred_check
        _
      $region10: #{tpu_custom_call.1} parent=5 // pred_check_branch
        %279 = sbr.rel (%p276) target = $region12
      $region11: #{tpu_custom_call.1} parent=5 // pred_region
        %s280 = ssub.s32 %s25, 1
        // Predicated region
        $region13: #{tpu_custom_call.1} parent=11 // pred_check
          %p281 = pneg %p72
        $region14: #{tpu_custom_call.1} parent=11 // pred_check_branch
          %283 = sbr.rel (%p281) target = $region16
        $region15: #{tpu_custom_call.1} parent=11 // pred_region
          _
        $region16: #{tpu_custom_call.1} parent=11 // pred_fallthru
          _
        // Predicated region
        $region17: #{tpu_custom_call.1} parent=11 // pred_check
          %p284 = pneg %p93
        $region18: #{tpu_custom_call.1} parent=11 // pred_check_branch
          %286 = sbr.rel (%p284) target = $region20
        $region19: #{tpu_custom_call.1} parent=11 // pred_region
          _
        $region20: #{tpu_custom_call.1} parent=11 // pred_fallthru
          _
        // Predicated region
        $region21: #{tpu_custom_call.1} parent=11 // pred_check
          %p287 = pneg %p114
        $region22: #{tpu_custom_call.1} parent=11 // pred_check_branch
          %289 = sbr.rel (%p287) target = $region24
        $region23: #{tpu_custom_call.1} parent=11 // pred_region
          %s291 = ssub.s32 1024, 1024
          %292 = vsyncadd [#allocation10], %s291
          %s293 = sshll.u32 [#allocation9], 4
          %s294 = int_to_ptr.vmem [resolvable:$true] %s293
          %299 = dma.hbm_to_vmem [thread:$0]  %s3, 1024, %s294, [#allocation10], 128, 128, 8
        $region24: #{tpu_custom_call.1} parent=11 // pred_fallthru
          _
        // Predicated region
        $region25: #{tpu_custom_call.1} parent=11 // pred_check
          %p300 = pneg %p135
        $region26: #{tpu_custom_call.1} parent=11 // pred_check_branch
          %302 = sbr.rel (%p300) target = $region28
        $region27: #{tpu_custom_call.1} parent=11 // pred_region
          _
        $region28: #{tpu_custom_call.1} parent=11 // pred_fallthru
          _
        // Predicated region
        $region29: #{tpu_custom_call.1} parent=11 // pred_check
          %p303 = pneg %p156
        $region30: #{tpu_custom_call.1} parent=11 // pred_check_branch
          %305 = sbr.rel (%p303) target = $region32
        $region31: #{tpu_custom_call.1} parent=11 // pred_region
          %s307 = ssub.s32 256, 256
          %308 = vsyncadd [#allocation10], %s307
          %s309 = sshll.u32 [#allocation11], 4
          %s310 = int_to_ptr.vmem [resolvable:$true] %s309
          %315 = dma.hbm_to_vmem [thread:$0]  %s5, 256, %s310, [#allocation10], 128, 128, 8
        $region32: #{tpu_custom_call.1} parent=11 // pred_fallthru
          _
        // Predicated region
        $region33: #{tpu_custom_call.1} parent=11 // pred_check
          %p316 = pneg %p177
        $region34: #{tpu_custom_call.1} parent=11 // pred_check_branch
          %318 = sbr.rel (%p316) target = $region36
        $region35: #{tpu_custom_call.1} parent=11 // pred_region
          _
        $region36: #{tpu_custom_call.1} parent=11 // pred_fallthru
          _
        // Predicated region
        $region37: #{tpu_custom_call.1} parent=11 // pred_check
          %p319 = pneg %p198
        $region38: #{tpu_custom_call.1} parent=11 // pred_check_branch
          %321 = sbr.rel (%p319) target = $region40
        $region39: #{tpu_custom_call.1} parent=11 // pred_region
          %s323 = ssub.s32 1024, 1024
          %324 = vsyncadd [#allocation13], %s323
          %s325 = sshll.u32 [#allocation12], 4
          %s326 = int_to_ptr.vmem [resolvable:$true] %s325
          %331 = dma.hbm_to_vmem [thread:$0]  %s7, 1024, %s326, [#allocation13], 128, 128, 8
        $region40: #{tpu_custom_call.1} parent=11 // pred_fallthru
          _
        // Predicated region
        $region41: #{tpu_custom_call.1} parent=11 // pred_check
          %p332 = pneg %p219
        $region42: #{tpu_custom_call.1} parent=11 // pred_check_branch
          %334 = sbr.rel (%p332) target = $region44
        $region43: #{tpu_custom_call.1} parent=11 // pred_region
          _
        $region44: #{tpu_custom_call.1} parent=11 // pred_fallthru
          _
        // Predicated region
        $region45: #{tpu_custom_call.1} parent=11 // pred_check
          %p335 = pneg %p240
        $region46: #{tpu_custom_call.1} parent=11 // pred_check_branch
          %337 = sbr.rel (%p335) target = $region48
        $region47: #{tpu_custom_call.1} parent=11 // pred_region
          %s339 = ssub.s32 16, 16
          %340 = vsyncadd [#allocation8], %s339
          %s342 = sshll.u32 %s9, 4
          %s343 = int_to_ptr.vmem [resolvable:$true] %s342
          %345 = dma.vmem_to_smem %s343, 16, [#allocation14], [#allocation8]
        $region48: #{tpu_custom_call.1} parent=11 // pred_fallthru
          _
      $region12: #{tpu_custom_call.1} parent=5 // pred_fallthru
        _
      %p346 = scmp.lt.s32.totalorder %s25, 2
      // Predicated region
      $region49: #{tpu_custom_call.1} parent=5 // pred_check
        %p347 = pneg %p346
      $region50: #{tpu_custom_call.1} parent=5 // pred_check_branch
        %349 = sbr.rel (%p347) target = $region52
      $region51: #{tpu_custom_call.1} parent=5 // pred_region
        // Predicated region
        $region53: #{tpu_custom_call.1} parent=51 // pred_check
          %p350 = pneg %p45
        $region54: #{tpu_custom_call.1} parent=51 // pred_check_branch
          %352 = sbr.rel (%p350) target = $region56
        $region55: #{tpu_custom_call.1} parent=51 // pred_region
          %s353 = sand.u32 %s35, 1
          %s354 = scalar_lea.sflag [#allocation6], %s353
          %s355 = sand.u32 %s35, 1
          %s356 = smul.addr %s355, 16
          %s357 = scalar_lea.vmem [#allocation5], %s356
          %s358 = smul.u32 2, %s25
          %s360 = ssub.s32 256, 256
          %361 = vsyncadd %s354, %s360
          %s362 = smul.addr %s358, 128
          %s363 = scalar_lea.hbm %s0, %s362
          %s364 = sshll.u32 %s357, 4
          %s365 = int_to_ptr.vmem [resolvable:$true] %s364
          %370 = dma.hbm_to_vmem [thread:$0]  %s363, 256, %s365, %s354, 128, 128, 8
        $region56: #{tpu_custom_call.1} parent=51 // pred_fallthru
          _
      $region52: #{tpu_custom_call.1} parent=5 // pred_fallthru
        _
      %p371 = scmp.le.s32.totalorder 1, %s25
      %p372 = scmp.lt.s32.totalorder %s25, 3
      %p373 = pnand %p371, %p372
      %p374 = pneg %p373
      // Predicated region
      $region57: #{tpu_custom_call.1} parent=5 // pred_check
        _
      $region58: #{tpu_custom_call.1} parent=5 // pred_check_branch
        %376 = sbr.rel (%p373) target = $region60
      $region59: #{tpu_custom_call.1} parent=5 // pred_region
        %s377 = ssub.s32 %s25, 1
        %s378 = sand.u32 %s38, 1
        %s379 = scalar_lea.sflag [#allocation6], %s378
        %s380 = sand.u32 %s38, 1
        %s381 = smul.addr %s380, 16
        %s382 = scalar_lea.vmem [#allocation5], %s381
        // Predicated region
        $region61: #{tpu_custom_call.1} parent=59 // pred_check
          %p383 = pneg %p51
        $region62: #{tpu_custom_call.1} parent=59 // pred_check_branch
          %385 = sbr.rel (%p383) target = $region64
        $region63: #{tpu_custom_call.1} parent=59 // pred_region
          %386 = dma.done %s379, 256
        $region64: #{tpu_custom_call.1} parent=59 // pred_fallthru
          _
        // Predicated region
        $region65: #{tpu_custom_call.1} parent=59 // pred_check
          %p387 = pneg %p114
        $region66: #{tpu_custom_call.1} parent=59 // pred_check_branch
          %389 = sbr.rel (%p387) target = $region68
        $region67: #{tpu_custom_call.1} parent=59 // pred_region
          %390 = dma.done [#allocation10], 1024
        $region68: #{tpu_custom_call.1} parent=59 // pred_fallthru
          _
        // Predicated region
        $region69: #{tpu_custom_call.1} parent=59 // pred_check
          %p391 = pneg %p156
        $region70: #{tpu_custom_call.1} parent=59 // pred_check_branch
          %393 = sbr.rel (%p391) target = $region72
        $region71: #{tpu_custom_call.1} parent=59 // pred_region
          %394 = dma.done [#allocation10], 256
        $region72: #{tpu_custom_call.1} parent=59 // pred_fallthru
          _
        // Predicated region
        $region73: #{tpu_custom_call.1} parent=59 // pred_check
          %p395 = pneg %p198
        $region74: #{tpu_custom_call.1} parent=59 // pred_check_branch
          %397 = sbr.rel (%p395) target = $region76
        $region75: #{tpu_custom_call.1} parent=59 // pred_region
          %398 = dma.done [#allocation13], 1024
        $region76: #{tpu_custom_call.1} parent=59 // pred_fallthru
          _
        // Predicated region
        $region77: #{tpu_custom_call.1} parent=59 // pred_check
          %p399 = pneg %p240
        $region78: #{tpu_custom_call.1} parent=59 // pred_check_branch
          %401 = sbr.rel (%p399) target = $region80
        $region79: #{tpu_custom_call.1} parent=59 // pred_region
          %402 = dma.done [#allocation8], 16
        $region80: #{tpu_custom_call.1} parent=59 // pred_fallthru
          _
        %403 = sfence
        %s404 = sand.u32 %s38, 1
        %s405 = scalar_lea.sflag [#allocation6], %s404
        %s406 = sand.u32 %s38, 1
        %s407 = smul.addr %s406, 16
        %s408 = scalar_lea.vmem [#allocation5], %s407
        %p409 = pneg %p51
        %p410 = pneg %p48
        %p411 = pneg %p72
        %p412 = pneg %p69
        %p413 = pneg %p93
        %p414 = pneg %p90
        %p415 = pneg %p114
        %p416 = pneg %p111
        %p417 = pneg %p135
        %p418 = pneg %p132
        %p419 = pneg %p156
        %p420 = pneg %p153
        %p421 = pneg %p177
        %p422 = pneg %p174
        %p423 = pneg %p198
        %p424 = pneg %p195
        %p425 = pneg %p219
        %p426 = pneg %p216
        %p427 = pneg %p240
        %p428 = pneg %p237
        %p429 = pneg %p266
        %p430 = pneg %p263
        %s431 = sand.u32 %s253, 1
        %s432 = scalar_lea.sflag [#allocation7], %s431
        %s433 = sand.u32 %s253, 1
        %s434 = smul.addr %s433, 16
        %s435 = scalar_lea.vmem [#allocation15], %s434
        %s436 = smul.u32 2, %s30
        %s437 = smul.u32 2, %s30
        %v438 = vld [vmem:[%s382] sm:$0xff]
        %v439 = vld [vmem:[%s382 + $0x8] sm:$0xff]
        %v440 = vld [vmem:[%s1] sm:$0xff]
        %v441 = vld [vmem:[%s1 + $0x8] sm:$0xff]
        %v442 = vld [vmem:[%s1 + $0x10] sm:$0xff]
        %v443 = vld [vmem:[%s1 + $0x18] sm:$0xff]
        %v444 = vld [vmem:[%s2] sm:$0x1]
        %v446 = vlaneseq
        %v447 = vshrl.u32 %v446, 7
        %v448 = vsub.s32 0, %v447
        %v449 = vrot.slane %v444, %v448
        %vm451 = vcmask 261120
        %v453 = vsel %vm451, %v438, 0
        %v456 = vsel %vm451, %v439, 0
        %458 = vmatprep.subr.mxu0 0.0
        %459 = vmatpush1.msra.mxu0 0.0
        %460 = vmatprep.subr.mxu0 0.0
        %461 = vmatpush1.msra.mxu0 0.0
        %462 = vmatprep.subr.mxu0 0.0
        %463 = vmatpush1.msra.mxu0 0.0
        %464 = vmatprep.subr.mxu0 0.0
        %465 = vmatpush1.msra.mxu0 0.0
        %466 = vmatprep.subr.mxu0 0.0
        %467 = vmatpush1.msra.mxu0 0.0
        %468 = vmatprep.subr.mxu0 0.0
        %469 = vmatpush1.msra.mxu0 0.0
        %470 = vmatprep.subr.mxu0 0.0
        %471 = vmatpush1.msra.mxu0 0.0
        %472 = vmatprep.subr.mxu0 0.0
        %473 = vmatpush1.msra.mxu0 0.0
        %474 = vmatprep.subr.mxu0 0.0
        %475 = vmatpush1.msra.mxu0 0.0
        %476 = vmatprep.subr.mxu0 0.0
        %477 = vmatpush1.msra.mxu0 0.0
        %478 = vmatprep.subr.mxu0 0.0
        %479 = vmatpush1.msra.mxu0 0.0
        %480 = vmatprep.subr.mxu0 0.0
        %481 = vmatpush1.msra.mxu0 0.0
        %482 = vmatprep.subr.mxu0 0.0
        %483 = vmatpush1.msra.mxu0 %v443
        %484 = vmatprep.subr.mxu0 0.0
        %485 = vmatpush1.msra.mxu0 %v442
        %486 = vmatprep.subr.mxu0 0.0
        %487 = vmatpush1.msra.mxu0 %v441
        %488 = vmatprep.subr.mxu0 0.0
        %489 = vmatpush1.msra.mxu0 %v440
        %490 = vmatprep.subr.mxu0 0.0
        %491 = vmatpush2.msra.mxu0 0.0
        %492 = vmatprep.subr.mxu0 0.0
        %493 = vmatpush2.msra.mxu0 0.0
        %494 = vmatprep.subr.mxu0 0.0
        %495 = vmatpush2.msra.mxu0 0.0
        %496 = vmatprep.subr.mxu0 0.0
        %497 = vmatpush2.msra.mxu0 0.0
        %498 = vmatprep.subr.mxu0 0.0
        %499 = vmatpush2.msra.mxu0 0.0
        %500 = vmatprep.subr.mxu0 0.0
        %501 = vmatpush2.msra.mxu0 0.0
        %502 = vmatprep.subr.mxu0 0.0
        %503 = vmatpush2.msra.mxu0 0.0
        %504 = vmatprep.subr.mxu0 0.0
        %505 = vmatpush2.msra.mxu0 0.0
        %506 = vmatprep.subr.mxu0 0.0
        %507 = vmatpush2.msra.mxu0 0.0
        %508 = vmatprep.subr.mxu0 0.0
        %509 = vmatpush2.msra.mxu0 0.0
        %510 = vmatprep.subr.mxu0 0.0
        %511 = vmatpush2.msra.mxu0 0.0
        %512 = vmatprep.subr.mxu0 0.0
        %513 = vmatpush2.msra.mxu0 0.0
        %514 = vmatprep.subr.mxu0 0.0
        %515 = vmatpush2.msra.mxu0 0.0
        %516 = vmatprep.subr.mxu0 0.0
        %517 = vmatpush2.msra.mxu0 0.0
        %518 = vmatprep.subr.mxu0 0.0
        %519 = vmatpush2.msra.mxu0 0.0
        %520 = vmatprep.subr.mxu0 0.0
        %521 = vmatpush2.msra.mxu0 0.0
        %522 = vmatprep.mubr.f32.mxu0 0.0
        %523 = vmatmul.mubr.f32.gmra.mxu0 %v453
        %v524 = vpop.f32.mrf.mxu0
        %v525 = vadd.f32 %v449, %v524
        %v526 = vpop.f32.mrf.mxu0
        %527 = vmatprep.mubr.f32.mxu0 0.0
        %528 = vmatmul.mubr.f32.gmra.mxu0 %v456
        %v529 = vpop.f32.mrf.mxu0
        %v530 = vadd.f32 %v449, %v529
        %v531 = vpop.f32.mrf.mxu0
        %532 = vdwg.mxu0
        %s533 = sld [smem:[#allocation14]]
        %s534 = sld [smem:[#allocation14 + $0x1]]
        %v535 = vand.u32 2147483647, %v525
        %vm536 = vcmp.le.f32.partialorder %v535, 0.7853982
        %vm537 = vcmp.lt.s32.totalorder %v525, 0
        %v538 = vand.u32 %v525, 2139095040
        %v539 = vshrl.u32 %v538, 23
        %v540 = vsub.s32 %v539, 127
        %v541 = vand.u32 2147483647, %v525
        %v542 = vand.u32 %v541, 8388607
        %v543 = vor.u32 %v542, 8388608
        %v544 = vsub.s32 0, %v543
        %v545 = vadd.s32 %v540, 1
        %vm546 = vcmp.gt.s32.totalorder %v545, 0
        %v547 = vsel %vm546, %v545, 0
        %v548 = vshrl.u32 %v547, 5
        %v549 = vand.u32 %v547, 31
        %v550 = vsub.s32 32, %v549
        %v551 = vshrl.u32 683565275, %v550
        %v552 = vshll.u32 683565275, %v549
        %v553 = vshrl.u32 2475754826, %v550
        %v554 = vor.u32 %v552, %v553
        %v555 = vshll.u32 2475754826, %v549
        %v556 = vshrl.u32 2131351028, %v550
        %v557 = vor.u32 %v555, %v556
        %v558 = vshll.u32 2131351028, %v549
        %v559 = vshrl.u32 2102212464, %v550
        %v560 = vor.u32 %v558, %v559
        %v561 = vshll.u32 2102212464, %v549
        %v562 = vshrl.u32 920167782, %v550
        %v563 = vor.u32 %v561, %v562
        %v564 = vshll.u32 920167782, %v549
        %v565 = vshrl.u32 1326507024, %v550
        %v566 = vor.u32 %v564, %v565
        %vm567 = vcmp.lt.s32.totalorder %v548, 1
        %vm568 = vcmp.lt.s32.totalorder %v548, 2
        %vm569 = vcmp.lt.s32.totalorder %v548, 3
        %vm570 = vcmp.lt.s32.totalorder %v548, 4
        %v571 = vsel %vm567, %v551, %v554
        %v572 = vsel %vm570, %v560, 2102212464
        %v573 = vsel %vm569, %v557, %v572
        %v574 = vsel %vm568, %v571, %v573
        %v575 = vsel %vm567, %v554, %v557
        %v576 = vsel %vm570, %v563, 920167782
        %v577 = vsel %vm569, %v560, %v576
        %v578 = vsel %vm568, %v575, %v577
        %v579 = vsel %vm567, %v557, %v560
        %v580 = vsel %vm570, %v566, 1326507024
        %v581 = vsel %vm569, %v563, %v580
        %v582 = vsel %vm568, %v579, %v581
        %v583 = vshll.u32 %v543, 8
        %v584 = vmul.u32.u64.compose %v583, %v582
        %v585 = vextract.low.u32 %v584
        %v586 = vextract.high.u32 %v584
        %v587 = vmul.u32.u64.compose %v583, %v578
        %v588 = vextract.low.u32 %v587
        %v589 = vextract.high.u32 %v587
        %v590 = vmul.u32 %v583, %v574
        %v591 = vadd.s32 %v586, %v588
        %vm592 = vc.u32 %v586, %v588
        %v593 = vadd.s32 %v589, 1
        %v594 = vsel %vm592, %v593, %v589
        %v595 = vadd.s32 %v590, %v594
        %v596 = vadd.s32 %v595, 536870912
        %v597 = vshrl.u32 %v596, 30
        %v598 = vshll.u32 %v597, 30
        %v599 = vsub.s32 %v595, %v598
        %vm600 = vcmp.lt.s32.totalorder %v599, 0
        %v601 = vsub.s32 0, %v599
        %v602 = vsel %vm600, %v601, %v599
        %v603 = vclz %v602
        %v604 = vsub.s32 %v603, 2
        %vm605 = vcmp.gt.s32.totalorder 0, %v604
        %v606 = vsel %vm605, 0, %v604
        %v607 = vsub.s32 32, %v606
        %v608 = vshll.u32 %v599, %v606
        %v609 = vshrl.u32 %v591, %v607
        %v610 = vor.u32 %v608, %v609
        %v611 = vsub.s32 4294967266, %v606
        %v612 = vadd.s32 %v611, 127
        %v613 = vshll.u32 %v612, 23
        %v614 = vor.u32 4788187, %v613
        %v615 = vand.u32 2147483647, %v614
        %v617 = vcvt.s32.f32 %v610
        %v618 = vmul.f32 %v617, %v615
        %v619 = vxor.u32 %v618, 2147483648
        %v620 = vsel %vm537, %v619, %v618
        %v621 = vsub.s32 4, %v597
        %v622 = vsel %vm537, %v621, %v597
        %v623 = vsel %vm536, %v525, %v620
        %v624 = vsel %vm536, 0, %v622
        %v625 = vcosq.f32.pop %v623
        %v626 = vsinq.f32.pop %v623
        %vm627 = vweird.f32 %v525
        %v628 = vadd.s32 %v624, 3
        %v629 = vand.u32 %v628, 3
        %vm630 = vcmp.lt.s32.totalorder %v629, 2
        %vm631 = vcmp.eq.s32.totalorder %v629, 0
        %v632 = vxor.u32 %v626, 2147483648
        %v633 = vsel %vm631, %v625, %v632
        %vm634 = vcmp.eq.s32.totalorder %v629, 2
        %v635 = vxor.u32 %v625, 2147483648
        %v636 = vsel %vm634, %v635, %v626
        %v637 = vsel %vm630, %v633, %v636
        %v638 = vsel %vm627, nan, %v637
        %v639 = vand.u32 2147483647, %v530
        %vm640 = vcmp.le.f32.partialorder %v639, 0.7853982
        %vm641 = vcmp.lt.s32.totalorder %v530, 0
        %v642 = vand.u32 %v530, 2139095040
        %v643 = vshrl.u32 %v642, 23
        %v644 = vsub.s32 %v643, 127
        %v645 = vand.u32 2147483647, %v530
        %v646 = vand.u32 %v645, 8388607
        %v647 = vor.u32 %v646, 8388608
        %v648 = vsub.s32 0, %v647
        %v649 = vadd.s32 %v644, 1
        %vm650 = vcmp.gt.s32.totalorder %v649, 0
        %v651 = vsel %vm650, %v649, 0
        %v652 = vshrl.u32 %v651, 5
        %v653 = vand.u32 %v651, 31
        %v654 = vsub.s32 32, %v653
        %v655 = vshrl.u32 683565275, %v654
        %v656 = vshll.u32 683565275, %v653
        %v657 = vshrl.u32 2475754826, %v654
        %v658 = vor.u32 %v656, %v657
        %v659 = vshll.u32 2475754826, %v653
        %v660 = vshrl.u32 2131351028, %v654
        %v661 = vor.u32 %v659, %v660
        %v662 = vshll.u32 2131351028, %v653
        %v663 = vshrl.u32 2102212464, %v654
        %v664 = vor.u32 %v662, %v663
        %v665 = vshll.u32 2102212464, %v653
        %v666 = vshrl.u32 920167782, %v654
        %v667 = vor.u32 %v665, %v666
        %v668 = vshll.u32 920167782, %v653
        %v669 = vshrl.u32 1326507024, %v654
        %v670 = vor.u32 %v668, %v669
        %vm671 = vcmp.lt.s32.totalorder %v652, 1
        %vm672 = vcmp.lt.s32.totalorder %v652, 2
        %vm673 = vcmp.lt.s32.totalorder %v652, 3
        %vm674 = vcmp.lt.s32.totalorder %v652, 4
        %v675 = vsel %vm671, %v655, %v658
        %v676 = vsel %vm674, %v664, 2102212464
        %v677 = vsel %vm673, %v661, %v676
        %v678 = vsel %vm672, %v675, %v677
        %v679 = vsel %vm671, %v658, %v661
        %v680 = vsel %vm674, %v667, 920167782
        %v681 = vsel %vm673, %v664, %v680
        %v682 = vsel %vm672, %v679, %v681
        %v683 = vsel %vm671, %v661, %v664
        %v684 = vsel %vm674, %v670, 1326507024
        %v685 = vsel %vm673, %v667, %v684
        %v686 = vsel %vm672, %v683, %v685
        %v687 = vshll.u32 %v647, 8
        %v688 = vmul.u32.u64.compose %v687, %v686
        %v689 = vextract.low.u32 %v688
        %v690 = vextract.high.u32 %v688
        %v691 = vmul.u32.u64.compose %v687, %v682
        %v692 = vextract.low.u32 %v691
        %v693 = vextract.high.u32 %v691
        %v694 = vmul.u32 %v687, %v678
        %v695 = vadd.s32 %v690, %v692
        %vm696 = vc.u32 %v690, %v692
        %v697 = vadd.s32 %v693, 1
        %v698 = vsel %vm696, %v697, %v693
        %v699 = vadd.s32 %v694, %v698
        %v700 = vadd.s32 %v699, 536870912
        %v701 = vshrl.u32 %v700, 30
        %v702 = vshll.u32 %v701, 30
        %v703 = vsub.s32 %v699, %v702
        %vm704 = vcmp.lt.s32.totalorder %v703, 0
        %v705 = vsub.s32 0, %v703
        %v706 = vsel %vm704, %v705, %v703
        %v707 = vclz %v706
        %v708 = vsub.s32 %v707, 2
        %vm709 = vcmp.gt.s32.totalorder 0, %v708
        %v710 = vsel %vm709, 0, %v708
        %v711 = vsub.s32 32, %v710
        %v712 = vshll.u32 %v703, %v710
        %v713 = vshrl.u32 %v695, %v711
        %v714 = vor.u32 %v712, %v713
        %v715 = vsub.s32 4294967266, %v710
        %v716 = vadd.s32 %v715, 127
        %v717 = vshll.u32 %v716, 23
        %v718 = vor.u32 4788187, %v717
        %v719 = vand.u32 2147483647, %v718
        %v721 = vcvt.s32.f32 %v714
        %v722 = vmul.f32 %v721, %v719
        %v723 = vxor.u32 %v722, 2147483648
        %v724 = vsel %vm641, %v723, %v722
        %v725 = vsub.s32 4, %v701
        %v726 = vsel %vm641, %v725, %v701
        %v727 = vsel %vm640, %v530, %v724
        %v728 = vsel %vm640, 0, %v726
        %v729 = vcosq.f32.pop %v727
        %v730 = vsinq.f32.pop %v727
        %vm731 = vweird.f32 %v530
        %v732 = vadd.s32 %v728, 3
        %v733 = vand.u32 %v732, 3
        %vm734 = vcmp.lt.s32.totalorder %v733, 2
        %vm735 = vcmp.eq.s32.totalorder %v733, 0
        %v736 = vxor.u32 %v730, 2147483648
        %v737 = vsel %vm735, %v729, %v736
        %vm738 = vcmp.eq.s32.totalorder %v733, 2
        %v739 = vxor.u32 %v729, 2147483648
        %v740 = vsel %vm738, %v739, %v730
        %v741 = vsel %vm734, %v737, %v740
        %v742 = vsel %vm731, nan, %v741
        %v743 = vstv %s533
        %v744 = vmul.f32 %v743, %v638
        %v745 = vmul.f32 %v743, %v742
        %v746 = vand.u32 2147483647, %v525
        %vm747 = vcmp.le.f32.partialorder %v746, 0.7853982
        %vm748 = vcmp.lt.s32.totalorder %v525, 0
        %v749 = vand.u32 %v525, 2139095040
        %v750 = vshrl.u32 %v749, 23
        %v751 = vsub.s32 %v750, 127
        %v752 = vand.u32 2147483647, %v525
        %v753 = vand.u32 %v752, 8388607
        %v754 = vor.u32 %v753, 8388608
        %v755 = vsub.s32 0, %v754
        %v756 = vadd.s32 %v751, 1
        %vm757 = vcmp.gt.s32.totalorder %v756, 0
        %v758 = vsel %vm757, %v756, 0
        %v759 = vshrl.u32 %v758, 5
        %v760 = vand.u32 %v758, 31
        %v761 = vsub.s32 32, %v760
        %v762 = vshrl.u32 683565275, %v761
        %v763 = vshll.u32 683565275, %v760
        %v764 = vshrl.u32 2475754826, %v761
        %v765 = vor.u32 %v763, %v764
        %v766 = vshll.u32 2475754826, %v760
        %v767 = vshrl.u32 2131351028, %v761
        %v768 = vor.u32 %v766, %v767
        %v769 = vshll.u32 2131351028, %v760
        %v770 = vshrl.u32 2102212464, %v761
        %v771 = vor.u32 %v769, %v770
        %v772 = vshll.u32 2102212464, %v760
        %v773 = vshrl.u32 920167782, %v761
        %v774 = vor.u32 %v772, %v773
        %v775 = vshll.u32 920167782, %v760
        %v776 = vshrl.u32 1326507024, %v761
        %v777 = vor.u32 %v775, %v776
        %vm778 = vcmp.lt.s32.totalorder %v759, 1
        %vm779 = vcmp.lt.s32.totalorder %v759, 2
        %vm780 = vcmp.lt.s32.totalorder %v759, 3
        %vm781 = vcmp.lt.s32.totalorder %v759, 4
        %v782 = vsel %vm778, %v762, %v765
        %v783 = vsel %vm781, %v771, 2102212464
        %v784 = vsel %vm780, %v768, %v783
        %v785 = vsel %vm779, %v782, %v784
        %v786 = vsel %vm778, %v765, %v768
        %v787 = vsel %vm781, %v774, 920167782
        %v788 = vsel %vm780, %v771, %v787
        %v789 = vsel %vm779, %v786, %v788
        %v790 = vsel %vm778, %v768, %v771
        %v791 = vsel %vm781, %v777, 1326507024
        %v792 = vsel %vm780, %v774, %v791
        %v793 = vsel %vm779, %v790, %v792
        %v794 = vshll.u32 %v754, 8
        %v795 = vmul.u32.u64.compose %v794, %v793
        %v796 = vextract.low.u32 %v795
        %v797 = vextract.high.u32 %v795
        %v798 = vmul.u32.u64.compose %v794, %v789
        %v799 = vextract.low.u32 %v798
        %v800 = vextract.high.u32 %v798
        %v801 = vmul.u32 %v794, %v785
        %v802 = vadd.s32 %v797, %v799
        %vm803 = vc.u32 %v797, %v799
        %v804 = vadd.s32 %v800, 1
        %v805 = vsel %vm803, %v804, %v800
        %v806 = vadd.s32 %v801, %v805
        %v807 = vadd.s32 %v806, 536870912
        %v808 = vshrl.u32 %v807, 30
        %v809 = vshll.u32 %v808, 30
        %v810 = vsub.s32 %v806, %v809
        %vm811 = vcmp.lt.s32.totalorder %v810, 0
        %v812 = vsub.s32 0, %v810
        %v813 = vsel %vm811, %v812, %v810
        %v814 = vclz %v813
        %v815 = vsub.s32 %v814, 2
        %vm816 = vcmp.gt.s32.totalorder 0, %v815
        %v817 = vsel %vm816, 0, %v815
        %v818 = vsub.s32 32, %v817
        %v819 = vshll.u32 %v810, %v817
        %v820 = vshrl.u32 %v802, %v818
        %v821 = vor.u32 %v819, %v820
        %v822 = vsub.s32 4294967266, %v817
        %v823 = vadd.s32 %v822, 127
        %v824 = vshll.u32 %v823, 23
        %v825 = vor.u32 4788187, %v824
        %v826 = vand.u32 2147483647, %v825
        %v828 = vcvt.s32.f32 %v821
        %v829 = vmul.f32 %v828, %v826
        %v830 = vxor.u32 %v829, 2147483648
        %v831 = vsel %vm748, %v830, %v829
        %v832 = vsub.s32 4, %v808
        %v833 = vsel %vm748, %v832, %v808
        %v834 = vsel %vm747, %v525, %v831
        %v835 = vsel %vm747, 0, %v833
        %v836 = vcosq.f32.pop %v834
        %v837 = vsinq.f32.pop %v834
        %vm838 = vweird.f32 %v525
        %v839 = vand.u32 %v835, 3
        %vm840 = vcmp.lt.s32.totalorder %v839, 2
        %vm841 = vcmp.eq.s32.totalorder %v839, 0
        %v842 = vxor.u32 %v837, 2147483648
        %v843 = vsel %vm841, %v836, %v842
        %vm844 = vcmp.eq.s32.totalorder %v839, 2
        %v845 = vxor.u32 %v836, 2147483648
        %v846 = vsel %vm844, %v845, %v837
        %v847 = vsel %vm840, %v843, %v846
        %v848 = vsel %vm838, nan, %v847
        %v849 = vand.u32 2147483647, %v530
        %vm850 = vcmp.le.f32.partialorder %v849, 0.7853982
        %vm851 = vcmp.lt.s32.totalorder %v530, 0
        %v852 = vand.u32 %v530, 2139095040
        %v853 = vshrl.u32 %v852, 23
        %v854 = vsub.s32 %v853, 127
        %v855 = vand.u32 2147483647, %v530
        %v856 = vand.u32 %v855, 8388607
        %v857 = vor.u32 %v856, 8388608
        %v858 = vsub.s32 0, %v857
        %v859 = vadd.s32 %v854, 1
        %vm860 = vcmp.gt.s32.totalorder %v859, 0
        %v861 = vsel %vm860, %v859, 0
        %v862 = vshrl.u32 %v861, 5
        %v863 = vand.u32 %v861, 31
        %v864 = vsub.s32 32, %v863
        %v865 = vshrl.u32 683565275, %v864
        %v866 = vshll.u32 683565275, %v863
        %v867 = vshrl.u32 2475754826, %v864
        %v868 = vor.u32 %v866, %v867
        %v869 = vshll.u32 2475754826, %v863
        %v870 = vshrl.u32 2131351028, %v864
        %v871 = vor.u32 %v869, %v870
        %v872 = vshll.u32 2131351028, %v863
        %v873 = vshrl.u32 2102212464, %v864
        %v874 = vor.u32 %v872, %v873
        %v875 = vshll.u32 2102212464, %v863
        %v876 = vshrl.u32 920167782, %v864
        %v877 = vor.u32 %v875, %v876
        %v878 = vshll.u32 920167782, %v863
        %v879 = vshrl.u32 1326507024, %v864
        %v880 = vor.u32 %v878, %v879
        %vm881 = vcmp.lt.s32.totalorder %v862, 1
        %vm882 = vcmp.lt.s32.totalorder %v862, 2
        %vm883 = vcmp.lt.s32.totalorder %v862, 3
        %vm884 = vcmp.lt.s32.totalorder %v862, 4
        %v885 = vsel %vm881, %v865, %v868
        %v886 = vsel %vm884, %v874, 2102212464
        %v887 = vsel %vm883, %v871, %v886
        %v888 = vsel %vm882, %v885, %v887
        %v889 = vsel %vm881, %v868, %v871
        %v890 = vsel %vm884, %v877, 920167782
        %v891 = vsel %vm883, %v874, %v890
        %v892 = vsel %vm882, %v889, %v891
        %v893 = vsel %vm881, %v871, %v874
        %v894 = vsel %vm884, %v880, 1326507024
        %v895 = vsel %vm883, %v877, %v894
        %v896 = vsel %vm882, %v893, %v895
        %v897 = vshll.u32 %v857, 8
        %v898 = vmul.u32.u64.compose %v897, %v896
        %v899 = vextract.low.u32 %v898
        %v900 = vextract.high.u32 %v898
        %v901 = vmul.u32.u64.compose %v897, %v892
        %v902 = vextract.low.u32 %v901
        %v903 = vextract.high.u32 %v901
        %v904 = vmul.u32 %v897, %v888
        %v905 = vadd.s32 %v900, %v902
        %vm906 = vc.u32 %v900, %v902
        %v907 = vadd.s32 %v903, 1
        %v908 = vsel %vm906, %v907, %v903
        %v909 = vadd.s32 %v904, %v908
        %v910 = vadd.s32 %v909, 536870912
        %v911 = vshrl.u32 %v910, 30
        %v912 = vshll.u32 %v911, 30
        %v913 = vsub.s32 %v909, %v912
        %vm914 = vcmp.lt.s32.totalorder %v913, 0
        %v915 = vsub.s32 0, %v913
        %v916 = vsel %vm914, %v915, %v913
        %v917 = vclz %v916
        %v918 = vsub.s32 %v917, 2
        %vm919 = vcmp.gt.s32.totalorder 0, %v918
        %v920 = vsel %vm919, 0, %v918
        %v921 = vsub.s32 32, %v920
        %v922 = vshll.u32 %v913, %v920
        %v923 = vshrl.u32 %v905, %v921
        %v924 = vor.u32 %v922, %v923
        %v925 = vsub.s32 4294967266, %v920
        %v926 = vadd.s32 %v925, 127
        %v927 = vshll.u32 %v926, 23
        %v928 = vor.u32 4788187, %v927
        %v929 = vand.u32 2147483647, %v928
        %v931 = vcvt.s32.f32 %v924
        %v932 = vmul.f32 %v931, %v929
        %v933 = vxor.u32 %v932, 2147483648
        %v934 = vsel %vm851, %v933, %v932
        %v935 = vsub.s32 4, %v911
        %v936 = vsel %vm851, %v935, %v911
        %v937 = vsel %vm850, %v530, %v934
        %v938 = vsel %vm850, 0, %v936
        %v939 = vcosq.f32.pop %v937
        %v940 = vsinq.f32.pop %v937
        %vm941 = vweird.f32 %v530
        %v942 = vand.u32 %v938, 3
        %vm943 = vcmp.lt.s32.totalorder %v942, 2
        %vm944 = vcmp.eq.s32.totalorder %v942, 0
        %v945 = vxor.u32 %v940, 2147483648
        %v946 = vsel %vm944, %v939, %v945
        %vm947 = vcmp.eq.s32.totalorder %v942, 2
        %v948 = vxor.u32 %v939, 2147483648
        %v949 = vsel %vm947, %v948, %v940
        %v950 = vsel %vm943, %v946, %v949
        %v951 = vsel %vm941, nan, %v950
        %v952 = vstv %s534
        %v953 = vmul.f32 %v952, %v848
        %v954 = vmul.f32 %v952, %v951
        %v955 = vadd.f32 %v744, %v953
        %v956 = vadd.f32 %v745, %v954
        %v957 = vand.u32 2147483647, %v525
        %v958 = vand.u32 2147483647, %v530
        %v959 = vsub.f32 0.0, %v957
        %v960 = vsub.f32 0.0, %v958
        %v961 = vmul.f32 %v959, 1.442695
        %v962 = vpow.pop %v961
        %v963 = vmul.f32 %v960, 1.442695
        %v964 = vpow.pop %v963
        %v965 = vadd.f32 %v962, 1.0
        %v966 = vlog2.pop %v965
        %v967 = vmul.f32 %v966, 0.6931472
        %v968 = vmul.f32 -0.5, %v962
        %v969 = vadd.f32 %v968, 1.0
        %v970 = vmul.f32 %v969, %v962
        %v971 = vand.u32 2147483647, %v962
        %vm972 = vcmp.lt.f32.partialorder %v971, 0.0004427343
        %v973 = vsel %vm972, %v970, %v967
        %v974 = vadd.f32 %v964, 1.0
        %v975 = vlog2.pop %v974
        %v976 = vmul.f32 %v975, 0.6931472
        %v977 = vmul.f32 -0.5, %v964
        %v978 = vadd.f32 %v977, 1.0
        %v979 = vmul.f32 %v978, %v964
        %v980 = vand.u32 2147483647, %v964
        %vm981 = vcmp.lt.f32.partialorder %v980, 0.0004427343
        %v982 = vsel %vm981, %v979, %v976
        %v983 = vmax.f32 %v525, 0.0
        %v984 = vmax.f32 %v530, 0.0
        %v985 = vadd.f32 %v973, %v983
        %v986 = vadd.f32 %v982, %v984
        %s987 = sld [smem:[#allocation14 + $0x2]]
        %s988 = sld [smem:[#allocation14 + $0x3]]
        %v989 = vand.u32 2147483647, %v985
        %vm990 = vcmp.le.f32.partialorder %v989, 0.7853982
        %vm991 = vcmp.lt.s32.totalorder %v985, 0
        %v992 = vand.u32 %v985, 2139095040
        %v993 = vshrl.u32 %v992, 23
        %v994 = vsub.s32 %v993, 127
        %v995 = vand.u32 2147483647, %v985
        %v996 = vand.u32 %v995, 8388607
        %v997 = vor.u32 %v996, 8388608
        %v998 = vsub.s32 0, %v997
        %v999 = vadd.s32 %v994, 1
        %vm1000 = vcmp.gt.s32.totalorder %v999, 0
        %v1001 = vsel %vm1000, %v999, 0
        %v1002 = vshrl.u32 %v1001, 5
        %v1003 = vand.u32 %v1001, 31
        %v1004 = vsub.s32 32, %v1003
        %v1005 = vshrl.u32 683565275, %v1004
        %v1006 = vshll.u32 683565275, %v1003
        %v1007 = vshrl.u32 2475754826, %v1004
        %v1008 = vor.u32 %v1006, %v1007
        %v1009 = vshll.u32 2475754826, %v1003
        %v1010 = vshrl.u32 2131351028, %v1004
        %v1011 = vor.u32 %v1009, %v1010
        %v1012 = vshll.u32 2131351028, %v1003
        %v1013 = vshrl.u32 2102212464, %v1004
        %v1014 = vor.u32 %v1012, %v1013
        %v1015 = vshll.u32 2102212464, %v1003
        %v1016 = vshrl.u32 920167782, %v1004
        %v1017 = vor.u32 %v1015, %v1016
        %v1018 = vshll.u32 920167782, %v1003
        %v1019 = vshrl.u32 1326507024, %v1004
        %v1020 = vor.u32 %v1018, %v1019
        %vm1021 = vcmp.lt.s32.totalorder %v1002, 1
        %vm1022 = vcmp.lt.s32.totalorder %v1002, 2
        %vm1023 = vcmp.lt.s32.totalorder %v1002, 3
        %vm1024 = vcmp.lt.s32.totalorder %v1002, 4
        %v1025 = vsel %vm1021, %v1005, %v1008
        %v1026 = vsel %vm1024, %v1014, 2102212464
        %v1027 = vsel %vm1023, %v1011, %v1026
        %v1028 = vsel %vm1022, %v1025, %v1027
        %v1029 = vsel %vm1021, %v1008, %v1011
        %v1030 = vsel %vm1024, %v1017, 920167782
        %v1031 = vsel %vm1023, %v1014, %v1030
        %v1032 = vsel %vm1022, %v1029, %v1031
        %v1033 = vsel %vm1021, %v1011, %v1014
        %v1034 = vsel %vm1024, %v1020, 1326507024
        %v1035 = vsel %vm1023, %v1017, %v1034
        %v1036 = vsel %vm1022, %v1033, %v1035
        %v1037 = vshll.u32 %v997, 8
        %v1038 = vmul.u32.u64.compose %v1037, %v1036
        %v1039 = vextract.low.u32 %v1038
        %v1040 = vextract.high.u32 %v1038
        %v1041 = vmul.u32.u64.compose %v1037, %v1032
        %v1042 = vextract.low.u32 %v1041
        %v1043 = vextract.high.u32 %v1041
        %v1044 = vmul.u32 %v1037, %v1028
        %v1045 = vadd.s32 %v1040, %v1042
        %vm1046 = vc.u32 %v1040, %v1042
        %v1047 = vadd.s32 %v1043, 1
        %v1048 = vsel %vm1046, %v1047, %v1043
        %v1049 = vadd.s32 %v1044, %v1048
        %v1050 = vadd.s32 %v1049, 536870912
        %v1051 = vshrl.u32 %v1050, 30
        %v1052 = vshll.u32 %v1051, 30
        %v1053 = vsub.s32 %v1049, %v1052
        %vm1054 = vcmp.lt.s32.totalorder %v1053, 0
        %v1055 = vsub.s32 0, %v1053
        %v1056 = vsel %vm1054, %v1055, %v1053
        %v1057 = vclz %v1056
        %v1058 = vsub.s32 %v1057, 2
        %vm1059 = vcmp.gt.s32.totalorder 0, %v1058
        %v1060 = vsel %vm1059, 0, %v1058
        %v1061 = vsub.s32 32, %v1060
        %v1062 = vshll.u32 %v1053, %v1060
        %v1063 = vshrl.u32 %v1045, %v1061
        %v1064 = vor.u32 %v1062, %v1063
        %v1065 = vsub.s32 4294967266, %v1060
        %v1066 = vadd.s32 %v1065, 127
        %v1067 = vshll.u32 %v1066, 23
        %v1068 = vor.u32 4788187, %v1067
        %v1069 = vand.u32 2147483647, %v1068
        %v1071 = vcvt.s32.f32 %v1064
        %v1072 = vmul.f32 %v1071, %v1069
        %v1073 = vxor.u32 %v1072, 2147483648
        %v1074 = vsel %vm991, %v1073, %v1072
        %v1075 = vsub.s32 4, %v1051
        %v1076 = vsel %vm991, %v1075, %v1051
        %v1077 = vsel %vm990, %v985, %v1074
        %v1078 = vsel %vm990, 0, %v1076
        %v1079 = vcosq.f32.pop %v1077
        %v1080 = vsinq.f32.pop %v1077
        %vm1081 = vweird.f32 %v985
        %v1082 = vadd.s32 %v1078, 3
        %v1083 = vand.u32 %v1082, 3
        %vm1084 = vcmp.lt.s32.totalorder %v1083, 2
        %vm1085 = vcmp.eq.s32.totalorder %v1083, 0
        %v1086 = vxor.u32 %v1080, 2147483648
        %v1087 = vsel %vm1085, %v1079, %v1086
        %vm1088 = vcmp.eq.s32.totalorder %v1083, 2
        %v1089 = vxor.u32 %v1079, 2147483648
        %v1090 = vsel %vm1088, %v1089, %v1080
        %v1091 = vsel %vm1084, %v1087, %v1090
        %v1092 = vsel %vm1081, nan, %v1091
        %v1093 = vand.u32 2147483647, %v986
        %vm1094 = vcmp.le.f32.partialorder %v1093, 0.7853982
        %vm1095 = vcmp.lt.s32.totalorder %v986, 0
        %v1096 = vand.u32 %v986, 2139095040
        %v1097 = vshrl.u32 %v1096, 23
        %v1098 = vsub.s32 %v1097, 127
        %v1099 = vand.u32 2147483647, %v986
        %v1100 = vand.u32 %v1099, 8388607
        %v1101 = vor.u32 %v1100, 8388608
        %v1102 = vsub.s32 0, %v1101
        %v1103 = vadd.s32 %v1098, 1
        %vm1104 = vcmp.gt.s32.totalorder %v1103, 0
        %v1105 = vsel %vm1104, %v1103, 0
        %v1106 = vshrl.u32 %v1105, 5
        %v1107 = vand.u32 %v1105, 31
        %v1108 = vsub.s32 32, %v1107
        %v1109 = vshrl.u32 683565275, %v1108
        %v1110 = vshll.u32 683565275, %v1107
        %v1111 = vshrl.u32 2475754826, %v1108
        %v1112 = vor.u32 %v1110, %v1111
        %v1113 = vshll.u32 2475754826, %v1107
        %v1114 = vshrl.u32 2131351028, %v1108
        %v1115 = vor.u32 %v1113, %v1114
        %v1116 = vshll.u32 2131351028, %v1107
        %v1117 = vshrl.u32 2102212464, %v1108
        %v1118 = vor.u32 %v1116, %v1117
        %v1119 = vshll.u32 2102212464, %v1107
        %v1120 = vshrl.u32 920167782, %v1108
        %v1121 = vor.u32 %v1119, %v1120
        %v1122 = vshll.u32 920167782, %v1107
        %v1123 = vshrl.u32 1326507024, %v1108
        %v1124 = vor.u32 %v1122, %v1123
        %vm1125 = vcmp.lt.s32.totalorder %v1106, 1
        %vm1126 = vcmp.lt.s32.totalorder %v1106, 2
        %vm1127 = vcmp.lt.s32.totalorder %v1106, 3
        %vm1128 = vcmp.lt.s32.totalorder %v1106, 4
        %v1129 = vsel %vm1125, %v1109, %v1112
        %v1130 = vsel %vm1128, %v1118, 2102212464
        %v1131 = vsel %vm1127, %v1115, %v1130
        %v1132 = vsel %vm1126, %v1129, %v1131
        %v1133 = vsel %vm1125, %v1112, %v1115
        %v1134 = vsel %vm1128, %v1121, 920167782
        %v1135 = vsel %vm1127, %v1118, %v1134
        %v1136 = vsel %vm1126, %v1133, %v1135
        %v1137 = vsel %vm1125, %v1115, %v1118
        %v1138 = vsel %vm1128, %v1124, 1326507024
        %v1139 = vsel %vm1127, %v1121, %v1138
        %v1140 = vsel %vm1126, %v1137, %v1139
        %v1141 = vshll.u32 %v1101, 8
        %v1142 = vmul.u32.u64.compose %v1141, %v1140
        %v1143 = vextract.low.u32 %v1142
        %v1144 = vextract.high.u32 %v1142
        %v1145 = vmul.u32.u64.compose %v1141, %v1136
        %v1146 = vextract.low.u32 %v1145
        %v1147 = vextract.high.u32 %v1145
        %v1148 = vmul.u32 %v1141, %v1132
        %v1149 = vadd.s32 %v1144, %v1146
        %vm1150 = vc.u32 %v1144, %v1146
        %v1151 = vadd.s32 %v1147, 1
        %v1152 = vsel %vm1150, %v1151, %v1147
        %v1153 = vadd.s32 %v1148, %v1152
        %v1154 = vadd.s32 %v1153, 536870912
        %v1155 = vshrl.u32 %v1154, 30
        %v1156 = vshll.u32 %v1155, 30
        %v1157 = vsub.s32 %v1153, %v1156
        %vm1158 = vcmp.lt.s32.totalorder %v1157, 0
        %v1159 = vsub.s32 0, %v1157
        %v1160 = vsel %vm1158, %v1159, %v1157
        %v1161 = vclz %v1160
        %v1162 = vsub.s32 %v1161, 2
        %vm1163 = vcmp.gt.s32.totalorder 0, %v1162
        %v1164 = vsel %vm1163, 0, %v1162
        %v1165 = vsub.s32 32, %v1164
        %v1166 = vshll.u32 %v1157, %v1164
        %v1167 = vshrl.u32 %v1149, %v1165
        %v1168 = vor.u32 %v1166, %v1167
        %v1169 = vsub.s32 4294967266, %v1164
        %v1170 = vadd.s32 %v1169, 127
        %v1171 = vshll.u32 %v1170, 23
        %v1172 = vor.u32 4788187, %v1171
        %v1173 = vand.u32 2147483647, %v1172
        %v1175 = vcvt.s32.f32 %v1168
        %v1176 = vmul.f32 %v1175, %v1173
        %v1177 = vxor.u32 %v1176, 2147483648
        %v1178 = vsel %vm1095, %v1177, %v1176
        %v1179 = vsub.s32 4, %v1155
        %v1180 = vsel %vm1095, %v1179, %v1155
        %v1181 = vsel %vm1094, %v986, %v1178
        %v1182 = vsel %vm1094, 0, %v1180
        %v1183 = vcosq.f32.pop %v1181
        %v1184 = vsinq.f32.pop %v1181
        %vm1185 = vweird.f32 %v986
        %v1186 = vadd.s32 %v1182, 3
        %v1187 = vand.u32 %v1186, 3
        %vm1188 = vcmp.lt.s32.totalorder %v1187, 2
        %vm1189 = vcmp.eq.s32.totalorder %v1187, 0
        %v1190 = vxor.u32 %v1184, 2147483648
        %v1191 = vsel %vm1189, %v1183, %v1190
        %vm1192 = vcmp.eq.s32.totalorder %v1187, 2
        %v1193 = vxor.u32 %v1183, 2147483648
        %v1194 = vsel %vm1192, %v1193, %v1184
        %v1195 = vsel %vm1188, %v1191, %v1194
        %v1196 = vsel %vm1185, nan, %v1195
        %v1197 = vstv %s987
        %v1198 = vmul.f32 %v1197, %v1092
        %v1199 = vmul.f32 %v1197, %v1196
        %v1200 = vand.u32 2147483647, %v985
        %vm1201 = vcmp.le.f32.partialorder %v1200, 0.7853982
        %vm1202 = vcmp.lt.s32.totalorder %v985, 0
        %v1203 = vand.u32 %v985, 2139095040
        %v1204 = vshrl.u32 %v1203, 23
        %v1205 = vsub.s32 %v1204, 127
        %v1206 = vand.u32 2147483647, %v985
        %v1207 = vand.u32 %v1206, 8388607
        %v1208 = vor.u32 %v1207, 8388608
        %v1209 = vsub.s32 0, %v1208
        %v1210 = vadd.s32 %v1205, 1
        %vm1211 = vcmp.gt.s32.totalorder %v1210, 0
        %v1212 = vsel %vm1211, %v1210, 0
        %v1213 = vshrl.u32 %v1212, 5
        %v1214 = vand.u32 %v1212, 31
        %v1215 = vsub.s32 32, %v1214
        %v1216 = vshrl.u32 683565275, %v1215
        %v1217 = vshll.u32 683565275, %v1214
        %v1218 = vshrl.u32 2475754826, %v1215
        %v1219 = vor.u32 %v1217, %v1218
        %v1220 = vshll.u32 2475754826, %v1214
        %v1221 = vshrl.u32 2131351028, %v1215
        %v1222 = vor.u32 %v1220, %v1221
        %v1223 = vshll.u32 2131351028, %v1214
        %v1224 = vshrl.u32 2102212464, %v1215
        %v1225 = vor.u32 %v1223, %v1224
        %v1226 = vshll.u32 2102212464, %v1214
        %v1227 = vshrl.u32 920167782, %v1215
        %v1228 = vor.u32 %v1226, %v1227
        %v1229 = vshll.u32 920167782, %v1214
        %v1230 = vshrl.u32 1326507024, %v1215
        %v1231 = vor.u32 %v1229, %v1230
        %vm1232 = vcmp.lt.s32.totalorder %v1213, 1
        %vm1233 = vcmp.lt.s32.totalorder %v1213, 2
        %vm1234 = vcmp.lt.s32.totalorder %v1213, 3
        %vm1235 = vcmp.lt.s32.totalorder %v1213, 4
        %v1236 = vsel %vm1232, %v1216, %v1219
        %v1237 = vsel %vm1235, %v1225, 2102212464
        %v1238 = vsel %vm1234, %v1222, %v1237
        %v1239 = vsel %vm1233, %v1236, %v1238
        %v1240 = vsel %vm1232, %v1219, %v1222
        %v1241 = vsel %vm1235, %v1228, 920167782
        %v1242 = vsel %vm1234, %v1225, %v1241
        %v1243 = vsel %vm1233, %v1240, %v1242
        %v1244 = vsel %vm1232, %v1222, %v1225
        %v1245 = vsel %vm1235, %v1231, 1326507024
        %v1246 = vsel %vm1234, %v1228, %v1245
        %v1247 = vsel %vm1233, %v1244, %v1246
        %v1248 = vshll.u32 %v1208, 8
        %v1249 = vmul.u32.u64.compose %v1248, %v1247
        %v1250 = vextract.low.u32 %v1249
        %v1251 = vextract.high.u32 %v1249
        %v1252 = vmul.u32.u64.compose %v1248, %v1243
        %v1253 = vextract.low.u32 %v1252
        %v1254 = vextract.high.u32 %v1252
        %v1255 = vmul.u32 %v1248, %v1239
        %v1256 = vadd.s32 %v1251, %v1253
        %vm1257 = vc.u32 %v1251, %v1253
        %v1258 = vadd.s32 %v1254, 1
        %v1259 = vsel %vm1257, %v1258, %v1254
        %v1260 = vadd.s32 %v1255, %v1259
        %v1261 = vadd.s32 %v1260, 536870912
        %v1262 = vshrl.u32 %v1261, 30
        %v1263 = vshll.u32 %v1262, 30
        %v1264 = vsub.s32 %v1260, %v1263
        %vm1265 = vcmp.lt.s32.totalorder %v1264, 0
        %v1266 = vsub.s32 0, %v1264
        %v1267 = vsel %vm1265, %v1266, %v1264
        %v1268 = vclz %v1267
        %v1269 = vsub.s32 %v1268, 2
        %vm1270 = vcmp.gt.s32.totalorder 0, %v1269
        %v1271 = vsel %vm1270, 0, %v1269
        %v1272 = vsub.s32 32, %v1271
        %v1273 = vshll.u32 %v1264, %v1271
        %v1274 = vshrl.u32 %v1256, %v1272
        %v1275 = vor.u32 %v1273, %v1274
        %v1276 = vsub.s32 4294967266, %v1271
        %v1277 = vadd.s32 %v1276, 127
        %v1278 = vshll.u32 %v1277, 23
        %v1279 = vor.u32 4788187, %v1278
        %v1280 = vand.u32 2147483647, %v1279
        %v1282 = vcvt.s32.f32 %v1275
        %v1283 = vmul.f32 %v1282, %v1280
        %v1284 = vxor.u32 %v1283, 2147483648
        %v1285 = vsel %vm1202, %v1284, %v1283
        %v1286 = vsub.s32 4, %v1262
        %v1287 = vsel %vm1202, %v1286, %v1262
        %v1288 = vsel %vm1201, %v985, %v1285
        %v1289 = vsel %vm1201, 0, %v1287
        %v1290 = vcosq.f32.pop %v1288
        %v1291 = vsinq.f32.pop %v1288
        %vm1292 = vweird.f32 %v985
        %v1293 = vand.u32 %v1289, 3
        %vm1294 = vcmp.lt.s32.totalorder %v1293, 2
        %vm1295 = vcmp.eq.s32.totalorder %v1293, 0
        %v1296 = vxor.u32 %v1291, 2147483648
        %v1297 = vsel %vm1295, %v1290, %v1296
        %vm1298 = vcmp.eq.s32.totalorder %v1293, 2
        %v1299 = vxor.u32 %v1290, 2147483648
        %v1300 = vsel %vm1298, %v1299, %v1291
        %v1301 = vsel %vm1294, %v1297, %v1300
        %v1302 = vsel %vm1292, nan, %v1301
        %v1303 = vand.u32 2147483647, %v986
        %vm1304 = vcmp.le.f32.partialorder %v1303, 0.7853982
        %vm1305 = vcmp.lt.s32.totalorder %v986, 0
        %v1306 = vand.u32 %v986, 2139095040
        %v1307 = vshrl.u32 %v1306, 23
        %v1308 = vsub.s32 %v1307, 127
        %v1309 = vand.u32 2147483647, %v986
        %v1310 = vand.u32 %v1309, 8388607
        %v1311 = vor.u32 %v1310, 8388608
        %v1312 = vsub.s32 0, %v1311
        %v1313 = vadd.s32 %v1308, 1
        %vm1314 = vcmp.gt.s32.totalorder %v1313, 0
        %v1315 = vsel %vm1314, %v1313, 0
        %v1316 = vshrl.u32 %v1315, 5
        %v1317 = vand.u32 %v1315, 31
        %v1318 = vsub.s32 32, %v1317
        %v1319 = vshrl.u32 683565275, %v1318
        %v1320 = vshll.u32 683565275, %v1317
        %v1321 = vshrl.u32 2475754826, %v1318
        %v1322 = vor.u32 %v1320, %v1321
        %v1323 = vshll.u32 2475754826, %v1317
        %v1324 = vshrl.u32 2131351028, %v1318
        %v1325 = vor.u32 %v1323, %v1324
        %v1326 = vshll.u32 2131351028, %v1317
        %v1327 = vshrl.u32 2102212464, %v1318
        %v1328 = vor.u32 %v1326, %v1327
        %v1329 = vshll.u32 2102212464, %v1317
        %v1330 = vshrl.u32 920167782, %v1318
        %v1331 = vor.u32 %v1329, %v1330
        %v1332 = vshll.u32 920167782, %v1317
        %v1333 = vshrl.u32 1326507024, %v1318
        %v1334 = vor.u32 %v1332, %v1333
        %vm1335 = vcmp.lt.s32.totalorder %v1316, 1
        %vm1336 = vcmp.lt.s32.totalorder %v1316, 2
        %vm1337 = vcmp.lt.s32.totalorder %v1316, 3
        %vm1338 = vcmp.lt.s32.totalorder %v1316, 4
        %v1339 = vsel %vm1335, %v1319, %v1322
        %v1340 = vsel %vm1338, %v1328, 2102212464
        %v1341 = vsel %vm1337, %v1325, %v1340
        %v1342 = vsel %vm1336, %v1339, %v1341
        %v1343 = vsel %vm1335, %v1322, %v1325
        %v1344 = vsel %vm1338, %v1331, 920167782
        %v1345 = vsel %vm1337, %v1328, %v1344
        %v1346 = vsel %vm1336, %v1343, %v1345
        %v1347 = vsel %vm1335, %v1325, %v1328
        %v1348 = vsel %vm1338, %v1334, 1326507024
        %v1349 = vsel %vm1337, %v1331, %v1348
        %v1350 = vsel %vm1336, %v1347, %v1349
        %v1351 = vshll.u32 %v1311, 8
        %v1352 = vmul.u32.u64.compose %v1351, %v1350
        %v1353 = vextract.low.u32 %v1352
        %v1354 = vextract.high.u32 %v1352
        %v1355 = vmul.u32.u64.compose %v1351, %v1346
        %v1356 = vextract.low.u32 %v1355
        %v1357 = vextract.high.u32 %v1355
        %v1358 = vmul.u32 %v1351, %v1342
        %v1359 = vadd.s32 %v1354, %v1356
        %vm1360 = vc.u32 %v1354, %v1356
        %v1361 = vadd.s32 %v1357, 1
        %v1362 = vsel %vm1360, %v1361, %v1357
        %v1363 = vadd.s32 %v1358, %v1362
        %v1364 = vadd.s32 %v1363, 536870912
        %v1365 = vshrl.u32 %v1364, 30
        %v1366 = vshll.u32 %v1365, 30
        %v1367 = vsub.s32 %v1363, %v1366
        %vm1368 = vcmp.lt.s32.totalorder %v1367, 0
        %v1369 = vsub.s32 0, %v1367
        %v1370 = vsel %vm1368, %v1369, %v1367
        %v1371 = vclz %v1370
        %v1372 = vsub.s32 %v1371, 2
        %vm1373 = vcmp.gt.s32.totalorder 0, %v1372
        %v1374 = vsel %vm1373, 0, %v1372
        %v1375 = vsub.s32 32, %v1374
        %v1376 = vshll.u32 %v1367, %v1374
        %v1377 = vshrl.u32 %v1359, %v1375
        %v1378 = vor.u32 %v1376, %v1377
        %v1379 = vsub.s32 4294967266, %v1374
        %v1380 = vadd.s32 %v1379, 127
        %v1381 = vshll.u32 %v1380, 23
        %v1382 = vor.u32 4788187, %v1381
        %v1383 = vand.u32 2147483647, %v1382
        %v1385 = vcvt.s32.f32 %v1378
        %v1386 = vmul.f32 %v1385, %v1383
        %v1387 = vxor.u32 %v1386, 2147483648
        %v1388 = vsel %vm1305, %v1387, %v1386
        %v1389 = vsub.s32 4, %v1365
        %v1390 = vsel %vm1305, %v1389, %v1365
        %v1391 = vsel %vm1304, %v986, %v1388
        %v1392 = vsel %vm1304, 0, %v1390
        %v1393 = vcosq.f32.pop %v1391
        %v1394 = vsinq.f32.pop %v1391
        %vm1395 = vweird.f32 %v986
        %v1396 = vand.u32 %v1392, 3
        %vm1397 = vcmp.lt.s32.totalorder %v1396, 2
        %vm1398 = vcmp.eq.s32.totalorder %v1396, 0
        %v1399 = vxor.u32 %v1394, 2147483648
        %v1400 = vsel %vm1398, %v1393, %v1399
        %vm1401 = vcmp.eq.s32.totalorder %v1396, 2
        %v1402 = vxor.u32 %v1393, 2147483648
        %v1403 = vsel %vm1401, %v1402, %v1394
        %v1404 = vsel %vm1397, %v1400, %v1403
        %v1405 = vsel %vm1395, nan, %v1404
        %v1406 = vstv %s988
        %v1407 = vmul.f32 %v1406, %v1302
        %v1408 = vmul.f32 %v1406, %v1405
        %v1409 = vadd.f32 %v1198, %v1407
        %v1410 = vadd.f32 %v1199, %v1408
        %v1411 = vld [vmem:[#allocation9] sm:$0xff]
        %v1412 = vld [vmem:[#allocation9 + $0x8] sm:$0xff]
        %v1413 = vld [vmem:[#allocation9 + $0x10] sm:$0xff]
        %v1414 = vld [vmem:[#allocation9 + $0x18] sm:$0xff]
        %v1415 = vld [vmem:[%s4] sm:$0x1]
        %v1417 = vlaneseq
        %v1418 = vshrl.u32 %v1417, 7
        %v1419 = vsub.s32 0, %v1418
        %v1420 = vrot.slane %v1415, %v1419
        %1424 = vrot.lane.b32.xlu0 %v1409, 96
        %v1425 = vpop.permute.xlu0 %1424
        %1426 = vrot.lane.b32.xlu0 %v1410, 96
        %v1427 = vpop.permute.xlu0 %1426
        %v1428 = vsel %vm451, %v1425, 0
        %v1430 = vsel %vm451, %v1427, 0
        %1432 = vmatprep.subr.mxu0 0.0
        %1433 = vmatpush1.msra.mxu0 0.0
        %1434 = vmatprep.subr.mxu0 0.0
        %1435 = vmatpush1.msra.mxu0 0.0
        %1436 = vmatprep.subr.mxu0 0.0
        %1437 = vmatpush1.msra.mxu0 0.0
        %1438 = vmatprep.subr.mxu0 0.0
        %1439 = vmatpush1.msra.mxu0 0.0
        %1440 = vmatprep.subr.mxu0 0.0
        %1441 = vmatpush1.msra.mxu0 0.0
        %1442 = vmatprep.subr.mxu0 0.0
        %1443 = vmatpush1.msra.mxu0 0.0
        %1444 = vmatprep.subr.mxu0 0.0
        %1445 = vmatpush1.msra.mxu0 0.0
        %1446 = vmatprep.subr.mxu0 0.0
        %1447 = vmatpush1.msra.mxu0 0.0
        %1448 = vmatprep.subr.mxu0 0.0
        %1449 = vmatpush1.msra.mxu0 0.0
        %1450 = vmatprep.subr.mxu0 0.0
        %1451 = vmatpush1.msra.mxu0 0.0
        %1452 = vmatprep.subr.mxu0 0.0
        %1453 = vmatpush1.msra.mxu0 0.0
        %1454 = vmatprep.subr.mxu0 0.0
        %1455 = vmatpush1.msra.mxu0 0.0
        %1456 = vmatprep.subr.mxu0 0.0
        %1457 = vmatpush1.msra.mxu0 %v1414
        %1458 = vmatprep.subr.mxu0 0.0
        %1459 = vmatpush1.msra.mxu0 %v1413
        %1460 = vmatprep.subr.mxu0 0.0
        %1461 = vmatpush1.msra.mxu0 %v1412
        %1462 = vmatprep.subr.mxu0 0.0
        %1463 = vmatpush1.msra.mxu0 %v1411
        %1464 = vmatprep.subr.mxu0 0.0
        %1465 = vmatpush2.msra.mxu0 0.0
        %1466 = vmatprep.subr.mxu0 0.0
        %1467 = vmatpush2.msra.mxu0 0.0
        %1468 = vmatprep.subr.mxu0 0.0
        %1469 = vmatpush2.msra.mxu0 0.0
        %1470 = vmatprep.subr.mxu0 0.0
        %1471 = vmatpush2.msra.mxu0 0.0
        %1472 = vmatprep.subr.mxu0 0.0
        %1473 = vmatpush2.msra.mxu0 0.0
        %1474 = vmatprep.subr.mxu0 0.0
        %1475 = vmatpush2.msra.mxu0 0.0
        %1476 = vmatprep.subr.mxu0 0.0
        %1477 = vmatpush2.msra.mxu0 0.0
        %1478 = vmatprep.subr.mxu0 0.0
        %1479 = vmatpush2.msra.mxu0 0.0
        %1480 = vmatprep.subr.mxu0 0.0
        %1481 = vmatpush2.msra.mxu0 0.0
        %1482 = vmatprep.subr.mxu0 0.0
        %1483 = vmatpush2.msra.mxu0 0.0
        %1484 = vmatprep.subr.mxu0 0.0
        %1485 = vmatpush2.msra.mxu0 0.0
        %1486 = vmatprep.subr.mxu0 0.0
        %1487 = vmatpush2.msra.mxu0 0.0
        %1488 = vmatprep.subr.mxu0 0.0
        %1489 = vmatpush2.msra.mxu0 0.0
        %1490 = vmatprep.subr.mxu0 0.0
        %1491 = vmatpush2.msra.mxu0 0.0
        %1492 = vmatprep.subr.mxu0 0.0
        %1493 = vmatpush2.msra.mxu0 0.0
        %1494 = vmatprep.subr.mxu0 0.0
        %1495 = vmatpush2.msra.mxu0 0.0
        %1496 = vmatprep.mubr.f32.mxu0 0.0
        %1497 = vmatmul.mubr.f32.gmra.mxu0 %v1428
        %v1498 = vpop.f32.mrf.mxu0
        %v1499 = vadd.f32 %v1420, %v1498
        %v1500 = vpop.f32.mrf.mxu0
        %1501 = vmatprep.mubr.f32.mxu0 0.0
        %1502 = vmatmul.mubr.f32.gmra.mxu0 %v1430
        %v1503 = vpop.f32.mrf.mxu0
        %v1504 = vadd.f32 %v1420, %v1503
        %v1505 = vpop.f32.mrf.mxu0
        %1506 = vdwg.mxu0
        %v1507 = vand.u32 2147483647, %v1499
        %v1508 = vand.u32 2147483647, %v1504
        %v1509 = vsub.f32 0.0, %v1507
        %v1510 = vsub.f32 0.0, %v1508
        %v1511 = vmul.f32 %v1509, 1.442695
        %v1512 = vpow.pop %v1511
        %v1513 = vmul.f32 %v1510, 1.442695
        %v1514 = vpow.pop %v1513
        %v1515 = vadd.f32 %v1512, 1.0
        %v1516 = vlog2.pop %v1515
        %v1517 = vmul.f32 %v1516, 0.6931472
        %v1518 = vmul.f32 -0.5, %v1512
        %v1519 = vadd.f32 %v1518, 1.0
        %v1520 = vmul.f32 %v1519, %v1512
        %v1521 = vand.u32 2147483647, %v1512
        %vm1522 = vcmp.lt.f32.partialorder %v1521, 0.0004427343
        %v1523 = vsel %vm1522, %v1520, %v1517
        %v1524 = vadd.f32 %v1514, 1.0
        %v1525 = vlog2.pop %v1524
        %v1526 = vmul.f32 %v1525, 0.6931472
        %v1527 = vmul.f32 -0.5, %v1514
        %v1528 = vadd.f32 %v1527, 1.0
        %v1529 = vmul.f32 %v1528, %v1514
        %v1530 = vand.u32 2147483647, %v1514
        %vm1531 = vcmp.lt.f32.partialorder %v1530, 0.0004427343
        %v1532 = vsel %vm1531, %v1529, %v1526
        %v1533 = vmax.f32 %v1499, 0.0
        %v1534 = vmax.f32 %v1504, 0.0
        %v1535 = vadd.f32 %v1523, %v1533
        %v1536 = vadd.f32 %v1532, %v1534
        %v1537 = vld [vmem:[#allocation11] sm:$0xff]
        %v1540 = vcombine.high %v1535, %v1535
        %v1542 = vunpack.c.l.s4 1966171168
        %v1543 = vunpack.c.0.s8 %v1542
        %v1544 = vlaneseq
        %v1545 = vshrl.u32 %v1544, 7
        %v1546 = vsub.s32 %v1543, %v1545
        %v1547 = vrot.slane %v1535, %v1546
        %v1549 = vunpack.c.l.s4 1966171168
        %v1550 = vunpack.c.0.s8 %v1549
        %v1551 = vlaneseq
        %v1552 = vshrl.u32 %v1551, 7
        %v1553 = vsub.s32 %v1550, %v1552
        %v1554 = vrot.slane %v1540, %v1553
        %v1555 = vcombine.high %v1547, %v1547
        %v1556 = vcombine.high %v1554, %v1554
        %v1558 = vunpack.c.l.s4 1966171168
        %v1559 = vunpack.c.0.s8 %v1558
        %v1560 = vlaneseq
        %v1561 = vshrl.u32 %v1560, 7
        %v1562 = vsub.s32 %v1559, %v1561
        %v1563 = vrot.slane %v1547, %v1562
        %v1565 = vunpack.c.l.s4 1966171168
        %v1566 = vunpack.c.0.s8 %v1565
        %v1567 = vlaneseq
        %v1568 = vshrl.u32 %v1567, 7
        %v1569 = vsub.s32 %v1566, %v1568
        %v1570 = vrot.slane %v1554, %v1569
        %v1572 = vunpack.c.l.s4 1966171168
        %v1573 = vunpack.c.0.s8 %v1572
        %v1574 = vlaneseq
        %v1575 = vshrl.u32 %v1574, 7
        %v1576 = vsub.s32 %v1573, %v1575
        %v1577 = vrot.slane %v1555, %v1576
        %v1579 = vunpack.c.l.s4 1966171168
        %v1580 = vunpack.c.0.s8 %v1579
        %v1581 = vlaneseq
        %v1582 = vshrl.u32 %v1581, 7
        %v1583 = vsub.s32 %v1580, %v1582
        %v1584 = vrot.slane %v1556, %v1583
        %v1585 = vcombine.high %v1563, %v1563
        %v1586 = vcombine.high %v1570, %v1570
        %v1587 = vcombine.high %v1577, %v1577
        %v1588 = vcombine.high %v1584, %v1584
        %v1589 = vcombine.high %v1536, %v1536
        %v1591 = vunpack.c.l.s4 1966171168
        %v1592 = vunpack.c.0.s8 %v1591
        %v1593 = vlaneseq
        %v1594 = vshrl.u32 %v1593, 7
        %v1595 = vsub.s32 %v1592, %v1594
        %v1596 = vrot.slane %v1536, %v1595
        %v1598 = vunpack.c.l.s4 1966171168
        %v1599 = vunpack.c.0.s8 %v1598
        %v1600 = vlaneseq
        %v1601 = vshrl.u32 %v1600, 7
        %v1602 = vsub.s32 %v1599, %v1601
        %v1603 = vrot.slane %v1589, %v1602
        %v1604 = vcombine.high %v1596, %v1596
        %v1605 = vcombine.high %v1603, %v1603
        %v1607 = vunpack.c.l.s4 1966171168
        %v1608 = vunpack.c.0.s8 %v1607
        %v1609 = vlaneseq
        %v1610 = vshrl.u32 %v1609, 7
        %v1611 = vsub.s32 %v1608, %v1610
        %v1612 = vrot.slane %v1596, %v1611
        %v1614 = vunpack.c.l.s4 1966171168
        %v1615 = vunpack.c.0.s8 %v1614
        %v1616 = vlaneseq
        %v1617 = vshrl.u32 %v1616, 7
        %v1618 = vsub.s32 %v1615, %v1617
        %v1619 = vrot.slane %v1603, %v1618
        %v1621 = vunpack.c.l.s4 1966171168
        %v1622 = vunpack.c.0.s8 %v1621
        %v1623 = vlaneseq
        %v1624 = vshrl.u32 %v1623, 7
        %v1625 = vsub.s32 %v1622, %v1624
        %v1626 = vrot.slane %v1604, %v1625
        %v1628 = vunpack.c.l.s4 1966171168
        %v1629 = vunpack.c.0.s8 %v1628
        %v1630 = vlaneseq
        %v1631 = vshrl.u32 %v1630, 7
        %v1632 = vsub.s32 %v1629, %v1631
        %v1633 = vrot.slane %v1605, %v1632
        %v1634 = vcombine.high %v1612, %v1612
        %v1635 = vcombine.high %v1619, %v1619
        %v1636 = vcombine.high %v1626, %v1626
        %v1637 = vcombine.high %v1633, %v1633
        %v1638 = vlaneseq
        %v1639 = vshrl.u32 %v1638, 7
        %v1640 = vsub.s32 0, %v1639
        %v1641 = vrot.slane %v1563, %v1640
        %v1642 = vlaneseq
        %v1643 = vshrl.u32 %v1642, 7
        %v1644 = vsub.s32 0, %v1643
        %v1645 = vrot.slane %v1577, %v1644
        %v1646 = vlaneseq
        %v1647 = vshrl.u32 %v1646, 7
        %v1648 = vsub.s32 0, %v1647
        %v1649 = vrot.slane %v1585, %v1648
        %v1650 = vlaneseq
        %v1651 = vshrl.u32 %v1650, 7
        %v1652 = vsub.s32 0, %v1651
        %v1653 = vrot.slane %v1587, %v1652
        %v1654 = vlaneseq
        %v1655 = vshrl.u32 %v1654, 7
        %v1656 = vsub.s32 0, %v1655
        %v1657 = vrot.slane %v1570, %v1656
        %v1658 = vlaneseq
        %v1659 = vshrl.u32 %v1658, 7
        %v1660 = vsub.s32 0, %v1659
        %v1661 = vrot.slane %v1584, %v1660
        %v1662 = vlaneseq
        %v1663 = vshrl.u32 %v1662, 7
        %v1664 = vsub.s32 0, %v1663
        %v1665 = vrot.slane %v1586, %v1664
        %v1666 = vlaneseq
        %v1667 = vshrl.u32 %v1666, 7
        %v1668 = vsub.s32 0, %v1667
        %v1669 = vrot.slane %v1588, %v1668
        %v1670 = vlaneseq
        %v1671 = vshrl.u32 %v1670, 7
        %v1672 = vsub.s32 0, %v1671
        %v1673 = vrot.slane %v1612, %v1672
        %v1674 = vlaneseq
        %v1675 = vshrl.u32 %v1674, 7
        %v1676 = vsub.s32 0, %v1675
        %v1677 = vrot.slane %v1626, %v1676
        %v1678 = vlaneseq
        %v1679 = vshrl.u32 %v1678, 7
        %v1680 = vsub.s32 0, %v1679
        %v1681 = vrot.slane %v1634, %v1680
        %v1682 = vlaneseq
        %v1683 = vshrl.u32 %v1682, 7
        %v1684 = vsub.s32 0, %v1683
        %v1685 = vrot.slane %v1636, %v1684
        %v1686 = vlaneseq
        %v1687 = vshrl.u32 %v1686, 7
        %v1688 = vsub.s32 0, %v1687
        %v1689 = vrot.slane %v1619, %v1688
        %v1690 = vlaneseq
        %v1691 = vshrl.u32 %v1690, 7
        %v1692 = vsub.s32 0, %v1691
        %v1693 = vrot.slane %v1633, %v1692
        %v1694 = vlaneseq
        %v1695 = vshrl.u32 %v1694, 7
        %v1696 = vsub.s32 0, %v1695
        %v1697 = vrot.slane %v1635, %v1696
        %v1698 = vlaneseq
        %v1699 = vshrl.u32 %v1698, 7
        %v1700 = vsub.s32 0, %v1699
        %v1701 = vrot.slane %v1637, %v1700
        %v1718 = vmul.f32 %v1641, %v1537
        %v1719 = vmul.f32 %v1645, %v1537
        %v1720 = vmul.f32 %v1649, %v1537
        %v1721 = vmul.f32 %v1653, %v1537
        %v1722 = vmul.f32 %v1657, %v1537
        %v1723 = vmul.f32 %v1661, %v1537
        %v1724 = vmul.f32 %v1665, %v1537
        %v1725 = vmul.f32 %v1669, %v1537
        %v1726 = vmul.f32 %v1673, %v1537
        %v1727 = vmul.f32 %v1677, %v1537
        %v1728 = vmul.f32 %v1681, %v1537
        %v1729 = vmul.f32 %v1685, %v1537
        %v1730 = vmul.f32 %v1689, %v1537
        %v1731 = vmul.f32 %v1693, %v1537
        %v1732 = vmul.f32 %v1697, %v1537
        %v1733 = vmul.f32 %v1701, %v1537
        %v1734 = vmul.f32 %v1718, 1.442695
        %v1735 = vpow.pop %v1734
        %v1736 = vmul.f32 %v1719, 1.442695
        %v1737 = vpow.pop %v1736
        %v1738 = vmul.f32 %v1720, 1.442695
        %v1739 = vpow.pop %v1738
        %v1740 = vmul.f32 %v1721, 1.442695
        %v1741 = vpow.pop %v1740
        %v1742 = vmul.f32 %v1722, 1.442695
        %v1743 = vpow.pop %v1742
        %v1744 = vmul.f32 %v1723, 1.442695
        %v1745 = vpow.pop %v1744
        %v1746 = vmul.f32 %v1724, 1.442695
        %v1747 = vpow.pop %v1746
        %v1748 = vmul.f32 %v1725, 1.442695
        %v1749 = vpow.pop %v1748
        %v1750 = vmul.f32 %v1726, 1.442695
        %v1751 = vpow.pop %v1750
        %v1752 = vmul.f32 %v1727, 1.442695
        %v1753 = vpow.pop %v1752
        %v1754 = vmul.f32 %v1728, 1.442695
        %v1755 = vpow.pop %v1754
        %v1756 = vmul.f32 %v1729, 1.442695
        %v1757 = vpow.pop %v1756
        %v1758 = vmul.f32 %v1730, 1.442695
        %v1759 = vpow.pop %v1758
        %v1760 = vmul.f32 %v1731, 1.442695
        %v1761 = vpow.pop %v1760
        %v1762 = vmul.f32 %v1732, 1.442695
        %v1763 = vpow.pop %v1762
        %v1764 = vmul.f32 %v1733, 1.442695
        %v1765 = vpow.pop %v1764
        %1766 = vst.msk [vmem:[#allocation2] sm:$0xff] %vm451, %v1735
        %1767 = vst.msk [vmem:[#allocation2 + $0x8] sm:$0xff] %vm451, %v1737
        %1768 = vst.msk [vmem:[#allocation2 + $0x10] sm:$0xff] %vm451, %v1739
        %1769 = vst.msk [vmem:[#allocation2 + $0x18] sm:$0xff] %vm451, %v1741
        %1770 = vst.msk [vmem:[#allocation2 + $0x20] sm:$0xff] %vm451, %v1743
        %1771 = vst.msk [vmem:[#allocation2 + $0x28] sm:$0xff] %vm451, %v1745
        %1772 = vst.msk [vmem:[#allocation2 + $0x30] sm:$0xff] %vm451, %v1747
        %1773 = vst.msk [vmem:[#allocation2 + $0x38] sm:$0xff] %vm451, %v1749
        %1774 = vst.msk [vmem:[#allocation2 + $0x40] sm:$0xff] %vm451, %v1751
        %1775 = vst.msk [vmem:[#allocation2 + $0x48] sm:$0xff] %vm451, %v1753
        %1776 = vst.msk [vmem:[#allocation2 + $0x50] sm:$0xff] %vm451, %v1755
        %1777 = vst.msk [vmem:[#allocation2 + $0x58] sm:$0xff] %vm451, %v1757
        %1778 = vst.msk [vmem:[#allocation2 + $0x60] sm:$0xff] %vm451, %v1759
        %1779 = vst.msk [vmem:[#allocation2 + $0x68] sm:$0xff] %vm451, %v1761
        %1780 = vst.msk [vmem:[#allocation2 + $0x70] sm:$0xff] %vm451, %v1763
        %1781 = vst.msk [vmem:[#allocation2 + $0x78] sm:$0xff] %vm451, %v1765
        %v1784 = vmul.f32 %v1535, %v1425
        %v1785 = vmul.f32 %v1536, %v1427
        %v1788 = vcombine.high %v1784, %v1784
        %v1790 = vunpack.c.l.s4 1966171168
        %v1791 = vunpack.c.0.s8 %v1790
        %v1792 = vlaneseq
        %v1793 = vshrl.u32 %v1792, 7
        %v1794 = vsub.s32 %v1791, %v1793
        %v1795 = vrot.slane %v1784, %v1794
        %v1797 = vunpack.c.l.s4 1966171168
        %v1798 = vunpack.c.0.s8 %v1797
        %v1799 = vlaneseq
        %v1800 = vshrl.u32 %v1799, 7
        %v1801 = vsub.s32 %v1798, %v1800
        %v1802 = vrot.slane %v1788, %v1801
        %v1803 = vcombine.high %v1795, %v1795
        %v1804 = vcombine.high %v1802, %v1802
        %v1806 = vunpack.c.l.s4 1966171168
        %v1807 = vunpack.c.0.s8 %v1806
        %v1808 = vlaneseq
        %v1809 = vshrl.u32 %v1808, 7
        %v1810 = vsub.s32 %v1807, %v1809
        %v1811 = vrot.slane %v1795, %v1810
        %v1813 = vunpack.c.l.s4 1966171168
        %v1814 = vunpack.c.0.s8 %v1813
        %v1815 = vlaneseq
        %v1816 = vshrl.u32 %v1815, 7
        %v1817 = vsub.s32 %v1814, %v1816
        %v1818 = vrot.slane %v1802, %v1817
        %v1820 = vunpack.c.l.s4 1966171168
        %v1821 = vunpack.c.0.s8 %v1820
        %v1822 = vlaneseq
        %v1823 = vshrl.u32 %v1822, 7
        %v1824 = vsub.s32 %v1821, %v1823
        %v1825 = vrot.slane %v1803, %v1824
        %v1827 = vunpack.c.l.s4 1966171168
        %v1828 = vunpack.c.0.s8 %v1827
        %v1829 = vlaneseq
        %v1830 = vshrl.u32 %v1829, 7
        %v1831 = vsub.s32 %v1828, %v1830
        %v1832 = vrot.slane %v1804, %v1831
        %v1833 = vcombine.high %v1811, %v1811
        %v1834 = vcombine.high %v1818, %v1818
        %v1835 = vcombine.high %v1825, %v1825
        %v1836 = vcombine.high %v1832, %v1832
        %v1837 = vcombine.high %v1785, %v1785
        %v1839 = vunpack.c.l.s4 1966171168
        %v1840 = vunpack.c.0.s8 %v1839
        %v1841 = vlaneseq
        %v1842 = vshrl.u32 %v1841, 7
        %v1843 = vsub.s32 %v1840, %v1842
        %v1844 = vrot.slane %v1785, %v1843
        %v1846 = vunpack.c.l.s4 1966171168
        %v1847 = vunpack.c.0.s8 %v1846
        %v1848 = vlaneseq
        %v1849 = vshrl.u32 %v1848, 7
        %v1850 = vsub.s32 %v1847, %v1849
        %v1851 = vrot.slane %v1837, %v1850
        %v1852 = vcombine.high %v1844, %v1844
        %v1853 = vcombine.high %v1851, %v1851
        %v1855 = vunpack.c.l.s4 1966171168
        %v1856 = vunpack.c.0.s8 %v1855
        %v1857 = vlaneseq
        %v1858 = vshrl.u32 %v1857, 7
        %v1859 = vsub.s32 %v1856, %v1858
        %v1860 = vrot.slane %v1844, %v1859
        %v1862 = vunpack.c.l.s4 1966171168
        %v1863 = vunpack.c.0.s8 %v1862
        %v1864 = vlaneseq
        %v1865 = vshrl.u32 %v1864, 7
        %v1866 = vsub.s32 %v1863, %v1865
        %v1867 = vrot.slane %v1851, %v1866
        %v1869 = vunpack.c.l.s4 1966171168
        %v1870 = vunpack.c.0.s8 %v1869
        %v1871 = vlaneseq
        %v1872 = vshrl.u32 %v1871, 7
        %v1873 = vsub.s32 %v1870, %v1872
        %v1874 = vrot.slane %v1852, %v1873
        %v1876 = vunpack.c.l.s4 1966171168
        %v1877 = vunpack.c.0.s8 %v1876
        %v1878 = vlaneseq
        %v1879 = vshrl.u32 %v1878, 7
        %v1880 = vsub.s32 %v1877, %v1879
        %v1881 = vrot.slane %v1853, %v1880
        %v1882 = vcombine.high %v1860, %v1860
        %v1883 = vcombine.high %v1867, %v1867
        %v1884 = vcombine.high %v1874, %v1874
        %v1885 = vcombine.high %v1881, %v1881
        %v1886 = vlaneseq
        %v1887 = vshrl.u32 %v1886, 7
        %v1888 = vsub.s32 0, %v1887
        %v1889 = vrot.slane %v1499, %v1888
        %s1891 = sor.u32 256, 32
        %1892 = vbcast.lane.b32.xlu0 %v1889, %s1891
        %v1893 = vpop.permute.xlu0 %1892
        %v1894 = vlaneseq
        %v1895 = vshrl.u32 %v1894, 7
        %v1896 = vsub.s32 1, %v1895
        %v1897 = vrot.slane %v1499, %v1896
        %s1899 = sor.u32 256, 32
        %1900 = vbcast.lane.b32.xlu0 %v1897, %s1899
        %v1901 = vpop.permute.xlu0 %1900
        %v1902 = vlaneseq
        %v1903 = vshrl.u32 %v1902, 7
        %v1904 = vsub.s32 2, %v1903
        %v1905 = vrot.slane %v1499, %v1904
        %s1907 = sor.u32 256, 32
        %1908 = vbcast.lane.b32.xlu0 %v1905, %s1907
        %v1909 = vpop.permute.xlu0 %1908
        %v1910 = vlaneseq
        %v1911 = vshrl.u32 %v1910, 7
        %v1912 = vsub.s32 3, %v1911
        %v1913 = vrot.slane %v1499, %v1912
        %s1915 = sor.u32 256, 32
        %1916 = vbcast.lane.b32.xlu0 %v1913, %s1915
        %v1917 = vpop.permute.xlu0 %1916
        %v1918 = vlaneseq
        %v1919 = vshrl.u32 %v1918, 7
        %v1920 = vsub.s32 4, %v1919
        %v1921 = vrot.slane %v1499, %v1920
        %s1923 = sor.u32 256, 32
        %1924 = vbcast.lane.b32.xlu0 %v1921, %s1923
        %v1925 = vpop.permute.xlu0 %1924
        %v1926 = vlaneseq
        %v1927 = vshrl.u32 %v1926, 7
        %v1928 = vsub.s32 5, %v1927
        %v1929 = vrot.slane %v1499, %v1928
        %s1931 = sor.u32 256, 32
        %1932 = vbcast.lane.b32.xlu0 %v1929, %s1931
        %v1933 = vpop.permute.xlu0 %1932
        %v1934 = vlaneseq
        %v1935 = vshrl.u32 %v1934, 7
        %v1936 = vsub.s32 6, %v1935
        %v1937 = vrot.slane %v1499, %v1936
        %s1939 = sor.u32 256, 32
        %1940 = vbcast.lane.b32.xlu0 %v1937, %s1939
        %v1941 = vpop.permute.xlu0 %1940
        %v1942 = vlaneseq
        %v1943 = vshrl.u32 %v1942, 7
        %v1944 = vsub.s32 7, %v1943
        %v1945 = vrot.slane %v1499, %v1944
        %s1947 = sor.u32 256, 32
        %1948 = vbcast.lane.b32.xlu0 %v1945, %s1947
        %v1949 = vpop.permute.xlu0 %1948
        %v1950 = vlaneseq
        %v1951 = vshrl.u32 %v1950, 7
        %v1952 = vsub.s32 0, %v1951
        %v1953 = vrot.slane %v1504, %v1952
        %s1955 = sor.u32 256, 32
        %1956 = vbcast.lane.b32.xlu0 %v1953, %s1955
        %v1957 = vpop.permute.xlu0 %1956
        %v1958 = vlaneseq
        %v1959 = vshrl.u32 %v1958, 7
        %v1960 = vsub.s32 1, %v1959
        %v1961 = vrot.slane %v1504, %v1960
        %s1963 = sor.u32 256, 32
        %1964 = vbcast.lane.b32.xlu0 %v1961, %s1963
        %v1965 = vpop.permute.xlu0 %1964
        %v1966 = vlaneseq
        %v1967 = vshrl.u32 %v1966, 7
        %v1968 = vsub.s32 2, %v1967
        %v1969 = vrot.slane %v1504, %v1968
        %s1971 = sor.u32 256, 32
        %1972 = vbcast.lane.b32.xlu0 %v1969, %s1971
        %v1973 = vpop.permute.xlu0 %1972
        %v1974 = vlaneseq
        %v1975 = vshrl.u32 %v1974, 7
        %v1976 = vsub.s32 3, %v1975
        %v1977 = vrot.slane %v1504, %v1976
        %s1979 = sor.u32 256, 32
        %1980 = vbcast.lane.b32.xlu0 %v1977, %s1979
        %v1981 = vpop.permute.xlu0 %1980
        %v1982 = vlaneseq
        %v1983 = vshrl.u32 %v1982, 7
        %v1984 = vsub.s32 4, %v1983
        %v1985 = vrot.slane %v1504, %v1984
        %s1987 = sor.u32 256, 32
        %1988 = vbcast.lane.b32.xlu0 %v1985, %s1987
        %v1989 = vpop.permute.xlu0 %1988
        %v1990 = vlaneseq
        %v1991 = vshrl.u32 %v1990, 7
        %v1992 = vsub.s32 5, %v1991
        %v1993 = vrot.slane %v1504, %v1992
        %s1995 = sor.u32 256, 32
        %1996 = vbcast.lane.b32.xlu0 %v1993, %s1995
        %v1997 = vpop.permute.xlu0 %1996
        %v1998 = vlaneseq
        %v1999 = vshrl.u32 %v1998, 7
        %v2000 = vsub.s32 6, %v1999
        %v2001 = vrot.slane %v1504, %v2000
        %s2003 = sor.u32 256, 32
        %2004 = vbcast.lane.b32.xlu0 %v2001, %s2003
        %v2005 = vpop.permute.xlu0 %2004
        %v2006 = vlaneseq
        %v2007 = vshrl.u32 %v2006, 7
        %v2008 = vsub.s32 7, %v2007
        %v2009 = vrot.slane %v1504, %v2008
        %s2011 = sor.u32 256, 32
        %2012 = vbcast.lane.b32.xlu0 %v2009, %s2011
        %v2013 = vpop.permute.xlu0 %2012
        %v2014 = vlaneseq
        %v2015 = vshrl.u32 %v2014, 7
        %v2016 = vsub.s32 0, %v2015
        %v2017 = vrot.slane %v1811, %v2016
        %v2018 = vlaneseq
        %v2019 = vshrl.u32 %v2018, 7
        %v2020 = vsub.s32 0, %v2019
        %v2021 = vrot.slane %v1825, %v2020
        %v2022 = vlaneseq
        %v2023 = vshrl.u32 %v2022, 7
        %v2024 = vsub.s32 0, %v2023
        %v2025 = vrot.slane %v1833, %v2024
        %v2026 = vlaneseq
        %v2027 = vshrl.u32 %v2026, 7
        %v2028 = vsub.s32 0, %v2027
        %v2029 = vrot.slane %v1835, %v2028
        %v2030 = vlaneseq
        %v2031 = vshrl.u32 %v2030, 7
        %v2032 = vsub.s32 0, %v2031
        %v2033 = vrot.slane %v1818, %v2032
        %v2034 = vlaneseq
        %v2035 = vshrl.u32 %v2034, 7
        %v2036 = vsub.s32 0, %v2035
        %v2037 = vrot.slane %v1832, %v2036
        %v2038 = vlaneseq
        %v2039 = vshrl.u32 %v2038, 7
        %v2040 = vsub.s32 0, %v2039
        %v2041 = vrot.slane %v1834, %v2040
        %v2042 = vlaneseq
        %v2043 = vshrl.u32 %v2042, 7
        %v2044 = vsub.s32 0, %v2043
        %v2045 = vrot.slane %v1836, %v2044
        %v2046 = vlaneseq
        %v2047 = vshrl.u32 %v2046, 7
        %v2048 = vsub.s32 0, %v2047
        %v2049 = vrot.slane %v1860, %v2048
        %v2050 = vlaneseq
        %v2051 = vshrl.u32 %v2050, 7
        %v2052 = vsub.s32 0, %v2051
        %v2053 = vrot.slane %v1874, %v2052
        %v2054 = vlaneseq
        %v2055 = vshrl.u32 %v2054, 7
        %v2056 = vsub.s32 0, %v2055
        %v2057 = vrot.slane %v1882, %v2056
        %v2058 = vlaneseq
        %v2059 = vshrl.u32 %v2058, 7
        %v2060 = vsub.s32 0, %v2059
        %v2061 = vrot.slane %v1884, %v2060
        %v2062 = vlaneseq
        %v2063 = vshrl.u32 %v2062, 7
        %v2064 = vsub.s32 0, %v2063
        %v2065 = vrot.slane %v1867, %v2064
        %v2066 = vlaneseq
        %v2067 = vshrl.u32 %v2066, 7
        %v2068 = vsub.s32 0, %v2067
        %v2069 = vrot.slane %v1881, %v2068
        %v2070 = vlaneseq
        %v2071 = vshrl.u32 %v2070, 7
        %v2072 = vsub.s32 0, %v2071
        %v2073 = vrot.slane %v1883, %v2072
        %v2074 = vlaneseq
        %v2075 = vshrl.u32 %v2074, 7
        %v2076 = vsub.s32 0, %v2075
        %v2077 = vrot.slane %v1885, %v2076
        %v2094 = vmul.f32 %v2017, %v1893
        %v2095 = vmul.f32 %v2021, %v1901
        %v2096 = vmul.f32 %v2025, %v1909
        %v2097 = vmul.f32 %v2029, %v1917
        %v2098 = vmul.f32 %v2033, %v1925
        %v2099 = vmul.f32 %v2037, %v1933
        %v2100 = vmul.f32 %v2041, %v1941
        %v2101 = vmul.f32 %v2045, %v1949
        %v2102 = vmul.f32 %v2049, %v1957
        %v2103 = vmul.f32 %v2053, %v1965
        %v2104 = vmul.f32 %v2057, %v1973
        %v2105 = vmul.f32 %v2061, %v1981
        %v2106 = vmul.f32 %v2065, %v1989
        %v2107 = vmul.f32 %v2069, %v1997
        %v2108 = vmul.f32 %v2073, %v2005
        %v2109 = vmul.f32 %v2077, %v2013
        %2110 = vst.msk [vmem:[#allocation3] sm:$0xff] %vm451, %v2094
        %2111 = vst.msk [vmem:[#allocation3 + $0x8] sm:$0xff] %vm451, %v2095
        %2112 = vst.msk [vmem:[#allocation3 + $0x10] sm:$0xff] %vm451, %v2096
        %2113 = vst.msk [vmem:[#allocation3 + $0x18] sm:$0xff] %vm451, %v2097
        %2114 = vst.msk [vmem:[#allocation3 + $0x20] sm:$0xff] %vm451, %v2098
        %2115 = vst.msk [vmem:[#allocation3 + $0x28] sm:$0xff] %vm451, %v2099
        %2116 = vst.msk [vmem:[#allocation3 + $0x30] sm:$0xff] %vm451, %v2100
        %2117 = vst.msk [vmem:[#allocation3 + $0x38] sm:$0xff] %vm451, %v2101
        %2118 = vst.msk [vmem:[#allocation3 + $0x40] sm:$0xff] %vm451, %v2102
        %2119 = vst.msk [vmem:[#allocation3 + $0x48] sm:$0xff] %vm451, %v2103
        %2120 = vst.msk [vmem:[#allocation3 + $0x50] sm:$0xff] %vm451, %v2104
        %2121 = vst.msk [vmem:[#allocation3 + $0x58] sm:$0xff] %vm451, %v2105
        %2122 = vst.msk [vmem:[#allocation3 + $0x60] sm:$0xff] %vm451, %v2106
        %2123 = vst.msk [vmem:[#allocation3 + $0x68] sm:$0xff] %vm451, %v2107
        %2124 = vst.msk [vmem:[#allocation3 + $0x70] sm:$0xff] %vm451, %v2108
        %2125 = vst.msk [vmem:[#allocation3 + $0x78] sm:$0xff] %vm451, %v2109
        %v2126 = vld [vmem:[#allocation2] sm:$0xff]
        %v2127 = vld [vmem:[#allocation2 + $0x40] sm:$0xff]
        %v2128 = vmul.f32 %v2126, 0.0
        %v2129 = vmul.f32 %v2127, 0.0
        %v2130 = vld [vmem:[#allocation3] sm:$0xff]
        %v2131 = vld [vmem:[#allocation3 + $0x40] sm:$0xff]
        %v2132 = vadd.f32 %v2128, %v2130
        %v2133 = vadd.f32 %v2129, %v2131
        %2134 = vst.msk [vmem:[#allocation4] sm:$0xff] %vm451, %v2132
        %2135 = vst.msk [vmem:[#allocation4 + $0x40] sm:$0xff] %vm451, %v2133
        %s2136 = scalar_lea.vmem [#allocation2], 8
        %v2137 = vld [vmem:[%s2136] sm:$0xff]
        %v2138 = vld [vmem:[%s2136 + $0x40] sm:$0xff]
        %v2139 = vmul.f32 %v2137, %v2132
        %v2140 = vmul.f32 %v2138, %v2133
        %s2141 = scalar_lea.vmem [#allocation3], 8
        %v2142 = vld [vmem:[%s2141] sm:$0xff]
        %v2143 = vld [vmem:[%s2141 + $0x40] sm:$0xff]
        %v2144 = vadd.f32 %v2139, %v2142
        %v2145 = vadd.f32 %v2140, %v2143
        %s2146 = scalar_lea.vmem [#allocation4], 8
        %2147 = vst.msk [vmem:[%s2146] sm:$0xff] %vm451, %v2144
        %2148 = vst.msk [vmem:[%s2146 + $0x40] sm:$0xff] %vm451, %v2145
        %s2149 = scalar_lea.vmem [#allocation2], 16
        %v2150 = vld [vmem:[%s2149] sm:$0xff]
        %v2151 = vld [vmem:[%s2149 + $0x40] sm:$0xff]
        %v2152 = vmul.f32 %v2150, %v2144
        %v2153 = vmul.f32 %v2151, %v2145
        %s2154 = scalar_lea.vmem [#allocation3], 16
        %v2155 = vld [vmem:[%s2154] sm:$0xff]
        %v2156 = vld [vmem:[%s2154 + $0x40] sm:$0xff]
        %v2157 = vadd.f32 %v2152, %v2155
        %v2158 = vadd.f32 %v2153, %v2156
        %s2159 = scalar_lea.vmem [#allocation4], 16
        %2160 = vst.msk [vmem:[%s2159] sm:$0xff] %vm451, %v2157
        %2161 = vst.msk [vmem:[%s2159 + $0x40] sm:$0xff] %vm451, %v2158
        %s2162 = scalar_lea.vmem [#allocation2], 24
        %v2163 = vld [vmem:[%s2162] sm:$0xff]
        %v2164 = vld [vmem:[%s2162 + $0x40] sm:$0xff]
        %v2165 = vmul.f32 %v2163, %v2157
        %v2166 = vmul.f32 %v2164, %v2158
        %s2167 = scalar_lea.vmem [#allocation3], 24
        %v2168 = vld [vmem:[%s2167] sm:$0xff]
        %v2169 = vld [vmem:[%s2167 + $0x40] sm:$0xff]
        %v2170 = vadd.f32 %v2165, %v2168
        %v2171 = vadd.f32 %v2166, %v2169
        %s2172 = scalar_lea.vmem [#allocation4], 24
        %2173 = vst.msk [vmem:[%s2172] sm:$0xff] %vm451, %v2170
        %2174 = vst.msk [vmem:[%s2172 + $0x40] sm:$0xff] %vm451, %v2171
        %s2175 = scalar_lea.vmem [#allocation2], 32
        %v2176 = vld [vmem:[%s2175] sm:$0xff]
        %v2177 = vld [vmem:[%s2175 + $0x40] sm:$0xff]
        %v2178 = vmul.f32 %v2176, %v2170
        %v2179 = vmul.f32 %v2177, %v2171
        %s2180 = scalar_lea.vmem [#allocation3], 32
        %v2181 = vld [vmem:[%s2180] sm:$0xff]
        %v2182 = vld [vmem:[%s2180 + $0x40] sm:$0xff]
        %v2183 = vadd.f32 %v2178, %v2181
        %v2184 = vadd.f32 %v2179, %v2182
        %s2185 = scalar_lea.vmem [#allocation4], 32
        %2186 = vst.msk [vmem:[%s2185] sm:$0xff] %vm451, %v2183
        %2187 = vst.msk [vmem:[%s2185 + $0x40] sm:$0xff] %vm451, %v2184
        %s2188 = scalar_lea.vmem [#allocation2], 40
        %v2189 = vld [vmem:[%s2188] sm:$0xff]
        %v2190 = vld [vmem:[%s2188 + $0x40] sm:$0xff]
        %v2191 = vmul.f32 %v2189, %v2183
        %v2192 = vmul.f32 %v2190, %v2184
        %s2193 = scalar_lea.vmem [#allocation3], 40
        %v2194 = vld [vmem:[%s2193] sm:$0xff]
        %v2195 = vld [vmem:[%s2193 + $0x40] sm:$0xff]
        %v2196 = vadd.f32 %v2191, %v2194
        %v2197 = vadd.f32 %v2192, %v2195
        %s2198 = scalar_lea.vmem [#allocation4], 40
        %2199 = vst.msk [vmem:[%s2198] sm:$0xff] %vm451, %v2196
        %2200 = vst.msk [vmem:[%s2198 + $0x40] sm:$0xff] %vm451, %v2197
        %s2201 = scalar_lea.vmem [#allocation2], 48
        %v2202 = vld [vmem:[%s2201] sm:$0xff]
        %v2203 = vld [vmem:[%s2201 + $0x40] sm:$0xff]
        %v2204 = vmul.f32 %v2202, %v2196
        %v2205 = vmul.f32 %v2203, %v2197
        %s2206 = scalar_lea.vmem [#allocation3], 48
        %v2207 = vld [vmem:[%s2206] sm:$0xff]
        %v2208 = vld [vmem:[%s2206 + $0x40] sm:$0xff]
        %v2209 = vadd.f32 %v2204, %v2207
        %v2210 = vadd.f32 %v2205, %v2208
        %s2211 = scalar_lea.vmem [#allocation4], 48
        %2212 = vst.msk [vmem:[%s2211] sm:$0xff] %vm451, %v2209
        %2213 = vst.msk [vmem:[%s2211 + $0x40] sm:$0xff] %vm451, %v2210
        %s2214 = scalar_lea.vmem [#allocation2], 56
        %v2215 = vld [vmem:[%s2214] sm:$0xff]
        %v2216 = vld [vmem:[%s2214 + $0x40] sm:$0xff]
        %v2217 = vmul.f32 %v2215, %v2209
        %v2218 = vmul.f32 %v2216, %v2210
        %s2219 = scalar_lea.vmem [#allocation3], 56
        %v2220 = vld [vmem:[%s2219] sm:$0xff]
        %v2221 = vld [vmem:[%s2219 + $0x40] sm:$0xff]
        %v2222 = vadd.f32 %v2217, %v2220
        %v2223 = vadd.f32 %v2218, %v2221
        %s2224 = scalar_lea.vmem [#allocation4], 56
        %2225 = vst.msk [vmem:[%s2224] sm:$0xff] %vm451, %v2222
        %2226 = vst.msk [vmem:[%s2224 + $0x40] sm:$0xff] %vm451, %v2223
        %v2227 = vld [vmem:[#allocation4] sm:$0xff]
        %v2228 = vld [vmem:[#allocation4 + $0x8] sm:$0xff]
        %v2229 = vld [vmem:[#allocation4 + $0x10] sm:$0xff]
        %v2230 = vld [vmem:[#allocation4 + $0x18] sm:$0xff]
        %v2231 = vld [vmem:[#allocation4 + $0x20] sm:$0xff]
        %v2232 = vld [vmem:[#allocation4 + $0x28] sm:$0xff]
        %v2233 = vld [vmem:[#allocation4 + $0x30] sm:$0xff]
        %v2234 = vld [vmem:[#allocation4 + $0x38] sm:$0xff]
        %v2235 = vld [vmem:[#allocation4 + $0x40] sm:$0xff]
        %v2236 = vld [vmem:[#allocation4 + $0x48] sm:$0xff]
        %v2237 = vld [vmem:[#allocation4 + $0x50] sm:$0xff]
        %v2238 = vld [vmem:[#allocation4 + $0x58] sm:$0xff]
        %v2239 = vld [vmem:[#allocation4 + $0x60] sm:$0xff]
        %v2240 = vld [vmem:[#allocation4 + $0x68] sm:$0xff]
        %v2241 = vld [vmem:[#allocation4 + $0x70] sm:$0xff]
        %v2242 = vld [vmem:[#allocation4 + $0x78] sm:$0xff]
        %s2244 = sor.u32 256, 40
        %2245 = vbcast.lane.b32.xlu0 %v1889, %s2244
        %v2246 = vpop.permute.xlu0 %2245
        %s2248 = sor.u32 256, 40
        %2249 = vbcast.lane.b32.xlu0 %v1897, %s2248
        %v2250 = vpop.permute.xlu0 %2249
        %s2252 = sor.u32 256, 40
        %2253 = vbcast.lane.b32.xlu0 %v1905, %s2252
        %v2254 = vpop.permute.xlu0 %2253
        %s2256 = sor.u32 256, 40
        %2257 = vbcast.lane.b32.xlu0 %v1913, %s2256
        %v2258 = vpop.permute.xlu0 %2257
        %s2260 = sor.u32 256, 40
        %2261 = vbcast.lane.b32.xlu0 %v1921, %s2260
        %v2262 = vpop.permute.xlu0 %2261
        %s2264 = sor.u32 256, 40
        %2265 = vbcast.lane.b32.xlu0 %v1929, %s2264
        %v2266 = vpop.permute.xlu0 %2265
        %s2268 = sor.u32 256, 40
        %2269 = vbcast.lane.b32.xlu0 %v1937, %s2268
        %v2270 = vpop.permute.xlu0 %2269
        %s2272 = sor.u32 256, 40
        %2273 = vbcast.lane.b32.xlu0 %v1945, %s2272
        %v2274 = vpop.permute.xlu0 %2273
        %s2276 = sor.u32 256, 40
        %2277 = vbcast.lane.b32.xlu0 %v1953, %s2276
        %v2278 = vpop.permute.xlu0 %2277
        %s2280 = sor.u32 256, 40
        %2281 = vbcast.lane.b32.xlu0 %v1961, %s2280
        %v2282 = vpop.permute.xlu0 %2281
        %s2284 = sor.u32 256, 40
        %2285 = vbcast.lane.b32.xlu0 %v1969, %s2284
        %v2286 = vpop.permute.xlu0 %2285
        %s2288 = sor.u32 256, 40
        %2289 = vbcast.lane.b32.xlu0 %v1977, %s2288
        %v2290 = vpop.permute.xlu0 %2289
        %s2292 = sor.u32 256, 40
        %2293 = vbcast.lane.b32.xlu0 %v1985, %s2292
        %v2294 = vpop.permute.xlu0 %2293
        %s2296 = sor.u32 256, 40
        %2297 = vbcast.lane.b32.xlu0 %v1993, %s2296
        %v2298 = vpop.permute.xlu0 %2297
        %s2300 = sor.u32 256, 40
        %2301 = vbcast.lane.b32.xlu0 %v2001, %s2300
        %v2302 = vpop.permute.xlu0 %2301
        %s2304 = sor.u32 256, 40
        %2305 = vbcast.lane.b32.xlu0 %v2009, %s2304
        %v2306 = vpop.permute.xlu0 %2305
        %v2307 = vmul.f32 %v2227, %v2246
        %v2308 = vmul.f32 %v2228, %v2250
        %v2309 = vmul.f32 %v2229, %v2254
        %v2310 = vmul.f32 %v2230, %v2258
        %v2311 = vmul.f32 %v2231, %v2262
        %v2312 = vmul.f32 %v2232, %v2266
        %v2313 = vmul.f32 %v2233, %v2270
        %v2314 = vmul.f32 %v2234, %v2274
        %v2315 = vmul.f32 %v2235, %v2278
        %v2316 = vmul.f32 %v2236, %v2282
        %v2317 = vmul.f32 %v2237, %v2286
        %v2318 = vmul.f32 %v2238, %v2290
        %v2319 = vmul.f32 %v2239, %v2294
        %v2320 = vmul.f32 %v2240, %v2298
        %v2321 = vmul.f32 %v2241, %v2302
        %v2322 = vmul.f32 %v2242, %v2306
        %v2323 = vsel %vm451, %v2307, 0.0
        %v2324 = vrot.slane %v2323, 4
        %v2325 = vadd.f32 %v2323, %v2324
        %v2326 = vrot.slane %v2325, 2
        %v2327 = vadd.f32 %v2325, %v2326
        %v2328 = vrot.slane %v2327, 1
        %v2329 = vadd.f32 %v2327, %v2328
        %v2330 = vsel %vm451, %v2308, 0.0
        %v2331 = vrot.slane %v2330, 4
        %v2332 = vadd.f32 %v2330, %v2331
        %v2333 = vrot.slane %v2332, 2
        %v2334 = vadd.f32 %v2332, %v2333
        %v2335 = vrot.slane %v2334, 1
        %v2336 = vadd.f32 %v2334, %v2335
        %v2337 = vsel %vm451, %v2309, 0.0
        %v2338 = vrot.slane %v2337, 4
        %v2339 = vadd.f32 %v2337, %v2338
        %v2340 = vrot.slane %v2339, 2
        %v2341 = vadd.f32 %v2339, %v2340
        %v2342 = vrot.slane %v2341, 1
        %v2343 = vadd.f32 %v2341, %v2342
        %v2344 = vsel %vm451, %v2310, 0.0
        %v2345 = vrot.slane %v2344, 4
        %v2346 = vadd.f32 %v2344, %v2345
        %v2347 = vrot.slane %v2346, 2
        %v2348 = vadd.f32 %v2346, %v2347
        %v2349 = vrot.slane %v2348, 1
        %v2350 = vadd.f32 %v2348, %v2349
        %v2351 = vsel %vm451, %v2311, 0.0
        %v2352 = vrot.slane %v2351, 4
        %v2353 = vadd.f32 %v2351, %v2352
        %v2354 = vrot.slane %v2353, 2
        %v2355 = vadd.f32 %v2353, %v2354
        %v2356 = vrot.slane %v2355, 1
        %v2357 = vadd.f32 %v2355, %v2356
        %v2358 = vsel %vm451, %v2312, 0.0
        %v2359 = vrot.slane %v2358, 4
        %v2360 = vadd.f32 %v2358, %v2359
        %v2361 = vrot.slane %v2360, 2
        %v2362 = vadd.f32 %v2360, %v2361
        %v2363 = vrot.slane %v2362, 1
        %v2364 = vadd.f32 %v2362, %v2363
        %v2365 = vsel %vm451, %v2313, 0.0
        %v2366 = vrot.slane %v2365, 4
        %v2367 = vadd.f32 %v2365, %v2366
        %v2368 = vrot.slane %v2367, 2
        %v2369 = vadd.f32 %v2367, %v2368
        %v2370 = vrot.slane %v2369, 1
        %v2371 = vadd.f32 %v2369, %v2370
        %v2372 = vsel %vm451, %v2314, 0.0
        %v2373 = vrot.slane %v2372, 4
        %v2374 = vadd.f32 %v2372, %v2373
        %v2375 = vrot.slane %v2374, 2
        %v2376 = vadd.f32 %v2374, %v2375
        %v2377 = vrot.slane %v2376, 1
        %v2378 = vadd.f32 %v2376, %v2377
        %v2379 = vsel %vm451, %v2315, 0.0
        %v2380 = vrot.slane %v2379, 4
        %v2381 = vadd.f32 %v2379, %v2380
        %v2382 = vrot.slane %v2381, 2
        %v2383 = vadd.f32 %v2381, %v2382
        %v2384 = vrot.slane %v2383, 1
        %v2385 = vadd.f32 %v2383, %v2384
        %v2386 = vsel %vm451, %v2316, 0.0
        %v2387 = vrot.slane %v2386, 4
        %v2388 = vadd.f32 %v2386, %v2387
        %v2389 = vrot.slane %v2388, 2
        %v2390 = vadd.f32 %v2388, %v2389
        %v2391 = vrot.slane %v2390, 1
        %v2392 = vadd.f32 %v2390, %v2391
        %v2393 = vsel %vm451, %v2317, 0.0
        %v2394 = vrot.slane %v2393, 4
        %v2395 = vadd.f32 %v2393, %v2394
        %v2396 = vrot.slane %v2395, 2
        %v2397 = vadd.f32 %v2395, %v2396
        %v2398 = vrot.slane %v2397, 1
        %v2399 = vadd.f32 %v2397, %v2398
        %v2400 = vsel %vm451, %v2318, 0.0
        %v2401 = vrot.slane %v2400, 4
        %v2402 = vadd.f32 %v2400, %v2401
        %v2403 = vrot.slane %v2402, 2
        %v2404 = vadd.f32 %v2402, %v2403
        %v2405 = vrot.slane %v2404, 1
        %v2406 = vadd.f32 %v2404, %v2405
        %v2407 = vsel %vm451, %v2319, 0.0
        %v2408 = vrot.slane %v2407, 4
        %v2409 = vadd.f32 %v2407, %v2408
        %v2410 = vrot.slane %v2409, 2
        %v2411 = vadd.f32 %v2409, %v2410
        %v2412 = vrot.slane %v2411, 1
        %v2413 = vadd.f32 %v2411, %v2412
        %v2414 = vsel %vm451, %v2320, 0.0
        %v2415 = vrot.slane %v2414, 4
        %v2416 = vadd.f32 %v2414, %v2415
        %v2417 = vrot.slane %v2416, 2
        %v2418 = vadd.f32 %v2416, %v2417
        %v2419 = vrot.slane %v2418, 1
        %v2420 = vadd.f32 %v2418, %v2419
        %v2421 = vsel %vm451, %v2321, 0.0
        %v2422 = vrot.slane %v2421, 4
        %v2423 = vadd.f32 %v2421, %v2422
        %v2424 = vrot.slane %v2423, 2
        %v2425 = vadd.f32 %v2423, %v2424
        %v2426 = vrot.slane %v2425, 1
        %v2427 = vadd.f32 %v2425, %v2426
        %v2428 = vsel %vm451, %v2322, 0.0
        %v2429 = vrot.slane %v2428, 4
        %v2430 = vadd.f32 %v2428, %v2429
        %v2431 = vrot.slane %v2430, 2
        %v2432 = vadd.f32 %v2430, %v2431
        %v2433 = vrot.slane %v2432, 1
        %v2434 = vadd.f32 %v2432, %v2433
        %v2435 = vld [vmem:[%s6] sm:$0x1]
        %v2437 = vlaneseq
        %v2438 = vshrl.u32 %v2437, 7
        %v2439 = vsub.s32 0, %v2438
        %v2440 = vrot.slane %v2435, %v2439
        %v2442 = vmul.f32 %v2440, %v1425
        %v2443 = vmul.f32 %v2440, %v1427
        %v2446 = vrot.slane %v2442, 1
        %v2447 = vrot.slane %v2442, 2
        %v2448 = vrot.slane %v2442, 3
        %v2449 = vrot.slane %v2442, 4
        %v2450 = vrot.slane %v2442, 5
        %v2451 = vrot.slane %v2442, 6
        %v2452 = vrot.slane %v2442, 7
        %v2453 = vrot.slane %v2443, 1
        %v2454 = vrot.slane %v2443, 2
        %v2455 = vrot.slane %v2443, 3
        %v2456 = vrot.slane %v2443, 4
        %v2457 = vrot.slane %v2443, 5
        %v2458 = vrot.slane %v2443, 6
        %v2459 = vrot.slane %v2443, 7
        %v2476 = vadd.f32 %v2329, %v2442
        %v2477 = vadd.f32 %v2336, %v2446
        %v2478 = vadd.f32 %v2343, %v2447
        %v2479 = vadd.f32 %v2350, %v2448
        %v2480 = vadd.f32 %v2357, %v2449
        %v2481 = vadd.f32 %v2364, %v2450
        %v2482 = vadd.f32 %v2371, %v2451
        %v2483 = vadd.f32 %v2378, %v2452
        %v2484 = vadd.f32 %v2385, %v2443
        %v2485 = vadd.f32 %v2392, %v2453
        %v2486 = vadd.f32 %v2399, %v2454
        %v2487 = vadd.f32 %v2406, %v2455
        %v2488 = vadd.f32 %v2413, %v2456
        %v2489 = vadd.f32 %v2420, %v2457
        %v2490 = vadd.f32 %v2427, %v2458
        %v2491 = vadd.f32 %v2434, %v2459
        %v2494 = vrot.slane %v955, 1
        %v2495 = vrot.slane %v955, 2
        %v2496 = vrot.slane %v955, 3
        %v2497 = vrot.slane %v955, 4
        %v2498 = vrot.slane %v955, 5
        %v2499 = vrot.slane %v955, 6
        %v2500 = vrot.slane %v955, 7
        %v2501 = vrot.slane %v956, 1
        %v2502 = vrot.slane %v956, 2
        %v2503 = vrot.slane %v956, 3
        %v2504 = vrot.slane %v956, 4
        %v2505 = vrot.slane %v956, 5
        %v2506 = vrot.slane %v956, 6
        %v2507 = vrot.slane %v956, 7
        %v2524 = vmul.f32 %v2476, %v955
        %v2525 = vmul.f32 %v2477, %v2494
        %v2526 = vmul.f32 %v2478, %v2495
        %v2527 = vmul.f32 %v2479, %v2496
        %v2528 = vmul.f32 %v2480, %v2497
        %v2529 = vmul.f32 %v2481, %v2498
        %v2530 = vmul.f32 %v2482, %v2499
        %v2531 = vmul.f32 %v2483, %v2500
        %v2532 = vmul.f32 %v2484, %v956
        %v2533 = vmul.f32 %v2485, %v2501
        %v2534 = vmul.f32 %v2486, %v2502
        %v2535 = vmul.f32 %v2487, %v2503
        %v2536 = vmul.f32 %v2488, %v2504
        %v2537 = vmul.f32 %v2489, %v2505
        %v2538 = vmul.f32 %v2490, %v2506
        %v2539 = vmul.f32 %v2491, %v2507
        %v2540 = vld [vmem:[#allocation12] sm:$0xff]
        %v2541 = vld [vmem:[#allocation12 + $0x8] sm:$0xff]
        %v2542 = vld [vmem:[#allocation12 + $0x10] sm:$0xff]
        %v2543 = vld [vmem:[#allocation12 + $0x18] sm:$0xff]
        %v2560 = vrot.slane %v2525, 7
        %vm2561 = vcmask 1041409
        %v2562 = vsel %vm2561, %v2560, %v2524
        %v2563 = vrot.slane %v2526, 6
        %vm2564 = vcmask 1042434
        %v2565 = vsel %vm2564, %v2563, %v2562
        %v2566 = vrot.slane %v2527, 5
        %vm2567 = vcmask 1043459
        %v2568 = vsel %vm2567, %v2566, %v2565
        %v2569 = vrot.slane %v2528, 4
        %vm2570 = vcmask 1044484
        %v2571 = vsel %vm2570, %v2569, %v2568
        %v2572 = vrot.slane %v2529, 3
        %vm2573 = vcmask 1045509
        %v2574 = vsel %vm2573, %v2572, %v2571
        %v2575 = vrot.slane %v2530, 2
        %vm2576 = vcmask 1046534
        %v2577 = vsel %vm2576, %v2575, %v2574
        %v2578 = vrot.slane %v2531, 1
        %vm2579 = vcmask 1047559
        %v2580 = vsel %vm2579, %v2578, %v2577
        %v2581 = vrot.slane %v2533, 7
        %v2582 = vsel %vm2561, %v2581, %v2532
        %v2583 = vrot.slane %v2534, 6
        %v2584 = vsel %vm2564, %v2583, %v2582
        %v2585 = vrot.slane %v2535, 5
        %v2586 = vsel %vm2567, %v2585, %v2584
        %v2587 = vrot.slane %v2536, 4
        %v2588 = vsel %vm2570, %v2587, %v2586
        %v2589 = vrot.slane %v2537, 3
        %v2590 = vsel %vm2573, %v2589, %v2588
        %v2591 = vrot.slane %v2538, 2
        %v2592 = vsel %vm2576, %v2591, %v2590
        %v2593 = vrot.slane %v2539, 1
        %v2594 = vsel %vm2579, %v2593, %v2592
        %v2595 = vsel %vm451, %v2580, 0
        %v2597 = vsel %vm451, %v2594, 0
        %2599 = vmatprep.subr.mxu0 0.0
        %2600 = vmatpush1.msra.mxu0 0.0
        %2601 = vmatprep.subr.mxu0 0.0
        %2602 = vmatpush1.msra.mxu0 0.0
        %2603 = vmatprep.subr.mxu0 0.0
        %2604 = vmatpush1.msra.mxu0 0.0
        %2605 = vmatprep.subr.mxu0 0.0
        %2606 = vmatpush1.msra.mxu0 0.0
        %2607 = vmatprep.subr.mxu0 0.0
        %2608 = vmatpush1.msra.mxu0 0.0
        %2609 = vmatprep.subr.mxu0 0.0
        %2610 = vmatpush1.msra.mxu0 0.0
        %2611 = vmatprep.subr.mxu0 0.0
        %2612 = vmatpush1.msra.mxu0 0.0
        %2613 = vmatprep.subr.mxu0 0.0
        %2614 = vmatpush1.msra.mxu0 0.0
        %2615 = vmatprep.subr.mxu0 0.0
        %2616 = vmatpush1.msra.mxu0 0.0
        %2617 = vmatprep.subr.mxu0 0.0
        %2618 = vmatpush1.msra.mxu0 0.0
        %2619 = vmatprep.subr.mxu0 0.0
        %2620 = vmatpush1.msra.mxu0 0.0
        %2621 = vmatprep.subr.mxu0 0.0
        %2622 = vmatpush1.msra.mxu0 0.0
        %2623 = vmatprep.subr.mxu0 0.0
        %2624 = vmatpush1.msra.mxu0 %v2543
        %2625 = vmatprep.subr.mxu0 0.0
        %2626 = vmatpush1.msra.mxu0 %v2542
        %2627 = vmatprep.subr.mxu0 0.0
        %2628 = vmatpush1.msra.mxu0 %v2541
        %2629 = vmatprep.subr.mxu0 0.0
        %2630 = vmatpush1.msra.mxu0 %v2540
        %2631 = vmatprep.subr.mxu0 0.0
        %2632 = vmatpush2.msra.mxu0 0.0
        %2633 = vmatprep.subr.mxu0 0.0
        %2634 = vmatpush2.msra.mxu0 0.0
        %2635 = vmatprep.subr.mxu0 0.0
        %2636 = vmatpush2.msra.mxu0 0.0
        %2637 = vmatprep.subr.mxu0 0.0
        %2638 = vmatpush2.msra.mxu0 0.0
        %2639 = vmatprep.subr.mxu0 0.0
        %2640 = vmatpush2.msra.mxu0 0.0
        %2641 = vmatprep.subr.mxu0 0.0
        %2642 = vmatpush2.msra.mxu0 0.0
        %2643 = vmatprep.subr.mxu0 0.0
        %2644 = vmatpush2.msra.mxu0 0.0
        %2645 = vmatprep.subr.mxu0 0.0
        %2646 = vmatpush2.msra.mxu0 0.0
        %2647 = vmatprep.subr.mxu0 0.0
        %2648 = vmatpush2.msra.mxu0 0.0
        %2649 = vmatprep.subr.mxu0 0.0
        %2650 = vmatpush2.msra.mxu0 0.0
        %2651 = vmatprep.subr.mxu0 0.0
        %2652 = vmatpush2.msra.mxu0 0.0
        %2653 = vmatprep.subr.mxu0 0.0
        %2654 = vmatpush2.msra.mxu0 0.0
        %2655 = vmatprep.subr.mxu0 0.0
        %2656 = vmatpush2.msra.mxu0 0.0
        %2657 = vmatprep.subr.mxu0 0.0
        %2658 = vmatpush2.msra.mxu0 0.0
        %2659 = vmatprep.subr.mxu0 0.0
        %2660 = vmatpush2.msra.mxu0 0.0
        %2661 = vmatprep.subr.mxu0 0.0
        %2662 = vmatpush2.msra.mxu0 0.0
        %2663 = vmatprep.mubr.f32.mxu0 0.0
        %2664 = vmatmul.mubr.f32.gmra.mxu0 %v2595
        %v2665 = vpop.f32.mrf.mxu0
        %v2666 = vadd.f32 0.0, %v2665
        %v2667 = vpop.f32.mrf.mxu0
        %2668 = vmatprep.mubr.f32.mxu0 0.0
        %2669 = vmatmul.mubr.f32.gmra.mxu0 %v2597
        %v2670 = vpop.f32.mrf.mxu0
        %v2671 = vadd.f32 0.0, %v2670
        %v2672 = vpop.f32.mrf.mxu0
        %2673 = vdwg.mxu0
        %v2674 = vadd.f32 %v438, %v2666
        %v2675 = vadd.f32 %v439, %v2671
        %v2676 = vld [vmem:[%s8] sm:$0x1]
        %v2678 = vlaneseq
        %v2679 = vshrl.u32 %v2678, 7
        %v2680 = vsub.s32 0, %v2679
        %v2681 = vrot.slane %v2676, %v2680
        %v2683 = vadd.f32 %v2674, %v2681
        %v2684 = vadd.f32 %v2675, %v2681
        %s2685 = scalar_lea.vmem %s1, 32
        %v2686 = vld [vmem:[%s2685] sm:$0xff]
        %v2687 = vld [vmem:[%s2685 + $0x8] sm:$0xff]
        %v2688 = vld [vmem:[%s2685 + $0x10] sm:$0xff]
        %v2689 = vld [vmem:[%s2685 + $0x18] sm:$0xff]
        %s2690 = scalar_lea.vmem %s2, 1
        %v2691 = vld [vmem:[%s2690] sm:$0x1]
        %v2693 = vlaneseq
        %v2694 = vshrl.u32 %v2693, 7
        %v2695 = vsub.s32 0, %v2694
        %v2696 = vrot.slane %v2691, %v2695
        %v2699 = vsel %vm451, %v2683, 0
        %v2702 = vsel %vm451, %v2684, 0
        %2704 = vmatprep.subr.mxu0 0.0
        %2705 = vmatpush1.msra.mxu0 0.0
        %2706 = vmatprep.subr.mxu0 0.0
        %2707 = vmatpush1.msra.mxu0 0.0
        %2708 = vmatprep.subr.mxu0 0.0
        %2709 = vmatpush1.msra.mxu0 0.0
        %2710 = vmatprep.subr.mxu0 0.0
        %2711 = vmatpush1.msra.mxu0 0.0
        %2712 = vmatprep.subr.mxu0 0.0
        %2713 = vmatpush1.msra.mxu0 0.0
        %2714 = vmatprep.subr.mxu0 0.0
        %2715 = vmatpush1.msra.mxu0 0.0
        %2716 = vmatprep.subr.mxu0 0.0
        %2717 = vmatpush1.msra.mxu0 0.0
        %2718 = vmatprep.subr.mxu0 0.0
        %2719 = vmatpush1.msra.mxu0 0.0
        %2720 = vmatprep.subr.mxu0 0.0
        %2721 = vmatpush1.msra.mxu0 0.0
        %2722 = vmatprep.subr.mxu0 0.0
        %2723 = vmatpush1.msra.mxu0 0.0
        %2724 = vmatprep.subr.mxu0 0.0
        %2725 = vmatpush1.msra.mxu0 0.0
        %2726 = vmatprep.subr.mxu0 0.0
        %2727 = vmatpush1.msra.mxu0 0.0
        %2728 = vmatprep.subr.mxu0 0.0
        %2729 = vmatpush1.msra.mxu0 %v2689
        %2730 = vmatprep.subr.mxu0 0.0
        %2731 = vmatpush1.msra.mxu0 %v2688
        %2732 = vmatprep.subr.mxu0 0.0
        %2733 = vmatpush1.msra.mxu0 %v2687
        %2734 = vmatprep.subr.mxu0 0.0
        %2735 = vmatpush1.msra.mxu0 %v2686
        %2736 = vmatprep.subr.mxu0 0.0
        %2737 = vmatpush2.msra.mxu0 0.0
        %2738 = vmatprep.subr.mxu0 0.0
        %2739 = vmatpush2.msra.mxu0 0.0
        %2740 = vmatprep.subr.mxu0 0.0
        %2741 = vmatpush2.msra.mxu0 0.0
        %2742 = vmatprep.subr.mxu0 0.0
        %2743 = vmatpush2.msra.mxu0 0.0
        %2744 = vmatprep.subr.mxu0 0.0
        %2745 = vmatpush2.msra.mxu0 0.0
        %2746 = vmatprep.subr.mxu0 0.0
        %2747 = vmatpush2.msra.mxu0 0.0
        %2748 = vmatprep.subr.mxu0 0.0
        %2749 = vmatpush2.msra.mxu0 0.0
        %2750 = vmatprep.subr.mxu0 0.0
        %2751 = vmatpush2.msra.mxu0 0.0
        %2752 = vmatprep.subr.mxu0 0.0
        %2753 = vmatpush2.msra.mxu0 0.0
        %2754 = vmatprep.subr.mxu0 0.0
        %2755 = vmatpush2.msra.mxu0 0.0
        %2756 = vmatprep.subr.mxu0 0.0
        %2757 = vmatpush2.msra.mxu0 0.0
        %2758 = vmatprep.subr.mxu0 0.0
        %2759 = vmatpush2.msra.mxu0 0.0
        %2760 = vmatprep.subr.mxu0 0.0
        %2761 = vmatpush2.msra.mxu0 0.0
        %2762 = vmatprep.subr.mxu0 0.0
        %2763 = vmatpush2.msra.mxu0 0.0
        %2764 = vmatprep.subr.mxu0 0.0
        %2765 = vmatpush2.msra.mxu0 0.0
        %2766 = vmatprep.subr.mxu0 0.0
        %2767 = vmatpush2.msra.mxu0 0.0
        %2768 = vmatprep.mubr.f32.mxu0 0.0
        %2769 = vmatmul.mubr.f32.gmra.mxu0 %v2699
        %v2770 = vpop.f32.mrf.mxu0
        %v2771 = vadd.f32 %v2696, %v2770
        %v2772 = vpop.f32.mrf.mxu0
        %2773 = vmatprep.mubr.f32.mxu0 0.0
        %2774 = vmatmul.mubr.f32.gmra.mxu0 %v2702
        %v2775 = vpop.f32.mrf.mxu0
        %v2776 = vadd.f32 %v2696, %v2775
        %v2777 = vpop.f32.mrf.mxu0
        %2778 = vdwg.mxu0
        %s2779 = sld [smem:[#allocation14 + $0x4]]
        %s2780 = sld [smem:[#allocation14 + $0x5]]
        %v2781 = vand.u32 2147483647, %v2771
        %vm2782 = vcmp.le.f32.partialorder %v2781, 0.7853982
        %vm2783 = vcmp.lt.s32.totalorder %v2771, 0
        %v2784 = vand.u32 %v2771, 2139095040
        %v2785 = vshrl.u32 %v2784, 23
        %v2786 = vsub.s32 %v2785, 127
        %v2787 = vand.u32 2147483647, %v2771
        %v2788 = vand.u32 %v2787, 8388607
        %v2789 = vor.u32 %v2788, 8388608
        %v2790 = vsub.s32 0, %v2789
        %v2791 = vadd.s32 %v2786, 1
        %vm2792 = vcmp.gt.s32.totalorder %v2791, 0
        %v2793 = vsel %vm2792, %v2791, 0
        %v2794 = vshrl.u32 %v2793, 5
        %v2795 = vand.u32 %v2793, 31
        %v2796 = vsub.s32 32, %v2795
        %v2797 = vshrl.u32 683565275, %v2796
        %v2798 = vshll.u32 683565275, %v2795
        %v2799 = vshrl.u32 2475754826, %v2796
        %v2800 = vor.u32 %v2798, %v2799
        %v2801 = vshll.u32 2475754826, %v2795
        %v2802 = vshrl.u32 2131351028, %v2796
        %v2803 = vor.u32 %v2801, %v2802
        %v2804 = vshll.u32 2131351028, %v2795
        %v2805 = vshrl.u32 2102212464, %v2796
        %v2806 = vor.u32 %v2804, %v2805
        %v2807 = vshll.u32 2102212464, %v2795
        %v2808 = vshrl.u32 920167782, %v2796
        %v2809 = vor.u32 %v2807, %v2808
        %v2810 = vshll.u32 920167782, %v2795
        %v2811 = vshrl.u32 1326507024, %v2796
        %v2812 = vor.u32 %v2810, %v2811
        %vm2813 = vcmp.lt.s32.totalorder %v2794, 1
        %vm2814 = vcmp.lt.s32.totalorder %v2794, 2
        %vm2815 = vcmp.lt.s32.totalorder %v2794, 3
        %vm2816 = vcmp.lt.s32.totalorder %v2794, 4
        %v2817 = vsel %vm2813, %v2797, %v2800
        %v2818 = vsel %vm2816, %v2806, 2102212464
        %v2819 = vsel %vm2815, %v2803, %v2818
        %v2820 = vsel %vm2814, %v2817, %v2819
        %v2821 = vsel %vm2813, %v2800, %v2803
        %v2822 = vsel %vm2816, %v2809, 920167782
        %v2823 = vsel %vm2815, %v2806, %v2822
        %v2824 = vsel %vm2814, %v2821, %v2823
        %v2825 = vsel %vm2813, %v2803, %v2806
        %v2826 = vsel %vm2816, %v2812, 1326507024
        %v2827 = vsel %vm2815, %v2809, %v2826
        %v2828 = vsel %vm2814, %v2825, %v2827
        %v2829 = vshll.u32 %v2789, 8
        %v2830 = vmul.u32.u64.compose %v2829, %v2828
        %v2831 = vextract.low.u32 %v2830
        %v2832 = vextract.high.u32 %v2830
        %v2833 = vmul.u32.u64.compose %v2829, %v2824
        %v2834 = vextract.low.u32 %v2833
        %v2835 = vextract.high.u32 %v2833
        %v2836 = vmul.u32 %v2829, %v2820
        %v2837 = vadd.s32 %v2832, %v2834
        %vm2838 = vc.u32 %v2832, %v2834
        %v2839 = vadd.s32 %v2835, 1
        %v2840 = vsel %vm2838, %v2839, %v2835
        %v2841 = vadd.s32 %v2836, %v2840
        %v2842 = vadd.s32 %v2841, 536870912
        %v2843 = vshrl.u32 %v2842, 30
        %v2844 = vshll.u32 %v2843, 30
        %v2845 = vsub.s32 %v2841, %v2844
        %vm2846 = vcmp.lt.s32.totalorder %v2845, 0
        %v2847 = vsub.s32 0, %v2845
        %v2848 = vsel %vm2846, %v2847, %v2845
        %v2849 = vclz %v2848
        %v2850 = vsub.s32 %v2849, 2
        %vm2851 = vcmp.gt.s32.totalorder 0, %v2850
        %v2852 = vsel %vm2851, 0, %v2850
        %v2853 = vsub.s32 32, %v2852
        %v2854 = vshll.u32 %v2845, %v2852
        %v2855 = vshrl.u32 %v2837, %v2853
        %v2856 = vor.u32 %v2854, %v2855
        %v2857 = vsub.s32 4294967266, %v2852
        %v2858 = vadd.s32 %v2857, 127
        %v2859 = vshll.u32 %v2858, 23
        %v2860 = vor.u32 4788187, %v2859
        %v2861 = vand.u32 2147483647, %v2860
        %v2863 = vcvt.s32.f32 %v2856
        %v2864 = vmul.f32 %v2863, %v2861
        %v2865 = vxor.u32 %v2864, 2147483648
        %v2866 = vsel %vm2783, %v2865, %v2864
        %v2867 = vsub.s32 4, %v2843
        %v2868 = vsel %vm2783, %v2867, %v2843
        %v2869 = vsel %vm2782, %v2771, %v2866
        %v2870 = vsel %vm2782, 0, %v2868
        %v2871 = vcosq.f32.pop %v2869
        %v2872 = vsinq.f32.pop %v2869
        %vm2873 = vweird.f32 %v2771
        %v2874 = vadd.s32 %v2870, 3
        %v2875 = vand.u32 %v2874, 3
        %vm2876 = vcmp.lt.s32.totalorder %v2875, 2
        %vm2877 = vcmp.eq.s32.totalorder %v2875, 0
        %v2878 = vxor.u32 %v2872, 2147483648
        %v2879 = vsel %vm2877, %v2871, %v2878
        %vm2880 = vcmp.eq.s32.totalorder %v2875, 2
        %v2881 = vxor.u32 %v2871, 2147483648
        %v2882 = vsel %vm2880, %v2881, %v2872
        %v2883 = vsel %vm2876, %v2879, %v2882
        %v2884 = vsel %vm2873, nan, %v2883
        %v2885 = vand.u32 2147483647, %v2776
        %vm2886 = vcmp.le.f32.partialorder %v2885, 0.7853982
        %vm2887 = vcmp.lt.s32.totalorder %v2776, 0
        %v2888 = vand.u32 %v2776, 2139095040
        %v2889 = vshrl.u32 %v2888, 23
        %v2890 = vsub.s32 %v2889, 127
        %v2891 = vand.u32 2147483647, %v2776
        %v2892 = vand.u32 %v2891, 8388607
        %v2893 = vor.u32 %v2892, 8388608
        %v2894 = vsub.s32 0, %v2893
        %v2895 = vadd.s32 %v2890, 1
        %vm2896 = vcmp.gt.s32.totalorder %v2895, 0
        %v2897 = vsel %vm2896, %v2895, 0
        %v2898 = vshrl.u32 %v2897, 5
        %v2899 = vand.u32 %v2897, 31
        %v2900 = vsub.s32 32, %v2899
        %v2901 = vshrl.u32 683565275, %v2900
        %v2902 = vshll.u32 683565275, %v2899
        %v2903 = vshrl.u32 2475754826, %v2900
        %v2904 = vor.u32 %v2902, %v2903
        %v2905 = vshll.u32 2475754826, %v2899
        %v2906 = vshrl.u32 2131351028, %v2900
        %v2907 = vor.u32 %v2905, %v2906
        %v2908 = vshll.u32 2131351028, %v2899
        %v2909 = vshrl.u32 2102212464, %v2900
        %v2910 = vor.u32 %v2908, %v2909
        %v2911 = vshll.u32 2102212464, %v2899
        %v2912 = vshrl.u32 920167782, %v2900
        %v2913 = vor.u32 %v2911, %v2912
        %v2914 = vshll.u32 920167782, %v2899
        %v2915 = vshrl.u32 1326507024, %v2900
        %v2916 = vor.u32 %v2914, %v2915
        %vm2917 = vcmp.lt.s32.totalorder %v2898, 1
        %vm2918 = vcmp.lt.s32.totalorder %v2898, 2
        %vm2919 = vcmp.lt.s32.totalorder %v2898, 3
        %vm2920 = vcmp.lt.s32.totalorder %v2898, 4
        %v2921 = vsel %vm2917, %v2901, %v2904
        %v2922 = vsel %vm2920, %v2910, 2102212464
        %v2923 = vsel %vm2919, %v2907, %v2922
        %v2924 = vsel %vm2918, %v2921, %v2923
        %v2925 = vsel %vm2917, %v2904, %v2907
        %v2926 = vsel %vm2920, %v2913, 920167782
        %v2927 = vsel %vm2919, %v2910, %v2926
        %v2928 = vsel %vm2918, %v2925, %v2927
        %v2929 = vsel %vm2917, %v2907, %v2910
        %v2930 = vsel %vm2920, %v2916, 1326507024
        %v2931 = vsel %vm2919, %v2913, %v2930
        %v2932 = vsel %vm2918, %v2929, %v2931
        %v2933 = vshll.u32 %v2893, 8
        %v2934 = vmul.u32.u64.compose %v2933, %v2932
        %v2935 = vextract.low.u32 %v2934
        %v2936 = vextract.high.u32 %v2934
        %v2937 = vmul.u32.u64.compose %v2933, %v2928
        %v2938 = vextract.low.u32 %v2937
        %v2939 = vextract.high.u32 %v2937
        %v2940 = vmul.u32 %v2933, %v2924
        %v2941 = vadd.s32 %v2936, %v2938
        %vm2942 = vc.u32 %v2936, %v2938
        %v2943 = vadd.s32 %v2939, 1
        %v2944 = vsel %vm2942, %v2943, %v2939
        %v2945 = vadd.s32 %v2940, %v2944
        %v2946 = vadd.s32 %v2945, 536870912
        %v2947 = vshrl.u32 %v2946, 30
        %v2948 = vshll.u32 %v2947, 30
        %v2949 = vsub.s32 %v2945, %v2948
        %vm2950 = vcmp.lt.s32.totalorder %v2949, 0
        %v2951 = vsub.s32 0, %v2949
        %v2952 = vsel %vm2950, %v2951, %v2949
        %v2953 = vclz %v2952
        %v2954 = vsub.s32 %v2953, 2
        %vm2955 = vcmp.gt.s32.totalorder 0, %v2954
        %v2956 = vsel %vm2955, 0, %v2954
        %v2957 = vsub.s32 32, %v2956
        %v2958 = vshll.u32 %v2949, %v2956
        %v2959 = vshrl.u32 %v2941, %v2957
        %v2960 = vor.u32 %v2958, %v2959
        %v2961 = vsub.s32 4294967266, %v2956
        %v2962 = vadd.s32 %v2961, 127
        %v2963 = vshll.u32 %v2962, 23
        %v2964 = vor.u32 4788187, %v2963
        %v2965 = vand.u32 2147483647, %v2964
        %v2967 = vcvt.s32.f32 %v2960
        %v2968 = vmul.f32 %v2967, %v2965
        %v2969 = vxor.u32 %v2968, 2147483648
        %v2970 = vsel %vm2887, %v2969, %v2968
        %v2971 = vsub.s32 4, %v2947
        %v2972 = vsel %vm2887, %v2971, %v2947
        %v2973 = vsel %vm2886, %v2776, %v2970
        %v2974 = vsel %vm2886, 0, %v2972
        %v2975 = vcosq.f32.pop %v2973
        %v2976 = vsinq.f32.pop %v2973
        %vm2977 = vweird.f32 %v2776
        %v2978 = vadd.s32 %v2974, 3
        %v2979 = vand.u32 %v2978, 3
        %vm2980 = vcmp.lt.s32.totalorder %v2979, 2
        %vm2981 = vcmp.eq.s32.totalorder %v2979, 0
        %v2982 = vxor.u32 %v2976, 2147483648
        %v2983 = vsel %vm2981, %v2975, %v2982
        %vm2984 = vcmp.eq.s32.totalorder %v2979, 2
        %v2985 = vxor.u32 %v2975, 2147483648
        %v2986 = vsel %vm2984, %v2985, %v2976
        %v2987 = vsel %vm2980, %v2983, %v2986
        %v2988 = vsel %vm2977, nan, %v2987
        %v2989 = vstv %s2779
        %v2990 = vmul.f32 %v2989, %v2884
        %v2991 = vmul.f32 %v2989, %v2988
        %v2992 = vand.u32 2147483647, %v2771
        %vm2993 = vcmp.le.f32.partialorder %v2992, 0.7853982
        %vm2994 = vcmp.lt.s32.totalorder %v2771, 0
        %v2995 = vand.u32 %v2771, 2139095040
        %v2996 = vshrl.u32 %v2995, 23
        %v2997 = vsub.s32 %v2996, 127
        %v2998 = vand.u32 2147483647, %v2771
        %v2999 = vand.u32 %v2998, 8388607
        %v3000 = vor.u32 %v2999, 8388608
        %v3001 = vsub.s32 0, %v3000
        %v3002 = vadd.s32 %v2997, 1
        %vm3003 = vcmp.gt.s32.totalorder %v3002, 0
        %v3004 = vsel %vm3003, %v3002, 0
        %v3005 = vshrl.u32 %v3004, 5
        %v3006 = vand.u32 %v3004, 31
        %v3007 = vsub.s32 32, %v3006
        %v3008 = vshrl.u32 683565275, %v3007
        %v3009 = vshll.u32 683565275, %v3006
        %v3010 = vshrl.u32 2475754826, %v3007
        %v3011 = vor.u32 %v3009, %v3010
        %v3012 = vshll.u32 2475754826, %v3006
        %v3013 = vshrl.u32 2131351028, %v3007
        %v3014 = vor.u32 %v3012, %v3013
        %v3015 = vshll.u32 2131351028, %v3006
        %v3016 = vshrl.u32 2102212464, %v3007
        %v3017 = vor.u32 %v3015, %v3016
        %v3018 = vshll.u32 2102212464, %v3006
        %v3019 = vshrl.u32 920167782, %v3007
        %v3020 = vor.u32 %v3018, %v3019
        %v3021 = vshll.u32 920167782, %v3006
        %v3022 = vshrl.u32 1326507024, %v3007
        %v3023 = vor.u32 %v3021, %v3022
        %vm3024 = vcmp.lt.s32.totalorder %v3005, 1
        %vm3025 = vcmp.lt.s32.totalorder %v3005, 2
        %vm3026 = vcmp.lt.s32.totalorder %v3005, 3
        %vm3027 = vcmp.lt.s32.totalorder %v3005, 4
        %v3028 = vsel %vm3024, %v3008, %v3011
        %v3029 = vsel %vm3027, %v3017, 2102212464
        %v3030 = vsel %vm3026, %v3014, %v3029
        %v3031 = vsel %vm3025, %v3028, %v3030
        %v3032 = vsel %vm3024, %v3011, %v3014
        %v3033 = vsel %vm3027, %v3020, 920167782
        %v3034 = vsel %vm3026, %v3017, %v3033
        %v3035 = vsel %vm3025, %v3032, %v3034
        %v3036 = vsel %vm3024, %v3014, %v3017
        %v3037 = vsel %vm3027, %v3023, 1326507024
        %v3038 = vsel %vm3026, %v3020, %v3037
        %v3039 = vsel %vm3025, %v3036, %v3038
        %v3040 = vshll.u32 %v3000, 8
        %v3041 = vmul.u32.u64.compose %v3040, %v3039
        %v3042 = vextract.low.u32 %v3041
        %v3043 = vextract.high.u32 %v3041
        %v3044 = vmul.u32.u64.compose %v3040, %v3035
        %v3045 = vextract.low.u32 %v3044
        %v3046 = vextract.high.u32 %v3044
        %v3047 = vmul.u32 %v3040, %v3031
        %v3048 = vadd.s32 %v3043, %v3045
        %vm3049 = vc.u32 %v3043, %v3045
        %v3050 = vadd.s32 %v3046, 1
        %v3051 = vsel %vm3049, %v3050, %v3046
        %v3052 = vadd.s32 %v3047, %v3051
        %v3053 = vadd.s32 %v3052, 536870912
        %v3054 = vshrl.u32 %v3053, 30
        %v3055 = vshll.u32 %v3054, 30
        %v3056 = vsub.s32 %v3052, %v3055
        %vm3057 = vcmp.lt.s32.totalorder %v3056, 0
        %v3058 = vsub.s32 0, %v3056
        %v3059 = vsel %vm3057, %v3058, %v3056
        %v3060 = vclz %v3059
        %v3061 = vsub.s32 %v3060, 2
        %vm3062 = vcmp.gt.s32.totalorder 0, %v3061
        %v3063 = vsel %vm3062, 0, %v3061
        %v3064 = vsub.s32 32, %v3063
        %v3065 = vshll.u32 %v3056, %v3063
        %v3066 = vshrl.u32 %v3048, %v3064
        %v3067 = vor.u32 %v3065, %v3066
        %v3068 = vsub.s32 4294967266, %v3063
        %v3069 = vadd.s32 %v3068, 127
        %v3070 = vshll.u32 %v3069, 23
        %v3071 = vor.u32 4788187, %v3070
        %v3072 = vand.u32 2147483647, %v3071
        %v3074 = vcvt.s32.f32 %v3067
        %v3075 = vmul.f32 %v3074, %v3072
        %v3076 = vxor.u32 %v3075, 2147483648
        %v3077 = vsel %vm2994, %v3076, %v3075
        %v3078 = vsub.s32 4, %v3054
        %v3079 = vsel %vm2994, %v3078, %v3054
        %v3080 = vsel %vm2993, %v2771, %v3077
        %v3081 = vsel %vm2993, 0, %v3079
        %v3082 = vcosq.f32.pop %v3080
        %v3083 = vsinq.f32.pop %v3080
        %vm3084 = vweird.f32 %v2771
        %v3085 = vand.u32 %v3081, 3
        %vm3086 = vcmp.lt.s32.totalorder %v3085, 2
        %vm3087 = vcmp.eq.s32.totalorder %v3085, 0
        %v3088 = vxor.u32 %v3083, 2147483648
        %v3089 = vsel %vm3087, %v3082, %v3088
        %vm3090 = vcmp.eq.s32.totalorder %v3085, 2
        %v3091 = vxor.u32 %v3082, 2147483648
        %v3092 = vsel %vm3090, %v3091, %v3083
        %v3093 = vsel %vm3086, %v3089, %v3092
        %v3094 = vsel %vm3084, nan, %v3093
        %v3095 = vand.u32 2147483647, %v2776
        %vm3096 = vcmp.le.f32.partialorder %v3095, 0.7853982
        %vm3097 = vcmp.lt.s32.totalorder %v2776, 0
        %v3098 = vand.u32 %v2776, 2139095040
        %v3099 = vshrl.u32 %v3098, 23
        %v3100 = vsub.s32 %v3099, 127
        %v3101 = vand.u32 2147483647, %v2776
        %v3102 = vand.u32 %v3101, 8388607
        %v3103 = vor.u32 %v3102, 8388608
        %v3104 = vsub.s32 0, %v3103
        %v3105 = vadd.s32 %v3100, 1
        %vm3106 = vcmp.gt.s32.totalorder %v3105, 0
        %v3107 = vsel %vm3106, %v3105, 0
        %v3108 = vshrl.u32 %v3107, 5
        %v3109 = vand.u32 %v3107, 31
        %v3110 = vsub.s32 32, %v3109
        %v3111 = vshrl.u32 683565275, %v3110
        %v3112 = vshll.u32 683565275, %v3109
        %v3113 = vshrl.u32 2475754826, %v3110
        %v3114 = vor.u32 %v3112, %v3113
        %v3115 = vshll.u32 2475754826, %v3109
        %v3116 = vshrl.u32 2131351028, %v3110
        %v3117 = vor.u32 %v3115, %v3116
        %v3118 = vshll.u32 2131351028, %v3109
        %v3119 = vshrl.u32 2102212464, %v3110
        %v3120 = vor.u32 %v3118, %v3119
        %v3121 = vshll.u32 2102212464, %v3109
        %v3122 = vshrl.u32 920167782, %v3110
        %v3123 = vor.u32 %v3121, %v3122
        %v3124 = vshll.u32 920167782, %v3109
        %v3125 = vshrl.u32 1326507024, %v3110
        %v3126 = vor.u32 %v3124, %v3125
        %vm3127 = vcmp.lt.s32.totalorder %v3108, 1
        %vm3128 = vcmp.lt.s32.totalorder %v3108, 2
        %vm3129 = vcmp.lt.s32.totalorder %v3108, 3
        %vm3130 = vcmp.lt.s32.totalorder %v3108, 4
        %v3131 = vsel %vm3127, %v3111, %v3114
        %v3132 = vsel %vm3130, %v3120, 2102212464
        %v3133 = vsel %vm3129, %v3117, %v3132
        %v3134 = vsel %vm3128, %v3131, %v3133
        %v3135 = vsel %vm3127, %v3114, %v3117
        %v3136 = vsel %vm3130, %v3123, 920167782
        %v3137 = vsel %vm3129, %v3120, %v3136
        %v3138 = vsel %vm3128, %v3135, %v3137
        %v3139 = vsel %vm3127, %v3117, %v3120
        %v3140 = vsel %vm3130, %v3126, 1326507024
        %v3141 = vsel %vm3129, %v3123, %v3140
        %v3142 = vsel %vm3128, %v3139, %v3141
        %v3143 = vshll.u32 %v3103, 8
        %v3144 = vmul.u32.u64.compose %v3143, %v3142
        %v3145 = vextract.low.u32 %v3144
        %v3146 = vextract.high.u32 %v3144
        %v3147 = vmul.u32.u64.compose %v3143, %v3138
        %v3148 = vextract.low.u32 %v3147
        %v3149 = vextract.high.u32 %v3147
        %v3150 = vmul.u32 %v3143, %v3134
        %v3151 = vadd.s32 %v3146, %v3148
        %vm3152 = vc.u32 %v3146, %v3148
        %v3153 = vadd.s32 %v3149, 1
        %v3154 = vsel %vm3152, %v3153, %v3149
        %v3155 = vadd.s32 %v3150, %v3154
        %v3156 = vadd.s32 %v3155, 536870912
        %v3157 = vshrl.u32 %v3156, 30
        %v3158 = vshll.u32 %v3157, 30
        %v3159 = vsub.s32 %v3155, %v3158
        %vm3160 = vcmp.lt.s32.totalorder %v3159, 0
        %v3161 = vsub.s32 0, %v3159
        %v3162 = vsel %vm3160, %v3161, %v3159
        %v3163 = vclz %v3162
        %v3164 = vsub.s32 %v3163, 2
        %vm3165 = vcmp.gt.s32.totalorder 0, %v3164
        %v3166 = vsel %vm3165, 0, %v3164
        %v3167 = vsub.s32 32, %v3166
        %v3168 = vshll.u32 %v3159, %v3166
        %v3169 = vshrl.u32 %v3151, %v3167
        %v3170 = vor.u32 %v3168, %v3169
        %v3171 = vsub.s32 4294967266, %v3166
        %v3172 = vadd.s32 %v3171, 127
        %v3173 = vshll.u32 %v3172, 23
        %v3174 = vor.u32 4788187, %v3173
        %v3175 = vand.u32 2147483647, %v3174
        %v3177 = vcvt.s32.f32 %v3170
        %v3178 = vmul.f32 %v3177, %v3175
        %v3179 = vxor.u32 %v3178, 2147483648
        %v3180 = vsel %vm3097, %v3179, %v3178
        %v3181 = vsub.s32 4, %v3157
        %v3182 = vsel %vm3097, %v3181, %v3157
        %v3183 = vsel %vm3096, %v2776, %v3180
        %v3184 = vsel %vm3096, 0, %v3182
        %v3185 = vcosq.f32.pop %v3183
        %v3186 = vsinq.f32.pop %v3183
        %vm3187 = vweird.f32 %v2776
        %v3188 = vand.u32 %v3184, 3
        %vm3189 = vcmp.lt.s32.totalorder %v3188, 2
        %vm3190 = vcmp.eq.s32.totalorder %v3188, 0
        %v3191 = vxor.u32 %v3186, 2147483648
        %v3192 = vsel %vm3190, %v3185, %v3191
        %vm3193 = vcmp.eq.s32.totalorder %v3188, 2
        %v3194 = vxor.u32 %v3185, 2147483648
        %v3195 = vsel %vm3193, %v3194, %v3186
        %v3196 = vsel %vm3189, %v3192, %v3195
        %v3197 = vsel %vm3187, nan, %v3196
        %v3198 = vstv %s2780
        %v3199 = vmul.f32 %v3198, %v3094
        %v3200 = vmul.f32 %v3198, %v3197
        %v3201 = vadd.f32 %v2990, %v3199
        %v3202 = vadd.f32 %v2991, %v3200
        %v3203 = vand.u32 2147483647, %v2771
        %v3204 = vand.u32 2147483647, %v2776
        %v3205 = vsub.f32 0.0, %v3203
        %v3206 = vsub.f32 0.0, %v3204
        %v3207 = vmul.f32 %v3205, 1.442695
        %v3208 = vpow.pop %v3207
        %v3209 = vmul.f32 %v3206, 1.442695
        %v3210 = vpow.pop %v3209
        %v3211 = vadd.f32 %v3208, 1.0
        %v3212 = vlog2.pop %v3211
        %v3213 = vmul.f32 %v3212, 0.6931472
        %v3214 = vmul.f32 -0.5, %v3208
        %v3215 = vadd.f32 %v3214, 1.0
        %v3216 = vmul.f32 %v3215, %v3208
        %v3217 = vand.u32 2147483647, %v3208
        %vm3218 = vcmp.lt.f32.partialorder %v3217, 0.0004427343
        %v3219 = vsel %vm3218, %v3216, %v3213
        %v3220 = vadd.f32 %v3210, 1.0
        %v3221 = vlog2.pop %v3220
        %v3222 = vmul.f32 %v3221, 0.6931472
        %v3223 = vmul.f32 -0.5, %v3210
        %v3224 = vadd.f32 %v3223, 1.0
        %v3225 = vmul.f32 %v3224, %v3210
        %v3226 = vand.u32 2147483647, %v3210
        %vm3227 = vcmp.lt.f32.partialorder %v3226, 0.0004427343
        %v3228 = vsel %vm3227, %v3225, %v3222
        %v3229 = vmax.f32 %v2771, 0.0
        %v3230 = vmax.f32 %v2776, 0.0
        %v3231 = vadd.f32 %v3219, %v3229
        %v3232 = vadd.f32 %v3228, %v3230
        %s3233 = sld [smem:[#allocation14 + $0x6]]
        %s3234 = sld [smem:[#allocation14 + $0x7]]
        %v3235 = vand.u32 2147483647, %v3231
        %vm3236 = vcmp.le.f32.partialorder %v3235, 0.7853982
        %vm3237 = vcmp.lt.s32.totalorder %v3231, 0
        %v3238 = vand.u32 %v3231, 2139095040
        %v3239 = vshrl.u32 %v3238, 23
        %v3240 = vsub.s32 %v3239, 127
        %v3241 = vand.u32 2147483647, %v3231
        %v3242 = vand.u32 %v3241, 8388607
        %v3243 = vor.u32 %v3242, 8388608
        %v3244 = vsub.s32 0, %v3243
        %v3245 = vadd.s32 %v3240, 1
        %vm3246 = vcmp.gt.s32.totalorder %v3245, 0
        %v3247 = vsel %vm3246, %v3245, 0
        %v3248 = vshrl.u32 %v3247, 5
        %v3249 = vand.u32 %v3247, 31
        %v3250 = vsub.s32 32, %v3249
        %v3251 = vshrl.u32 683565275, %v3250
        %v3252 = vshll.u32 683565275, %v3249
        %v3253 = vshrl.u32 2475754826, %v3250
        %v3254 = vor.u32 %v3252, %v3253
        %v3255 = vshll.u32 2475754826, %v3249
        %v3256 = vshrl.u32 2131351028, %v3250
        %v3257 = vor.u32 %v3255, %v3256
        %v3258 = vshll.u32 2131351028, %v3249
        %v3259 = vshrl.u32 2102212464, %v3250
        %v3260 = vor.u32 %v3258, %v3259
        %v3261 = vshll.u32 2102212464, %v3249
        %v3262 = vshrl.u32 920167782, %v3250
        %v3263 = vor.u32 %v3261, %v3262
        %v3264 = vshll.u32 920167782, %v3249
        %v3265 = vshrl.u32 1326507024, %v3250
        %v3266 = vor.u32 %v3264, %v3265
        %vm3267 = vcmp.lt.s32.totalorder %v3248, 1
        %vm3268 = vcmp.lt.s32.totalorder %v3248, 2
        %vm3269 = vcmp.lt.s32.totalorder %v3248, 3
        %vm3270 = vcmp.lt.s32.totalorder %v3248, 4
        %v3271 = vsel %vm3267, %v3251, %v3254
        %v3272 = vsel %vm3270, %v3260, 2102212464
        %v3273 = vsel %vm3269, %v3257, %v3272
        %v3274 = vsel %vm3268, %v3271, %v3273
        %v3275 = vsel %vm3267, %v3254, %v3257
        %v3276 = vsel %vm3270, %v3263, 920167782
        %v3277 = vsel %vm3269, %v3260, %v3276
        %v3278 = vsel %vm3268, %v3275, %v3277
        %v3279 = vsel %vm3267, %v3257, %v3260
        %v3280 = vsel %vm3270, %v3266, 1326507024
        %v3281 = vsel %vm3269, %v3263, %v3280
        %v3282 = vsel %vm3268, %v3279, %v3281
        %v3283 = vshll.u32 %v3243, 8
        %v3284 = vmul.u32.u64.compose %v3283, %v3282
        %v3285 = vextract.low.u32 %v3284
        %v3286 = vextract.high.u32 %v3284
        %v3287 = vmul.u32.u64.compose %v3283, %v3278
        %v3288 = vextract.low.u32 %v3287
        %v3289 = vextract.high.u32 %v3287
        %v3290 = vmul.u32 %v3283, %v3274
        %v3291 = vadd.s32 %v3286, %v3288
        %vm3292 = vc.u32 %v3286, %v3288
        %v3293 = vadd.s32 %v3289, 1
        %v3294 = vsel %vm3292, %v3293, %v3289
        %v3295 = vadd.s32 %v3290, %v3294
        %v3296 = vadd.s32 %v3295, 536870912
        %v3297 = vshrl.u32 %v3296, 30
        %v3298 = vshll.u32 %v3297, 30
        %v3299 = vsub.s32 %v3295, %v3298
        %vm3300 = vcmp.lt.s32.totalorder %v3299, 0
        %v3301 = vsub.s32 0, %v3299
        %v3302 = vsel %vm3300, %v3301, %v3299
        %v3303 = vclz %v3302
        %v3304 = vsub.s32 %v3303, 2
        %vm3305 = vcmp.gt.s32.totalorder 0, %v3304
        %v3306 = vsel %vm3305, 0, %v3304
        %v3307 = vsub.s32 32, %v3306
        %v3308 = vshll.u32 %v3299, %v3306
        %v3309 = vshrl.u32 %v3291, %v3307
        %v3310 = vor.u32 %v3308, %v3309
        %v3311 = vsub.s32 4294967266, %v3306
        %v3312 = vadd.s32 %v3311, 127
        %v3313 = vshll.u32 %v3312, 23
        %v3314 = vor.u32 4788187, %v3313
        %v3315 = vand.u32 2147483647, %v3314
        %v3317 = vcvt.s32.f32 %v3310
        %v3318 = vmul.f32 %v3317, %v3315
        %v3319 = vxor.u32 %v3318, 2147483648
        %v3320 = vsel %vm3237, %v3319, %v3318
        %v3321 = vsub.s32 4, %v3297
        %v3322 = vsel %vm3237, %v3321, %v3297
        %v3323 = vsel %vm3236, %v3231, %v3320
        %v3324 = vsel %vm3236, 0, %v3322
        %v3325 = vcosq.f32.pop %v3323
        %v3326 = vsinq.f32.pop %v3323
        %vm3327 = vweird.f32 %v3231
        %v3328 = vadd.s32 %v3324, 3
        %v3329 = vand.u32 %v3328, 3
        %vm3330 = vcmp.lt.s32.totalorder %v3329, 2
        %vm3331 = vcmp.eq.s32.totalorder %v3329, 0
        %v3332 = vxor.u32 %v3326, 2147483648
        %v3333 = vsel %vm3331, %v3325, %v3332
        %vm3334 = vcmp.eq.s32.totalorder %v3329, 2
        %v3335 = vxor.u32 %v3325, 2147483648
        %v3336 = vsel %vm3334, %v3335, %v3326
        %v3337 = vsel %vm3330, %v3333, %v3336
        %v3338 = vsel %vm3327, nan, %v3337
        %v3339 = vand.u32 2147483647, %v3232
        %vm3340 = vcmp.le.f32.partialorder %v3339, 0.7853982
        %vm3341 = vcmp.lt.s32.totalorder %v3232, 0
        %v3342 = vand.u32 %v3232, 2139095040
        %v3343 = vshrl.u32 %v3342, 23
        %v3344 = vsub.s32 %v3343, 127
        %v3345 = vand.u32 2147483647, %v3232
        %v3346 = vand.u32 %v3345, 8388607
        %v3347 = vor.u32 %v3346, 8388608
        %v3348 = vsub.s32 0, %v3347
        %v3349 = vadd.s32 %v3344, 1
        %vm3350 = vcmp.gt.s32.totalorder %v3349, 0
        %v3351 = vsel %vm3350, %v3349, 0
        %v3352 = vshrl.u32 %v3351, 5
        %v3353 = vand.u32 %v3351, 31
        %v3354 = vsub.s32 32, %v3353
        %v3355 = vshrl.u32 683565275, %v3354
        %v3356 = vshll.u32 683565275, %v3353
        %v3357 = vshrl.u32 2475754826, %v3354
        %v3358 = vor.u32 %v3356, %v3357
        %v3359 = vshll.u32 2475754826, %v3353
        %v3360 = vshrl.u32 2131351028, %v3354
        %v3361 = vor.u32 %v3359, %v3360
        %v3362 = vshll.u32 2131351028, %v3353
        %v3363 = vshrl.u32 2102212464, %v3354
        %v3364 = vor.u32 %v3362, %v3363
        %v3365 = vshll.u32 2102212464, %v3353
        %v3366 = vshrl.u32 920167782, %v3354
        %v3367 = vor.u32 %v3365, %v3366
        %v3368 = vshll.u32 920167782, %v3353
        %v3369 = vshrl.u32 1326507024, %v3354
        %v3370 = vor.u32 %v3368, %v3369
        %vm3371 = vcmp.lt.s32.totalorder %v3352, 1
        %vm3372 = vcmp.lt.s32.totalorder %v3352, 2
        %vm3373 = vcmp.lt.s32.totalorder %v3352, 3
        %vm3374 = vcmp.lt.s32.totalorder %v3352, 4
        %v3375 = vsel %vm3371, %v3355, %v3358
        %v3376 = vsel %vm3374, %v3364, 2102212464
        %v3377 = vsel %vm3373, %v3361, %v3376
        %v3378 = vsel %vm3372, %v3375, %v3377
        %v3379 = vsel %vm3371, %v3358, %v3361
        %v3380 = vsel %vm3374, %v3367, 920167782
        %v3381 = vsel %vm3373, %v3364, %v3380
        %v3382 = vsel %vm3372, %v3379, %v3381
        %v3383 = vsel %vm3371, %v3361, %v3364
        %v3384 = vsel %vm3374, %v3370, 1326507024
        %v3385 = vsel %vm3373, %v3367, %v3384
        %v3386 = vsel %vm3372, %v3383, %v3385
        %v3387 = vshll.u32 %v3347, 8
        %v3388 = vmul.u32.u64.compose %v3387, %v3386
        %v3389 = vextract.low.u32 %v3388
        %v3390 = vextract.high.u32 %v3388
        %v3391 = vmul.u32.u64.compose %v3387, %v3382
        %v3392 = vextract.low.u32 %v3391
        %v3393 = vextract.high.u32 %v3391
        %v3394 = vmul.u32 %v3387, %v3378
        %v3395 = vadd.s32 %v3390, %v3392
        %vm3396 = vc.u32 %v3390, %v3392
        %v3397 = vadd.s32 %v3393, 1
        %v3398 = vsel %vm3396, %v3397, %v3393
        %v3399 = vadd.s32 %v3394, %v3398
        %v3400 = vadd.s32 %v3399, 536870912
        %v3401 = vshrl.u32 %v3400, 30
        %v3402 = vshll.u32 %v3401, 30
        %v3403 = vsub.s32 %v3399, %v3402
        %vm3404 = vcmp.lt.s32.totalorder %v3403, 0
        %v3405 = vsub.s32 0, %v3403
        %v3406 = vsel %vm3404, %v3405, %v3403
        %v3407 = vclz %v3406
        %v3408 = vsub.s32 %v3407, 2
        %vm3409 = vcmp.gt.s32.totalorder 0, %v3408
        %v3410 = vsel %vm3409, 0, %v3408
        %v3411 = vsub.s32 32, %v3410
        %v3412 = vshll.u32 %v3403, %v3410
        %v3413 = vshrl.u32 %v3395, %v3411
        %v3414 = vor.u32 %v3412, %v3413
        %v3415 = vsub.s32 4294967266, %v3410
        %v3416 = vadd.s32 %v3415, 127
        %v3417 = vshll.u32 %v3416, 23
        %v3418 = vor.u32 4788187, %v3417
        %v3419 = vand.u32 2147483647, %v3418
        %v3421 = vcvt.s32.f32 %v3414
        %v3422 = vmul.f32 %v3421, %v3419
        %v3423 = vxor.u32 %v3422, 2147483648
        %v3424 = vsel %vm3341, %v3423, %v3422
        %v3425 = vsub.s32 4, %v3401
        %v3426 = vsel %vm3341, %v3425, %v3401
        %v3427 = vsel %vm3340, %v3232, %v3424
        %v3428 = vsel %vm3340, 0, %v3426
        %v3429 = vcosq.f32.pop %v3427
        %v3430 = vsinq.f32.pop %v3427
        %vm3431 = vweird.f32 %v3232
        %v3432 = vadd.s32 %v3428, 3
        %v3433 = vand.u32 %v3432, 3
        %vm3434 = vcmp.lt.s32.totalorder %v3433, 2
        %vm3435 = vcmp.eq.s32.totalorder %v3433, 0
        %v3436 = vxor.u32 %v3430, 2147483648
        %v3437 = vsel %vm3435, %v3429, %v3436
        %vm3438 = vcmp.eq.s32.totalorder %v3433, 2
        %v3439 = vxor.u32 %v3429, 2147483648
        %v3440 = vsel %vm3438, %v3439, %v3430
        %v3441 = vsel %vm3434, %v3437, %v3440
        %v3442 = vsel %vm3431, nan, %v3441
        %v3443 = vstv %s3233
        %v3444 = vmul.f32 %v3443, %v3338
        %v3445 = vmul.f32 %v3443, %v3442
        %v3446 = vand.u32 2147483647, %v3231
        %vm3447 = vcmp.le.f32.partialorder %v3446, 0.7853982
        %vm3448 = vcmp.lt.s32.totalorder %v3231, 0
        %v3449 = vand.u32 %v3231, 2139095040
        %v3450 = vshrl.u32 %v3449, 23
        %v3451 = vsub.s32 %v3450, 127
        %v3452 = vand.u32 2147483647, %v3231
        %v3453 = vand.u32 %v3452, 8388607
        %v3454 = vor.u32 %v3453, 8388608
        %v3455 = vsub.s32 0, %v3454
        %v3456 = vadd.s32 %v3451, 1
        %vm3457 = vcmp.gt.s32.totalorder %v3456, 0
        %v3458 = vsel %vm3457, %v3456, 0
        %v3459 = vshrl.u32 %v3458, 5
        %v3460 = vand.u32 %v3458, 31
        %v3461 = vsub.s32 32, %v3460
        %v3462 = vshrl.u32 683565275, %v3461
        %v3463 = vshll.u32 683565275, %v3460
        %v3464 = vshrl.u32 2475754826, %v3461
        %v3465 = vor.u32 %v3463, %v3464
        %v3466 = vshll.u32 2475754826, %v3460
        %v3467 = vshrl.u32 2131351028, %v3461
        %v3468 = vor.u32 %v3466, %v3467
        %v3469 = vshll.u32 2131351028, %v3460
        %v3470 = vshrl.u32 2102212464, %v3461
        %v3471 = vor.u32 %v3469, %v3470
        %v3472 = vshll.u32 2102212464, %v3460
        %v3473 = vshrl.u32 920167782, %v3461
        %v3474 = vor.u32 %v3472, %v3473
        %v3475 = vshll.u32 920167782, %v3460
        %v3476 = vshrl.u32 1326507024, %v3461
        %v3477 = vor.u32 %v3475, %v3476
        %vm3478 = vcmp.lt.s32.totalorder %v3459, 1
        %vm3479 = vcmp.lt.s32.totalorder %v3459, 2
        %vm3480 = vcmp.lt.s32.totalorder %v3459, 3
        %vm3481 = vcmp.lt.s32.totalorder %v3459, 4
        %v3482 = vsel %vm3478, %v3462, %v3465
        %v3483 = vsel %vm3481, %v3471, 2102212464
        %v3484 = vsel %vm3480, %v3468, %v3483
        %v3485 = vsel %vm3479, %v3482, %v3484
        %v3486 = vsel %vm3478, %v3465, %v3468
        %v3487 = vsel %vm3481, %v3474, 920167782
        %v3488 = vsel %vm3480, %v3471, %v3487
        %v3489 = vsel %vm3479, %v3486, %v3488
        %v3490 = vsel %vm3478, %v3468, %v3471
        %v3491 = vsel %vm3481, %v3477, 1326507024
        %v3492 = vsel %vm3480, %v3474, %v3491
        %v3493 = vsel %vm3479, %v3490, %v3492
        %v3494 = vshll.u32 %v3454, 8
        %v3495 = vmul.u32.u64.compose %v3494, %v3493
        %v3496 = vextract.low.u32 %v3495
        %v3497 = vextract.high.u32 %v3495
        %v3498 = vmul.u32.u64.compose %v3494, %v3489
        %v3499 = vextract.low.u32 %v3498
        %v3500 = vextract.high.u32 %v3498
        %v3501 = vmul.u32 %v3494, %v3485
        %v3502 = vadd.s32 %v3497, %v3499
        %vm3503 = vc.u32 %v3497, %v3499
        %v3504 = vadd.s32 %v3500, 1
        %v3505 = vsel %vm3503, %v3504, %v3500
        %v3506 = vadd.s32 %v3501, %v3505
        %v3507 = vadd.s32 %v3506, 536870912
        %v3508 = vshrl.u32 %v3507, 30
        %v3509 = vshll.u32 %v3508, 30
        %v3510 = vsub.s32 %v3506, %v3509
        %vm3511 = vcmp.lt.s32.totalorder %v3510, 0
        %v3512 = vsub.s32 0, %v3510
        %v3513 = vsel %vm3511, %v3512, %v3510
        %v3514 = vclz %v3513
        %v3515 = vsub.s32 %v3514, 2
        %vm3516 = vcmp.gt.s32.totalorder 0, %v3515
        %v3517 = vsel %vm3516, 0, %v3515
        %v3518 = vsub.s32 32, %v3517
        %v3519 = vshll.u32 %v3510, %v3517
        %v3520 = vshrl.u32 %v3502, %v3518
        %v3521 = vor.u32 %v3519, %v3520
        %v3522 = vsub.s32 4294967266, %v3517
        %v3523 = vadd.s32 %v3522, 127
        %v3524 = vshll.u32 %v3523, 23
        %v3525 = vor.u32 4788187, %v3524
        %v3526 = vand.u32 2147483647, %v3525
        %v3528 = vcvt.s32.f32 %v3521
        %v3529 = vmul.f32 %v3528, %v3526
        %v3530 = vxor.u32 %v3529, 2147483648
        %v3531 = vsel %vm3448, %v3530, %v3529
        %v3532 = vsub.s32 4, %v3508
        %v3533 = vsel %vm3448, %v3532, %v3508
        %v3534 = vsel %vm3447, %v3231, %v3531
        %v3535 = vsel %vm3447, 0, %v3533
        %v3536 = vcosq.f32.pop %v3534
        %v3537 = vsinq.f32.pop %v3534
        %vm3538 = vweird.f32 %v3231
        %v3539 = vand.u32 %v3535, 3
        %vm3540 = vcmp.lt.s32.totalorder %v3539, 2
        %vm3541 = vcmp.eq.s32.totalorder %v3539, 0
        %v3542 = vxor.u32 %v3537, 2147483648
        %v3543 = vsel %vm3541, %v3536, %v3542
        %vm3544 = vcmp.eq.s32.totalorder %v3539, 2
        %v3545 = vxor.u32 %v3536, 2147483648
        %v3546 = vsel %vm3544, %v3545, %v3537
        %v3547 = vsel %vm3540, %v3543, %v3546
        %v3548 = vsel %vm3538, nan, %v3547
        %v3549 = vand.u32 2147483647, %v3232
        %vm3550 = vcmp.le.f32.partialorder %v3549, 0.7853982
        %vm3551 = vcmp.lt.s32.totalorder %v3232, 0
        %v3552 = vand.u32 %v3232, 2139095040
        %v3553 = vshrl.u32 %v3552, 23
        %v3554 = vsub.s32 %v3553, 127
        %v3555 = vand.u32 2147483647, %v3232
        %v3556 = vand.u32 %v3555, 8388607
        %v3557 = vor.u32 %v3556, 8388608
        %v3558 = vsub.s32 0, %v3557
        %v3559 = vadd.s32 %v3554, 1
        %vm3560 = vcmp.gt.s32.totalorder %v3559, 0
        %v3561 = vsel %vm3560, %v3559, 0
        %v3562 = vshrl.u32 %v3561, 5
        %v3563 = vand.u32 %v3561, 31
        %v3564 = vsub.s32 32, %v3563
        %v3565 = vshrl.u32 683565275, %v3564
        %v3566 = vshll.u32 683565275, %v3563
        %v3567 = vshrl.u32 2475754826, %v3564
        %v3568 = vor.u32 %v3566, %v3567
        %v3569 = vshll.u32 2475754826, %v3563
        %v3570 = vshrl.u32 2131351028, %v3564
        %v3571 = vor.u32 %v3569, %v3570
        %v3572 = vshll.u32 2131351028, %v3563
        %v3573 = vshrl.u32 2102212464, %v3564
        %v3574 = vor.u32 %v3572, %v3573
        %v3575 = vshll.u32 2102212464, %v3563
        %v3576 = vshrl.u32 920167782, %v3564
        %v3577 = vor.u32 %v3575, %v3576
        %v3578 = vshll.u32 920167782, %v3563
        %v3579 = vshrl.u32 1326507024, %v3564
        %v3580 = vor.u32 %v3578, %v3579
        %vm3581 = vcmp.lt.s32.totalorder %v3562, 1
        %vm3582 = vcmp.lt.s32.totalorder %v3562, 2
        %vm3583 = vcmp.lt.s32.totalorder %v3562, 3
        %vm3584 = vcmp.lt.s32.totalorder %v3562, 4
        %v3585 = vsel %vm3581, %v3565, %v3568
        %v3586 = vsel %vm3584, %v3574, 2102212464
        %v3587 = vsel %vm3583, %v3571, %v3586
        %v3588 = vsel %vm3582, %v3585, %v3587
        %v3589 = vsel %vm3581, %v3568, %v3571
        %v3590 = vsel %vm3584, %v3577, 920167782
        %v3591 = vsel %vm3583, %v3574, %v3590
        %v3592 = vsel %vm3582, %v3589, %v3591
        %v3593 = vsel %vm3581, %v3571, %v3574
        %v3594 = vsel %vm3584, %v3580, 1326507024
        %v3595 = vsel %vm3583, %v3577, %v3594
        %v3596 = vsel %vm3582, %v3593, %v3595
        %v3597 = vshll.u32 %v3557, 8
        %v3598 = vmul.u32.u64.compose %v3597, %v3596
        %v3599 = vextract.low.u32 %v3598
        %v3600 = vextract.high.u32 %v3598
        %v3601 = vmul.u32.u64.compose %v3597, %v3592
        %v3602 = vextract.low.u32 %v3601
        %v3603 = vextract.high.u32 %v3601
        %v3604 = vmul.u32 %v3597, %v3588
        %v3605 = vadd.s32 %v3600, %v3602
        %vm3606 = vc.u32 %v3600, %v3602
        %v3607 = vadd.s32 %v3603, 1
        %v3608 = vsel %vm3606, %v3607, %v3603
        %v3609 = vadd.s32 %v3604, %v3608
        %v3610 = vadd.s32 %v3609, 536870912
        %v3611 = vshrl.u32 %v3610, 30
        %v3612 = vshll.u32 %v3611, 30
        %v3613 = vsub.s32 %v3609, %v3612
        %vm3614 = vcmp.lt.s32.totalorder %v3613, 0
        %v3615 = vsub.s32 0, %v3613
        %v3616 = vsel %vm3614, %v3615, %v3613
        %v3617 = vclz %v3616
        %v3618 = vsub.s32 %v3617, 2
        %vm3619 = vcmp.gt.s32.totalorder 0, %v3618
        %v3620 = vsel %vm3619, 0, %v3618
        %v3621 = vsub.s32 32, %v3620
        %v3622 = vshll.u32 %v3613, %v3620
        %v3623 = vshrl.u32 %v3605, %v3621
        %v3624 = vor.u32 %v3622, %v3623
        %v3625 = vsub.s32 4294967266, %v3620
        %v3626 = vadd.s32 %v3625, 127
        %v3627 = vshll.u32 %v3626, 23
        %v3628 = vor.u32 4788187, %v3627
        %v3629 = vand.u32 2147483647, %v3628
        %v3631 = vcvt.s32.f32 %v3624
        %v3632 = vmul.f32 %v3631, %v3629
        %v3633 = vxor.u32 %v3632, 2147483648
        %v3634 = vsel %vm3551, %v3633, %v3632
        %v3635 = vsub.s32 4, %v3611
        %v3636 = vsel %vm3551, %v3635, %v3611
        %v3637 = vsel %vm3550, %v3232, %v3634
        %v3638 = vsel %vm3550, 0, %v3636
        %v3639 = vcosq.f32.pop %v3637
        %v3640 = vsinq.f32.pop %v3637
        %vm3641 = vweird.f32 %v3232
        %v3642 = vand.u32 %v3638, 3
        %vm3643 = vcmp.lt.s32.totalorder %v3642, 2
        %vm3644 = vcmp.eq.s32.totalorder %v3642, 0
        %v3645 = vxor.u32 %v3640, 2147483648
        %v3646 = vsel %vm3644, %v3639, %v3645
        %vm3647 = vcmp.eq.s32.totalorder %v3642, 2
        %v3648 = vxor.u32 %v3639, 2147483648
        %v3649 = vsel %vm3647, %v3648, %v3640
        %v3650 = vsel %vm3643, %v3646, %v3649
        %v3651 = vsel %vm3641, nan, %v3650
        %v3652 = vstv %s3234
        %v3653 = vmul.f32 %v3652, %v3548
        %v3654 = vmul.f32 %v3652, %v3651
        %v3655 = vadd.f32 %v3444, %v3653
        %v3656 = vadd.f32 %v3445, %v3654
        %s3657 = scalar_lea.vmem [#allocation9], 32
        %v3658 = vld [vmem:[%s3657] sm:$0xff]
        %v3659 = vld [vmem:[%s3657 + $0x8] sm:$0xff]
        %v3660 = vld [vmem:[%s3657 + $0x10] sm:$0xff]
        %v3661 = vld [vmem:[%s3657 + $0x18] sm:$0xff]
        %s3662 = scalar_lea.vmem %s4, 1
        %v3663 = vld [vmem:[%s3662] sm:$0x1]
        %v3665 = vlaneseq
        %v3666 = vshrl.u32 %v3665, 7
        %v3667 = vsub.s32 0, %v3666
        %v3668 = vrot.slane %v3663, %v3667
        %3672 = vrot.lane.b32.xlu0 %v3655, 96
        %v3673 = vpop.permute.xlu0 %3672
        %3674 = vrot.lane.b32.xlu0 %v3656, 96
        %v3675 = vpop.permute.xlu0 %3674
        %v3676 = vsel %vm451, %v3673, 0
        %v3678 = vsel %vm451, %v3675, 0
        %3680 = vmatprep.subr.mxu0 0.0
        %3681 = vmatpush1.msra.mxu0 0.0
        %3682 = vmatprep.subr.mxu0 0.0
        %3683 = vmatpush1.msra.mxu0 0.0
        %3684 = vmatprep.subr.mxu0 0.0
        %3685 = vmatpush1.msra.mxu0 0.0
        %3686 = vmatprep.subr.mxu0 0.0
        %3687 = vmatpush1.msra.mxu0 0.0
        %3688 = vmatprep.subr.mxu0 0.0
        %3689 = vmatpush1.msra.mxu0 0.0
        %3690 = vmatprep.subr.mxu0 0.0
        %3691 = vmatpush1.msra.mxu0 0.0
        %3692 = vmatprep.subr.mxu0 0.0
        %3693 = vmatpush1.msra.mxu0 0.0
        %3694 = vmatprep.subr.mxu0 0.0
        %3695 = vmatpush1.msra.mxu0 0.0
        %3696 = vmatprep.subr.mxu0 0.0
        %3697 = vmatpush1.msra.mxu0 0.0
        %3698 = vmatprep.subr.mxu0 0.0
        %3699 = vmatpush1.msra.mxu0 0.0
        %3700 = vmatprep.subr.mxu0 0.0
        %3701 = vmatpush1.msra.mxu0 0.0
        %3702 = vmatprep.subr.mxu0 0.0
        %3703 = vmatpush1.msra.mxu0 0.0
        %3704 = vmatprep.subr.mxu0 0.0
        %3705 = vmatpush1.msra.mxu0 %v3661
        %3706 = vmatprep.subr.mxu0 0.0
        %3707 = vmatpush1.msra.mxu0 %v3660
        %3708 = vmatprep.subr.mxu0 0.0
        %3709 = vmatpush1.msra.mxu0 %v3659
        %3710 = vmatprep.subr.mxu0 0.0
        %3711 = vmatpush1.msra.mxu0 %v3658
        %3712 = vmatprep.subr.mxu0 0.0
        %3713 = vmatpush2.msra.mxu0 0.0
        %3714 = vmatprep.subr.mxu0 0.0
        %3715 = vmatpush2.msra.mxu0 0.0
        %3716 = vmatprep.subr.mxu0 0.0
        %3717 = vmatpush2.msra.mxu0 0.0
        %3718 = vmatprep.subr.mxu0 0.0
        %3719 = vmatpush2.msra.mxu0 0.0
        %3720 = vmatprep.subr.mxu0 0.0
        %3721 = vmatpush2.msra.mxu0 0.0
        %3722 = vmatprep.subr.mxu0 0.0
        %3723 = vmatpush2.msra.mxu0 0.0
        %3724 = vmatprep.subr.mxu0 0.0
        %3725 = vmatpush2.msra.mxu0 0.0
        %3726 = vmatprep.subr.mxu0 0.0
        %3727 = vmatpush2.msra.mxu0 0.0
        %3728 = vmatprep.subr.mxu0 0.0
        %3729 = vmatpush2.msra.mxu0 0.0
        %3730 = vmatprep.subr.mxu0 0.0
        %3731 = vmatpush2.msra.mxu0 0.0
        %3732 = vmatprep.subr.mxu0 0.0
        %3733 = vmatpush2.msra.mxu0 0.0
        %3734 = vmatprep.subr.mxu0 0.0
        %3735 = vmatpush2.msra.mxu0 0.0
        %3736 = vmatprep.subr.mxu0 0.0
        %3737 = vmatpush2.msra.mxu0 0.0
        %3738 = vmatprep.subr.mxu0 0.0
        %3739 = vmatpush2.msra.mxu0 0.0
        %3740 = vmatprep.subr.mxu0 0.0
        %3741 = vmatpush2.msra.mxu0 0.0
        %3742 = vmatprep.subr.mxu0 0.0
        %3743 = vmatpush2.msra.mxu0 0.0
        %3744 = vmatprep.mubr.f32.mxu0 0.0
        %3745 = vmatmul.mubr.f32.gmra.mxu0 %v3676
        %v3746 = vpop.f32.mrf.mxu0
        %v3747 = vadd.f32 %v3668, %v3746
        %v3748 = vpop.f32.mrf.mxu0
        %3749 = vmatprep.mubr.f32.mxu0 0.0
        %3750 = vmatmul.mubr.f32.gmra.mxu0 %v3678
        %v3751 = vpop.f32.mrf.mxu0
        %v3752 = vadd.f32 %v3668, %v3751
        %v3753 = vpop.f32.mrf.mxu0
        %3754 = vdwg.mxu0
        %v3755 = vand.u32 2147483647, %v3747
        %v3756 = vand.u32 2147483647, %v3752
        %v3757 = vsub.f32 0.0, %v3755
        %v3758 = vsub.f32 0.0, %v3756
        %v3759 = vmul.f32 %v3757, 1.442695
        %v3760 = vpow.pop %v3759
        %v3761 = vmul.f32 %v3758, 1.442695
        %v3762 = vpow.pop %v3761
        %v3763 = vadd.f32 %v3760, 1.0
        %v3764 = vlog2.pop %v3763
        %v3765 = vmul.f32 %v3764, 0.6931472
        %v3766 = vmul.f32 -0.5, %v3760
        %v3767 = vadd.f32 %v3766, 1.0
        %v3768 = vmul.f32 %v3767, %v3760
        %v3769 = vand.u32 2147483647, %v3760
        %vm3770 = vcmp.lt.f32.partialorder %v3769, 0.0004427343
        %v3771 = vsel %vm3770, %v3768, %v3765
        %v3772 = vadd.f32 %v3762, 1.0
        %v3773 = vlog2.pop %v3772
        %v3774 = vmul.f32 %v3773, 0.6931472
        %v3775 = vmul.f32 -0.5, %v3762
        %v3776 = vadd.f32 %v3775, 1.0
        %v3777 = vmul.f32 %v3776, %v3762
        %v3778 = vand.u32 2147483647, %v3762
        %vm3779 = vcmp.lt.f32.partialorder %v3778, 0.0004427343
        %v3780 = vsel %vm3779, %v3777, %v3774
        %v3781 = vmax.f32 %v3747, 0.0
        %v3782 = vmax.f32 %v3752, 0.0
        %v3783 = vadd.f32 %v3771, %v3781
        %v3784 = vadd.f32 %v3780, %v3782
        %s3785 = scalar_lea.vmem [#allocation11], 8
        %v3786 = vld [vmem:[%s3785] sm:$0xff]
        %v3789 = vcombine.high %v3783, %v3783
        %v3791 = vunpack.c.l.s4 1966171168
        %v3792 = vunpack.c.0.s8 %v3791
        %v3793 = vlaneseq
        %v3794 = vshrl.u32 %v3793, 7
        %v3795 = vsub.s32 %v3792, %v3794
        %v3796 = vrot.slane %v3783, %v3795
        %v3798 = vunpack.c.l.s4 1966171168
        %v3799 = vunpack.c.0.s8 %v3798
        %v3800 = vlaneseq
        %v3801 = vshrl.u32 %v3800, 7
        %v3802 = vsub.s32 %v3799, %v3801
        %v3803 = vrot.slane %v3789, %v3802
        %v3804 = vcombine.high %v3796, %v3796
        %v3805 = vcombine.high %v3803, %v3803
        %v3807 = vunpack.c.l.s4 1966171168
        %v3808 = vunpack.c.0.s8 %v3807
        %v3809 = vlaneseq
        %v3810 = vshrl.u32 %v3809, 7
        %v3811 = vsub.s32 %v3808, %v3810
        %v3812 = vrot.slane %v3796, %v3811
        %v3814 = vunpack.c.l.s4 1966171168
        %v3815 = vunpack.c.0.s8 %v3814
        %v3816 = vlaneseq
        %v3817 = vshrl.u32 %v3816, 7
        %v3818 = vsub.s32 %v3815, %v3817
        %v3819 = vrot.slane %v3803, %v3818
        %v3821 = vunpack.c.l.s4 1966171168
        %v3822 = vunpack.c.0.s8 %v3821
        %v3823 = vlaneseq
        %v3824 = vshrl.u32 %v3823, 7
        %v3825 = vsub.s32 %v3822, %v3824
        %v3826 = vrot.slane %v3804, %v3825
        %v3828 = vunpack.c.l.s4 1966171168
        %v3829 = vunpack.c.0.s8 %v3828
        %v3830 = vlaneseq
        %v3831 = vshrl.u32 %v3830, 7
        %v3832 = vsub.s32 %v3829, %v3831
        %v3833 = vrot.slane %v3805, %v3832
        %v3834 = vcombine.high %v3812, %v3812
        %v3835 = vcombine.high %v3819, %v3819
        %v3836 = vcombine.high %v3826, %v3826
        %v3837 = vcombine.high %v3833, %v3833
        %v3838 = vcombine.high %v3784, %v3784
        %v3840 = vunpack.c.l.s4 1966171168
        %v3841 = vunpack.c.0.s8 %v3840
        %v3842 = vlaneseq
        %v3843 = vshrl.u32 %v3842, 7
        %v3844 = vsub.s32 %v3841, %v3843
        %v3845 = vrot.slane %v3784, %v3844
        %v3847 = vunpack.c.l.s4 1966171168
        %v3848 = vunpack.c.0.s8 %v3847
        %v3849 = vlaneseq
        %v3850 = vshrl.u32 %v3849, 7
        %v3851 = vsub.s32 %v3848, %v3850
        %v3852 = vrot.slane %v3838, %v3851
        %v3853 = vcombine.high %v3845, %v3845
        %v3854 = vcombine.high %v3852, %v3852
        %v3856 = vunpack.c.l.s4 1966171168
        %v3857 = vunpack.c.0.s8 %v3856
        %v3858 = vlaneseq
        %v3859 = vshrl.u32 %v3858, 7
        %v3860 = vsub.s32 %v3857, %v3859
        %v3861 = vrot.slane %v3845, %v3860
        %v3863 = vunpack.c.l.s4 1966171168
        %v3864 = vunpack.c.0.s8 %v3863
        %v3865 = vlaneseq
        %v3866 = vshrl.u32 %v3865, 7
        %v3867 = vsub.s32 %v3864, %v3866
        %v3868 = vrot.slane %v3852, %v3867
        %v3870 = vunpack.c.l.s4 1966171168
        %v3871 = vunpack.c.0.s8 %v3870
        %v3872 = vlaneseq
        %v3873 = vshrl.u32 %v3872, 7
        %v3874 = vsub.s32 %v3871, %v3873
        %v3875 = vrot.slane %v3853, %v3874
        %v3877 = vunpack.c.l.s4 1966171168
        %v3878 = vunpack.c.0.s8 %v3877
        %v3879 = vlaneseq
        %v3880 = vshrl.u32 %v3879, 7
        %v3881 = vsub.s32 %v3878, %v3880
        %v3882 = vrot.slane %v3854, %v3881
        %v3883 = vcombine.high %v3861, %v3861
        %v3884 = vcombine.high %v3868, %v3868
        %v3885 = vcombine.high %v3875, %v3875
        %v3886 = vcombine.high %v3882, %v3882
        %v3887 = vlaneseq
        %v3888 = vshrl.u32 %v3887, 7
        %v3889 = vsub.s32 0, %v3888
        %v3890 = vrot.slane %v3812, %v3889
        %v3891 = vlaneseq
        %v3892 = vshrl.u32 %v3891, 7
        %v3893 = vsub.s32 0, %v3892
        %v3894 = vrot.slane %v3826, %v3893
        %v3895 = vlaneseq
        %v3896 = vshrl.u32 %v3895, 7
        %v3897 = vsub.s32 0, %v3896
        %v3898 = vrot.slane %v3834, %v3897
        %v3899 = vlaneseq
        %v3900 = vshrl.u32 %v3899, 7
        %v3901 = vsub.s32 0, %v3900
        %v3902 = vrot.slane %v3836, %v3901
        %v3903 = vlaneseq
        %v3904 = vshrl.u32 %v3903, 7
        %v3905 = vsub.s32 0, %v3904
        %v3906 = vrot.slane %v3819, %v3905
        %v3907 = vlaneseq
        %v3908 = vshrl.u32 %v3907, 7
        %v3909 = vsub.s32 0, %v3908
        %v3910 = vrot.slane %v3833, %v3909
        %v3911 = vlaneseq
        %v3912 = vshrl.u32 %v3911, 7
        %v3913 = vsub.s32 0, %v3912
        %v3914 = vrot.slane %v3835, %v3913
        %v3915 = vlaneseq
        %v3916 = vshrl.u32 %v3915, 7
        %v3917 = vsub.s32 0, %v3916
        %v3918 = vrot.slane %v3837, %v3917
        %v3919 = vlaneseq
        %v3920 = vshrl.u32 %v3919, 7
        %v3921 = vsub.s32 0, %v3920
        %v3922 = vrot.slane %v3861, %v3921
        %v3923 = vlaneseq
        %v3924 = vshrl.u32 %v3923, 7
        %v3925 = vsub.s32 0, %v3924
        %v3926 = vrot.slane %v3875, %v3925
        %v3927 = vlaneseq
        %v3928 = vshrl.u32 %v3927, 7
        %v3929 = vsub.s32 0, %v3928
        %v3930 = vrot.slane %v3883, %v3929
        %v3931 = vlaneseq
        %v3932 = vshrl.u32 %v3931, 7
        %v3933 = vsub.s32 0, %v3932
        %v3934 = vrot.slane %v3885, %v3933
        %v3935 = vlaneseq
        %v3936 = vshrl.u32 %v3935, 7
        %v3937 = vsub.s32 0, %v3936
        %v3938 = vrot.slane %v3868, %v3937
        %v3939 = vlaneseq
        %v3940 = vshrl.u32 %v3939, 7
        %v3941 = vsub.s32 0, %v3940
        %v3942 = vrot.slane %v3882, %v3941
        %v3943 = vlaneseq
        %v3944 = vshrl.u32 %v3943, 7
        %v3945 = vsub.s32 0, %v3944
        %v3946 = vrot.slane %v3884, %v3945
        %v3947 = vlaneseq
        %v3948 = vshrl.u32 %v3947, 7
        %v3949 = vsub.s32 0, %v3948
        %v3950 = vrot.slane %v3886, %v3949
        %v3967 = vmul.f32 %v3890, %v3786
        %v3968 = vmul.f32 %v3894, %v3786
        %v3969 = vmul.f32 %v3898, %v3786
        %v3970 = vmul.f32 %v3902, %v3786
        %v3971 = vmul.f32 %v3906, %v3786
        %v3972 = vmul.f32 %v3910, %v3786
        %v3973 = vmul.f32 %v3914, %v3786
        %v3974 = vmul.f32 %v3918, %v3786
        %v3975 = vmul.f32 %v3922, %v3786
        %v3976 = vmul.f32 %v3926, %v3786
        %v3977 = vmul.f32 %v3930, %v3786
        %v3978 = vmul.f32 %v3934, %v3786
        %v3979 = vmul.f32 %v3938, %v3786
        %v3980 = vmul.f32 %v3942, %v3786
        %v3981 = vmul.f32 %v3946, %v3786
        %v3982 = vmul.f32 %v3950, %v3786
        %v3983 = vmul.f32 %v3967, 1.442695
        %v3984 = vpow.pop %v3983
        %v3985 = vmul.f32 %v3968, 1.442695
        %v3986 = vpow.pop %v3985
        %v3987 = vmul.f32 %v3969, 1.442695
        %v3988 = vpow.pop %v3987
        %v3989 = vmul.f32 %v3970, 1.442695
        %v3990 = vpow.pop %v3989
        %v3991 = vmul.f32 %v3971, 1.442695
        %v3992 = vpow.pop %v3991
        %v3993 = vmul.f32 %v3972, 1.442695
        %v3994 = vpow.pop %v3993
        %v3995 = vmul.f32 %v3973, 1.442695
        %v3996 = vpow.pop %v3995
        %v3997 = vmul.f32 %v3974, 1.442695
        %v3998 = vpow.pop %v3997
        %v3999 = vmul.f32 %v3975, 1.442695
        %v4000 = vpow.pop %v3999
        %v4001 = vmul.f32 %v3976, 1.442695
        %v4002 = vpow.pop %v4001
        %v4003 = vmul.f32 %v3977, 1.442695
        %v4004 = vpow.pop %v4003
        %v4005 = vmul.f32 %v3978, 1.442695
        %v4006 = vpow.pop %v4005
        %v4007 = vmul.f32 %v3979, 1.442695
        %v4008 = vpow.pop %v4007
        %v4009 = vmul.f32 %v3980, 1.442695
        %v4010 = vpow.pop %v4009
        %v4011 = vmul.f32 %v3981, 1.442695
        %v4012 = vpow.pop %v4011
        %v4013 = vmul.f32 %v3982, 1.442695
        %v4014 = vpow.pop %v4013
        %4015 = vst.msk [vmem:[#allocation2] sm:$0xff] %vm451, %v3984
        %4016 = vst.msk [vmem:[#allocation2 + $0x8] sm:$0xff] %vm451, %v3986
        %4017 = vst.msk [vmem:[#allocation2 + $0x10] sm:$0xff] %vm451, %v3988
        %4018 = vst.msk [vmem:[#allocation2 + $0x18] sm:$0xff] %vm451, %v3990
        %4019 = vst.msk [vmem:[#allocation2 + $0x20] sm:$0xff] %vm451, %v3992
        %4020 = vst.msk [vmem:[#allocation2 + $0x28] sm:$0xff] %vm451, %v3994
        %4021 = vst.msk [vmem:[#allocation2 + $0x30] sm:$0xff] %vm451, %v3996
        %4022 = vst.msk [vmem:[#allocation2 + $0x38] sm:$0xff] %vm451, %v3998
        %4023 = vst.msk [vmem:[#allocation2 + $0x40] sm:$0xff] %vm451, %v4000
        %4024 = vst.msk [vmem:[#allocation2 + $0x48] sm:$0xff] %vm451, %v4002
        %4025 = vst.msk [vmem:[#allocation2 + $0x50] sm:$0xff] %vm451, %v4004
        %4026 = vst.msk [vmem:[#allocation2 + $0x58] sm:$0xff] %vm451, %v4006
        %4027 = vst.msk [vmem:[#allocation2 + $0x60] sm:$0xff] %vm451, %v4008
        %4028 = vst.msk [vmem:[#allocation2 + $0x68] sm:$0xff] %vm451, %v4010
        %4029 = vst.msk [vmem:[#allocation2 + $0x70] sm:$0xff] %vm451, %v4012
        %4030 = vst.msk [vmem:[#allocation2 + $0x78] sm:$0xff] %vm451, %v4014
        %v4033 = vmul.f32 %v3783, %v3673
        %v4034 = vmul.f32 %v3784, %v3675
        %v4037 = vcombine.high %v4033, %v4033
        %v4039 = vunpack.c.l.s4 1966171168
        %v4040 = vunpack.c.0.s8 %v4039
        %v4041 = vlaneseq
        %v4042 = vshrl.u32 %v4041, 7
        %v4043 = vsub.s32 %v4040, %v4042
        %v4044 = vrot.slane %v4033, %v4043
        %v4046 = vunpack.c.l.s4 1966171168
        %v4047 = vunpack.c.0.s8 %v4046
        %v4048 = vlaneseq
        %v4049 = vshrl.u32 %v4048, 7
        %v4050 = vsub.s32 %v4047, %v4049
        %v4051 = vrot.slane %v4037, %v4050
        %v4052 = vcombine.high %v4044, %v4044
        %v4053 = vcombine.high %v4051, %v4051
        %v4055 = vunpack.c.l.s4 1966171168
        %v4056 = vunpack.c.0.s8 %v4055
        %v4057 = vlaneseq
        %v4058 = vshrl.u32 %v4057, 7
        %v4059 = vsub.s32 %v4056, %v4058
        %v4060 = vrot.slane %v4044, %v4059
        %v4062 = vunpack.c.l.s4 1966171168
        %v4063 = vunpack.c.0.s8 %v4062
        %v4064 = vlaneseq
        %v4065 = vshrl.u32 %v4064, 7
        %v4066 = vsub.s32 %v4063, %v4065
        %v4067 = vrot.slane %v4051, %v4066
        %v4069 = vunpack.c.l.s4 1966171168
        %v4070 = vunpack.c.0.s8 %v4069
        %v4071 = vlaneseq
        %v4072 = vshrl.u32 %v4071, 7
        %v4073 = vsub.s32 %v4070, %v4072
        %v4074 = vrot.slane %v4052, %v4073
        %v4076 = vunpack.c.l.s4 1966171168
        %v4077 = vunpack.c.0.s8 %v4076
        %v4078 = vlaneseq
        %v4079 = vshrl.u32 %v4078, 7
        %v4080 = vsub.s32 %v4077, %v4079
        %v4081 = vrot.slane %v4053, %v4080
        %v4082 = vcombine.high %v4060, %v4060
        %v4083 = vcombine.high %v4067, %v4067
        %v4084 = vcombine.high %v4074, %v4074
        %v4085 = vcombine.high %v4081, %v4081
        %v4086 = vcombine.high %v4034, %v4034
        %v4088 = vunpack.c.l.s4 1966171168
        %v4089 = vunpack.c.0.s8 %v4088
        %v4090 = vlaneseq
        %v4091 = vshrl.u32 %v4090, 7
        %v4092 = vsub.s32 %v4089, %v4091
        %v4093 = vrot.slane %v4034, %v4092
        %v4095 = vunpack.c.l.s4 1966171168
        %v4096 = vunpack.c.0.s8 %v4095
        %v4097 = vlaneseq
        %v4098 = vshrl.u32 %v4097, 7
        %v4099 = vsub.s32 %v4096, %v4098
        %v4100 = vrot.slane %v4086, %v4099
        %v4101 = vcombine.high %v4093, %v4093
        %v4102 = vcombine.high %v4100, %v4100
        %v4104 = vunpack.c.l.s4 1966171168
        %v4105 = vunpack.c.0.s8 %v4104
        %v4106 = vlaneseq
        %v4107 = vshrl.u32 %v4106, 7
        %v4108 = vsub.s32 %v4105, %v4107
        %v4109 = vrot.slane %v4093, %v4108
        %v4111 = vunpack.c.l.s4 1966171168
        %v4112 = vunpack.c.0.s8 %v4111
        %v4113 = vlaneseq
        %v4114 = vshrl.u32 %v4113, 7
        %v4115 = vsub.s32 %v4112, %v4114
        %v4116 = vrot.slane %v4100, %v4115
        %v4118 = vunpack.c.l.s4 1966171168
        %v4119 = vunpack.c.0.s8 %v4118
        %v4120 = vlaneseq
        %v4121 = vshrl.u32 %v4120, 7
        %v4122 = vsub.s32 %v4119, %v4121
        %v4123 = vrot.slane %v4101, %v4122
        %v4125 = vunpack.c.l.s4 1966171168
        %v4126 = vunpack.c.0.s8 %v4125
        %v4127 = vlaneseq
        %v4128 = vshrl.u32 %v4127, 7
        %v4129 = vsub.s32 %v4126, %v4128
        %v4130 = vrot.slane %v4102, %v4129
        %v4131 = vcombine.high %v4109, %v4109
        %v4132 = vcombine.high %v4116, %v4116
        %v4133 = vcombine.high %v4123, %v4123
        %v4134 = vcombine.high %v4130, %v4130
        %v4135 = vlaneseq
        %v4136 = vshrl.u32 %v4135, 7
        %v4137 = vsub.s32 0, %v4136
        %v4138 = vrot.slane %v3747, %v4137
        %s4140 = sor.u32 256, 32
        %4141 = vbcast.lane.b32.xlu0 %v4138, %s4140
        %v4142 = vpop.permute.xlu0 %4141
        %v4143 = vlaneseq
        %v4144 = vshrl.u32 %v4143, 7
        %v4145 = vsub.s32 1, %v4144
        %v4146 = vrot.slane %v3747, %v4145
        %s4148 = sor.u32 256, 32
        %4149 = vbcast.lane.b32.xlu0 %v4146, %s4148
        %v4150 = vpop.permute.xlu0 %4149
        %v4151 = vlaneseq
        %v4152 = vshrl.u32 %v4151, 7
        %v4153 = vsub.s32 2, %v4152
        %v4154 = vrot.slane %v3747, %v4153
        %s4156 = sor.u32 256, 32
        %4157 = vbcast.lane.b32.xlu0 %v4154, %s4156
        %v4158 = vpop.permute.xlu0 %4157
        %v4159 = vlaneseq
        %v4160 = vshrl.u32 %v4159, 7
        %v4161 = vsub.s32 3, %v4160
        %v4162 = vrot.slane %v3747, %v4161
        %s4164 = sor.u32 256, 32
        %4165 = vbcast.lane.b32.xlu0 %v4162, %s4164
        %v4166 = vpop.permute.xlu0 %4165
        %v4167 = vlaneseq
        %v4168 = vshrl.u32 %v4167, 7
        %v4169 = vsub.s32 4, %v4168
        %v4170 = vrot.slane %v3747, %v4169
        %s4172 = sor.u32 256, 32
        %4173 = vbcast.lane.b32.xlu0 %v4170, %s4172
        %v4174 = vpop.permute.xlu0 %4173
        %v4175 = vlaneseq
        %v4176 = vshrl.u32 %v4175, 7
        %v4177 = vsub.s32 5, %v4176
        %v4178 = vrot.slane %v3747, %v4177
        %s4180 = sor.u32 256, 32
        %4181 = vbcast.lane.b32.xlu0 %v4178, %s4180
        %v4182 = vpop.permute.xlu0 %4181
        %v4183 = vlaneseq
        %v4184 = vshrl.u32 %v4183, 7
        %v4185 = vsub.s32 6, %v4184
        %v4186 = vrot.slane %v3747, %v4185
        %s4188 = sor.u32 256, 32
        %4189 = vbcast.lane.b32.xlu0 %v4186, %s4188
        %v4190 = vpop.permute.xlu0 %4189
        %v4191 = vlaneseq
        %v4192 = vshrl.u32 %v4191, 7
        %v4193 = vsub.s32 7, %v4192
        %v4194 = vrot.slane %v3747, %v4193
        %s4196 = sor.u32 256, 32
        %4197 = vbcast.lane.b32.xlu0 %v4194, %s4196
        %v4198 = vpop.permute.xlu0 %4197
        %v4199 = vlaneseq
        %v4200 = vshrl.u32 %v4199, 7
        %v4201 = vsub.s32 0, %v4200
        %v4202 = vrot.slane %v3752, %v4201
        %s4204 = sor.u32 256, 32
        %4205 = vbcast.lane.b32.xlu0 %v4202, %s4204
        %v4206 = vpop.permute.xlu0 %4205
        %v4207 = vlaneseq
        %v4208 = vshrl.u32 %v4207, 7
        %v4209 = vsub.s32 1, %v4208
        %v4210 = vrot.slane %v3752, %v4209
        %s4212 = sor.u32 256, 32
        %4213 = vbcast.lane.b32.xlu0 %v4210, %s4212
        %v4214 = vpop.permute.xlu0 %4213
        %v4215 = vlaneseq
        %v4216 = vshrl.u32 %v4215, 7
        %v4217 = vsub.s32 2, %v4216
        %v4218 = vrot.slane %v3752, %v4217
        %s4220 = sor.u32 256, 32
        %4221 = vbcast.lane.b32.xlu0 %v4218, %s4220
        %v4222 = vpop.permute.xlu0 %4221
        %v4223 = vlaneseq
        %v4224 = vshrl.u32 %v4223, 7
        %v4225 = vsub.s32 3, %v4224
        %v4226 = vrot.slane %v3752, %v4225
        %s4228 = sor.u32 256, 32
        %4229 = vbcast.lane.b32.xlu0 %v4226, %s4228
        %v4230 = vpop.permute.xlu0 %4229
        %v4231 = vlaneseq
        %v4232 = vshrl.u32 %v4231, 7
        %v4233 = vsub.s32 4, %v4232
        %v4234 = vrot.slane %v3752, %v4233
        %s4236 = sor.u32 256, 32
        %4237 = vbcast.lane.b32.xlu0 %v4234, %s4236
        %v4238 = vpop.permute.xlu0 %4237
        %v4239 = vlaneseq
        %v4240 = vshrl.u32 %v4239, 7
        %v4241 = vsub.s32 5, %v4240
        %v4242 = vrot.slane %v3752, %v4241
        %s4244 = sor.u32 256, 32
        %4245 = vbcast.lane.b32.xlu0 %v4242, %s4244
        %v4246 = vpop.permute.xlu0 %4245
        %v4247 = vlaneseq
        %v4248 = vshrl.u32 %v4247, 7
        %v4249 = vsub.s32 6, %v4248
        %v4250 = vrot.slane %v3752, %v4249
        %s4252 = sor.u32 256, 32
        %4253 = vbcast.lane.b32.xlu0 %v4250, %s4252
        %v4254 = vpop.permute.xlu0 %4253
        %v4255 = vlaneseq
        %v4256 = vshrl.u32 %v4255, 7
        %v4257 = vsub.s32 7, %v4256
        %v4258 = vrot.slane %v3752, %v4257
        %s4260 = sor.u32 256, 32
        %4261 = vbcast.lane.b32.xlu0 %v4258, %s4260
        %v4262 = vpop.permute.xlu0 %4261
        %v4263 = vlaneseq
        %v4264 = vshrl.u32 %v4263, 7
        %v4265 = vsub.s32 0, %v4264
        %v4266 = vrot.slane %v4060, %v4265
        %v4267 = vlaneseq
        %v4268 = vshrl.u32 %v4267, 7
        %v4269 = vsub.s32 0, %v4268
        %v4270 = vrot.slane %v4074, %v4269
        %v4271 = vlaneseq
        %v4272 = vshrl.u32 %v4271, 7
        %v4273 = vsub.s32 0, %v4272
        %v4274 = vrot.slane %v4082, %v4273
        %v4275 = vlaneseq
        %v4276 = vshrl.u32 %v4275, 7
        %v4277 = vsub.s32 0, %v4276
        %v4278 = vrot.slane %v4084, %v4277
        %v4279 = vlaneseq
        %v4280 = vshrl.u32 %v4279, 7
        %v4281 = vsub.s32 0, %v4280
        %v4282 = vrot.slane %v4067, %v4281
        %v4283 = vlaneseq
        %v4284 = vshrl.u32 %v4283, 7
        %v4285 = vsub.s32 0, %v4284
        %v4286 = vrot.slane %v4081, %v4285
        %v4287 = vlaneseq
        %v4288 = vshrl.u32 %v4287, 7
        %v4289 = vsub.s32 0, %v4288
        %v4290 = vrot.slane %v4083, %v4289
        %v4291 = vlaneseq
        %v4292 = vshrl.u32 %v4291, 7
        %v4293 = vsub.s32 0, %v4292
        %v4294 = vrot.slane %v4085, %v4293
        %v4295 = vlaneseq
        %v4296 = vshrl.u32 %v4295, 7
        %v4297 = vsub.s32 0, %v4296
        %v4298 = vrot.slane %v4109, %v4297
        %v4299 = vlaneseq
        %v4300 = vshrl.u32 %v4299, 7
        %v4301 = vsub.s32 0, %v4300
        %v4302 = vrot.slane %v4123, %v4301
        %v4303 = vlaneseq
        %v4304 = vshrl.u32 %v4303, 7
        %v4305 = vsub.s32 0, %v4304
        %v4306 = vrot.slane %v4131, %v4305
        %v4307 = vlaneseq
        %v4308 = vshrl.u32 %v4307, 7
        %v4309 = vsub.s32 0, %v4308
        %v4310 = vrot.slane %v4133, %v4309
        %v4311 = vlaneseq
        %v4312 = vshrl.u32 %v4311, 7
        %v4313 = vsub.s32 0, %v4312
        %v4314 = vrot.slane %v4116, %v4313
        %v4315 = vlaneseq
        %v4316 = vshrl.u32 %v4315, 7
        %v4317 = vsub.s32 0, %v4316
        %v4318 = vrot.slane %v4130, %v4317
        %v4319 = vlaneseq
        %v4320 = vshrl.u32 %v4319, 7
        %v4321 = vsub.s32 0, %v4320
        %v4322 = vrot.slane %v4132, %v4321
        %v4323 = vlaneseq
        %v4324 = vshrl.u32 %v4323, 7
        %v4325 = vsub.s32 0, %v4324
        %v4326 = vrot.slane %v4134, %v4325
        %v4343 = vmul.f32 %v4266, %v4142
        %v4344 = vmul.f32 %v4270, %v4150
        %v4345 = vmul.f32 %v4274, %v4158
        %v4346 = vmul.f32 %v4278, %v4166
        %v4347 = vmul.f32 %v4282, %v4174
        %v4348 = vmul.f32 %v4286, %v4182
        %v4349 = vmul.f32 %v4290, %v4190
        %v4350 = vmul.f32 %v4294, %v4198
        %v4351 = vmul.f32 %v4298, %v4206
        %v4352 = vmul.f32 %v4302, %v4214
        %v4353 = vmul.f32 %v4306, %v4222
        %v4354 = vmul.f32 %v4310, %v4230
        %v4355 = vmul.f32 %v4314, %v4238
        %v4356 = vmul.f32 %v4318, %v4246
        %v4357 = vmul.f32 %v4322, %v4254
        %v4358 = vmul.f32 %v4326, %v4262
        %4359 = vst.msk [vmem:[#allocation3] sm:$0xff] %vm451, %v4343
        %4360 = vst.msk [vmem:[#allocation3 + $0x8] sm:$0xff] %vm451, %v4344
        %4361 = vst.msk [vmem:[#allocation3 + $0x10] sm:$0xff] %vm451, %v4345
        %4362 = vst.msk [vmem:[#allocation3 + $0x18] sm:$0xff] %vm451, %v4346
        %4363 = vst.msk [vmem:[#allocation3 + $0x20] sm:$0xff] %vm451, %v4347
        %4364 = vst.msk [vmem:[#allocation3 + $0x28] sm:$0xff] %vm451, %v4348
        %4365 = vst.msk [vmem:[#allocation3 + $0x30] sm:$0xff] %vm451, %v4349
        %4366 = vst.msk [vmem:[#allocation3 + $0x38] sm:$0xff] %vm451, %v4350
        %4367 = vst.msk [vmem:[#allocation3 + $0x40] sm:$0xff] %vm451, %v4351
        %4368 = vst.msk [vmem:[#allocation3 + $0x48] sm:$0xff] %vm451, %v4352
        %4369 = vst.msk [vmem:[#allocation3 + $0x50] sm:$0xff] %vm451, %v4353
        %4370 = vst.msk [vmem:[#allocation3 + $0x58] sm:$0xff] %vm451, %v4354
        %4371 = vst.msk [vmem:[#allocation3 + $0x60] sm:$0xff] %vm451, %v4355
        %4372 = vst.msk [vmem:[#allocation3 + $0x68] sm:$0xff] %vm451, %v4356
        %4373 = vst.msk [vmem:[#allocation3 + $0x70] sm:$0xff] %vm451, %v4357
        %4374 = vst.msk [vmem:[#allocation3 + $0x78] sm:$0xff] %vm451, %v4358
        %v4375 = vld [vmem:[#allocation2] sm:$0xff]
        %v4376 = vld [vmem:[#allocation2 + $0x40] sm:$0xff]
        %v4377 = vmul.f32 %v4375, 0.0
        %v4378 = vmul.f32 %v4376, 0.0
        %v4379 = vld [vmem:[#allocation3] sm:$0xff]
        %v4380 = vld [vmem:[#allocation3 + $0x40] sm:$0xff]
        %v4381 = vadd.f32 %v4377, %v4379
        %v4382 = vadd.f32 %v4378, %v4380
        %4383 = vst.msk [vmem:[#allocation4] sm:$0xff] %vm451, %v4381
        %4384 = vst.msk [vmem:[#allocation4 + $0x40] sm:$0xff] %vm451, %v4382
        %v4385 = vld [vmem:[%s2136] sm:$0xff]
        %v4386 = vld [vmem:[%s2136 + $0x40] sm:$0xff]
        %v4387 = vmul.f32 %v4385, %v4381
        %v4388 = vmul.f32 %v4386, %v4382
        %v4389 = vld [vmem:[%s2141] sm:$0xff]
        %v4390 = vld [vmem:[%s2141 + $0x40] sm:$0xff]
        %v4391 = vadd.f32 %v4387, %v4389
        %v4392 = vadd.f32 %v4388, %v4390
        %4393 = vst.msk [vmem:[%s2146] sm:$0xff] %vm451, %v4391
        %4394 = vst.msk [vmem:[%s2146 + $0x40] sm:$0xff] %vm451, %v4392
        %v4395 = vld [vmem:[%s2149] sm:$0xff]
        %v4396 = vld [vmem:[%s2149 + $0x40] sm:$0xff]
        %v4397 = vmul.f32 %v4395, %v4391
        %v4398 = vmul.f32 %v4396, %v4392
        %v4399 = vld [vmem:[%s2154] sm:$0xff]
        %v4400 = vld [vmem:[%s2154 + $0x40] sm:$0xff]
        %v4401 = vadd.f32 %v4397, %v4399
        %v4402 = vadd.f32 %v4398, %v4400
        %4403 = vst.msk [vmem:[%s2159] sm:$0xff] %vm451, %v4401
        %4404 = vst.msk [vmem:[%s2159 + $0x40] sm:$0xff] %vm451, %v4402
        %v4405 = vld [vmem:[%s2162] sm:$0xff]
        %v4406 = vld [vmem:[%s2162 + $0x40] sm:$0xff]
        %v4407 = vmul.f32 %v4405, %v4401
        %v4408 = vmul.f32 %v4406, %v4402
        %v4409 = vld [vmem:[%s2167] sm:$0xff]
        %v4410 = vld [vmem:[%s2167 + $0x40] sm:$0xff]
        %v4411 = vadd.f32 %v4407, %v4409
        %v4412 = vadd.f32 %v4408, %v4410
        %4413 = vst.msk [vmem:[%s2172] sm:$0xff] %vm451, %v4411
        %4414 = vst.msk [vmem:[%s2172 + $0x40] sm:$0xff] %vm451, %v4412
        %v4415 = vld [vmem:[%s2175] sm:$0xff]
        %v4416 = vld [vmem:[%s2175 + $0x40] sm:$0xff]
        %v4417 = vmul.f32 %v4415, %v4411
        %v4418 = vmul.f32 %v4416, %v4412
        %v4419 = vld [vmem:[%s2180] sm:$0xff]
        %v4420 = vld [vmem:[%s2180 + $0x40] sm:$0xff]
        %v4421 = vadd.f32 %v4417, %v4419
        %v4422 = vadd.f32 %v4418, %v4420
        %4423 = vst.msk [vmem:[%s2185] sm:$0xff] %vm451, %v4421
        %4424 = vst.msk [vmem:[%s2185 + $0x40] sm:$0xff] %vm451, %v4422
        %v4425 = vld [vmem:[%s2188] sm:$0xff]
        %v4426 = vld [vmem:[%s2188 + $0x40] sm:$0xff]
        %v4427 = vmul.f32 %v4425, %v4421
        %v4428 = vmul.f32 %v4426, %v4422
        %v4429 = vld [vmem:[%s2193] sm:$0xff]
        %v4430 = vld [vmem:[%s2193 + $0x40] sm:$0xff]
        %v4431 = vadd.f32 %v4427, %v4429
        %v4432 = vadd.f32 %v4428, %v4430
        %4433 = vst.msk [vmem:[%s2198] sm:$0xff] %vm451, %v4431
        %4434 = vst.msk [vmem:[%s2198 + $0x40] sm:$0xff] %vm451, %v4432
        %v4435 = vld [vmem:[%s2201] sm:$0xff]
        %v4436 = vld [vmem:[%s2201 + $0x40] sm:$0xff]
        %v4437 = vmul.f32 %v4435, %v4431
        %v4438 = vmul.f32 %v4436, %v4432
        %v4439 = vld [vmem:[%s2206] sm:$0xff]
        %v4440 = vld [vmem:[%s2206 + $0x40] sm:$0xff]
        %v4441 = vadd.f32 %v4437, %v4439
        %v4442 = vadd.f32 %v4438, %v4440
        %4443 = vst.msk [vmem:[%s2211] sm:$0xff] %vm451, %v4441
        %4444 = vst.msk [vmem:[%s2211 + $0x40] sm:$0xff] %vm451, %v4442
        %v4445 = vld [vmem:[%s2214] sm:$0xff]
        %v4446 = vld [vmem:[%s2214 + $0x40] sm:$0xff]
        %v4447 = vmul.f32 %v4445, %v4441
        %v4448 = vmul.f32 %v4446, %v4442
        %v4449 = vld [vmem:[%s2219] sm:$0xff]
        %v4450 = vld [vmem:[%s2219 + $0x40] sm:$0xff]
        %v4451 = vadd.f32 %v4447, %v4449
        %v4452 = vadd.f32 %v4448, %v4450
        %4453 = vst.msk [vmem:[%s2224] sm:$0xff] %vm451, %v4451
        %4454 = vst.msk [vmem:[%s2224 + $0x40] sm:$0xff] %vm451, %v4452
        %v4455 = vld [vmem:[#allocation4] sm:$0xff]
        %v4456 = vld [vmem:[#allocation4 + $0x8] sm:$0xff]
        %v4457 = vld [vmem:[#allocation4 + $0x10] sm:$0xff]
        %v4458 = vld [vmem:[#allocation4 + $0x18] sm:$0xff]
        %v4459 = vld [vmem:[#allocation4 + $0x20] sm:$0xff]
        %v4460 = vld [vmem:[#allocation4 + $0x28] sm:$0xff]
        %v4461 = vld [vmem:[#allocation4 + $0x30] sm:$0xff]
        %v4462 = vld [vmem:[#allocation4 + $0x38] sm:$0xff]
        %v4463 = vld [vmem:[#allocation4 + $0x40] sm:$0xff]
        %v4464 = vld [vmem:[#allocation4 + $0x48] sm:$0xff]
        %v4465 = vld [vmem:[#allocation4 + $0x50] sm:$0xff]
        %v4466 = vld [vmem:[#allocation4 + $0x58] sm:$0xff]
        %v4467 = vld [vmem:[#allocation4 + $0x60] sm:$0xff]
        %v4468 = vld [vmem:[#allocation4 + $0x68] sm:$0xff]
        %v4469 = vld [vmem:[#allocation4 + $0x70] sm:$0xff]
        %v4470 = vld [vmem:[#allocation4 + $0x78] sm:$0xff]
        %s4472 = sor.u32 256, 40
        %4473 = vbcast.lane.b32.xlu0 %v4138, %s4472
        %v4474 = vpop.permute.xlu0 %4473
        %s4476 = sor.u32 256, 40
        %4477 = vbcast.lane.b32.xlu0 %v4146, %s4476
        %v4478 = vpop.permute.xlu0 %4477
        %s4480 = sor.u32 256, 40
        %4481 = vbcast.lane.b32.xlu0 %v4154, %s4480
        %v4482 = vpop.permute.xlu0 %4481
        %s4484 = sor.u32 256, 40
        %4485 = vbcast.lane.b32.xlu0 %v4162, %s4484
        %v4486 = vpop.permute.xlu0 %4485
        %s4488 = sor.u32 256, 40
        %4489 = vbcast.lane.b32.xlu0 %v4170, %s4488
        %v4490 = vpop.permute.xlu0 %4489
        %s4492 = sor.u32 256, 40
        %4493 = vbcast.lane.b32.xlu0 %v4178, %s4492
        %v4494 = vpop.permute.xlu0 %4493
        %s4496 = sor.u32 256, 40
        %4497 = vbcast.lane.b32.xlu0 %v4186, %s4496
        %v4498 = vpop.permute.xlu0 %4497
        %s4500 = sor.u32 256, 40
        %4501 = vbcast.lane.b32.xlu0 %v4194, %s4500
        %v4502 = vpop.permute.xlu0 %4501
        %s4504 = sor.u32 256, 40
        %4505 = vbcast.lane.b32.xlu0 %v4202, %s4504
        %v4506 = vpop.permute.xlu0 %4505
        %s4508 = sor.u32 256, 40
        %4509 = vbcast.lane.b32.xlu0 %v4210, %s4508
        %v4510 = vpop.permute.xlu0 %4509
        %s4512 = sor.u32 256, 40
        %4513 = vbcast.lane.b32.xlu0 %v4218, %s4512
        %v4514 = vpop.permute.xlu0 %4513
        %s4516 = sor.u32 256, 40
        %4517 = vbcast.lane.b32.xlu0 %v4226, %s4516
        %v4518 = vpop.permute.xlu0 %4517
        %s4520 = sor.u32 256, 40
        %4521 = vbcast.lane.b32.xlu0 %v4234, %s4520
        %v4522 = vpop.permute.xlu0 %4521
        %s4524 = sor.u32 256, 40
        %4525 = vbcast.lane.b32.xlu0 %v4242, %s4524
        %v4526 = vpop.permute.xlu0 %4525
        %s4528 = sor.u32 256, 40
        %4529 = vbcast.lane.b32.xlu0 %v4250, %s4528
        %v4530 = vpop.permute.xlu0 %4529
        %s4532 = sor.u32 256, 40
        %4533 = vbcast.lane.b32.xlu0 %v4258, %s4532
        %v4534 = vpop.permute.xlu0 %4533
        %v4535 = vmul.f32 %v4455, %v4474
        %v4536 = vmul.f32 %v4456, %v4478
        %v4537 = vmul.f32 %v4457, %v4482
        %v4538 = vmul.f32 %v4458, %v4486
        %v4539 = vmul.f32 %v4459, %v4490
        %v4540 = vmul.f32 %v4460, %v4494
        %v4541 = vmul.f32 %v4461, %v4498
        %v4542 = vmul.f32 %v4462, %v4502
        %v4543 = vmul.f32 %v4463, %v4506
        %v4544 = vmul.f32 %v4464, %v4510
        %v4545 = vmul.f32 %v4465, %v4514
        %v4546 = vmul.f32 %v4466, %v4518
        %v4547 = vmul.f32 %v4467, %v4522
        %v4548 = vmul.f32 %v4468, %v4526
        %v4549 = vmul.f32 %v4469, %v4530
        %v4550 = vmul.f32 %v4470, %v4534
        %v4551 = vsel %vm451, %v4535, 0.0
        %v4552 = vrot.slane %v4551, 4
        %v4553 = vadd.f32 %v4551, %v4552
        %v4554 = vrot.slane %v4553, 2
        %v4555 = vadd.f32 %v4553, %v4554
        %v4556 = vrot.slane %v4555, 1
        %v4557 = vadd.f32 %v4555, %v4556
        %v4558 = vsel %vm451, %v4536, 0.0
        %v4559 = vrot.slane %v4558, 4
        %v4560 = vadd.f32 %v4558, %v4559
        %v4561 = vrot.slane %v4560, 2
        %v4562 = vadd.f32 %v4560, %v4561
        %v4563 = vrot.slane %v4562, 1
        %v4564 = vadd.f32 %v4562, %v4563
        %v4565 = vsel %vm451, %v4537, 0.0
        %v4566 = vrot.slane %v4565, 4
        %v4567 = vadd.f32 %v4565, %v4566
        %v4568 = vrot.slane %v4567, 2
        %v4569 = vadd.f32 %v4567, %v4568
        %v4570 = vrot.slane %v4569, 1
        %v4571 = vadd.f32 %v4569, %v4570
        %v4572 = vsel %vm451, %v4538, 0.0
        %v4573 = vrot.slane %v4572, 4
        %v4574 = vadd.f32 %v4572, %v4573
        %v4575 = vrot.slane %v4574, 2
        %v4576 = vadd.f32 %v4574, %v4575
        %v4577 = vrot.slane %v4576, 1
        %v4578 = vadd.f32 %v4576, %v4577
        %v4579 = vsel %vm451, %v4539, 0.0
        %v4580 = vrot.slane %v4579, 4
        %v4581 = vadd.f32 %v4579, %v4580
        %v4582 = vrot.slane %v4581, 2
        %v4583 = vadd.f32 %v4581, %v4582
        %v4584 = vrot.slane %v4583, 1
        %v4585 = vadd.f32 %v4583, %v4584
        %v4586 = vsel %vm451, %v4540, 0.0
        %v4587 = vrot.slane %v4586, 4
        %v4588 = vadd.f32 %v4586, %v4587
        %v4589 = vrot.slane %v4588, 2
        %v4590 = vadd.f32 %v4588, %v4589
        %v4591 = vrot.slane %v4590, 1
        %v4592 = vadd.f32 %v4590, %v4591
        %v4593 = vsel %vm451, %v4541, 0.0
        %v4594 = vrot.slane %v4593, 4
        %v4595 = vadd.f32 %v4593, %v4594
        %v4596 = vrot.slane %v4595, 2
        %v4597 = vadd.f32 %v4595, %v4596
        %v4598 = vrot.slane %v4597, 1
        %v4599 = vadd.f32 %v4597, %v4598
        %v4600 = vsel %vm451, %v4542, 0.0
        %v4601 = vrot.slane %v4600, 4
        %v4602 = vadd.f32 %v4600, %v4601
        %v4603 = vrot.slane %v4602, 2
        %v4604 = vadd.f32 %v4602, %v4603
        %v4605 = vrot.slane %v4604, 1
        %v4606 = vadd.f32 %v4604, %v4605
        %v4607 = vsel %vm451, %v4543, 0.0
        %v4608 = vrot.slane %v4607, 4
        %v4609 = vadd.f32 %v4607, %v4608
        %v4610 = vrot.slane %v4609, 2
        %v4611 = vadd.f32 %v4609, %v4610
        %v4612 = vrot.slane %v4611, 1
        %v4613 = vadd.f32 %v4611, %v4612
        %v4614 = vsel %vm451, %v4544, 0.0
        %v4615 = vrot.slane %v4614, 4
        %v4616 = vadd.f32 %v4614, %v4615
        %v4617 = vrot.slane %v4616, 2
        %v4618 = vadd.f32 %v4616, %v4617
        %v4619 = vrot.slane %v4618, 1
        %v4620 = vadd.f32 %v4618, %v4619
        %v4621 = vsel %vm451, %v4545, 0.0
        %v4622 = vrot.slane %v4621, 4
        %v4623 = vadd.f32 %v4621, %v4622
        %v4624 = vrot.slane %v4623, 2
        %v4625 = vadd.f32 %v4623, %v4624
        %v4626 = vrot.slane %v4625, 1
        %v4627 = vadd.f32 %v4625, %v4626
        %v4628 = vsel %vm451, %v4546, 0.0
        %v4629 = vrot.slane %v4628, 4
        %v4630 = vadd.f32 %v4628, %v4629
        %v4631 = vrot.slane %v4630, 2
        %v4632 = vadd.f32 %v4630, %v4631
        %v4633 = vrot.slane %v4632, 1
        %v4634 = vadd.f32 %v4632, %v4633
        %v4635 = vsel %vm451, %v4547, 0.0
        %v4636 = vrot.slane %v4635, 4
        %v4637 = vadd.f32 %v4635, %v4636
        %v4638 = vrot.slane %v4637, 2
        %v4639 = vadd.f32 %v4637, %v4638
        %v4640 = vrot.slane %v4639, 1
        %v4641 = vadd.f32 %v4639, %v4640
        %v4642 = vsel %vm451, %v4548, 0.0
        %v4643 = vrot.slane %v4642, 4
        %v4644 = vadd.f32 %v4642, %v4643
        %v4645 = vrot.slane %v4644, 2
        %v4646 = vadd.f32 %v4644, %v4645
        %v4647 = vrot.slane %v4646, 1
        %v4648 = vadd.f32 %v4646, %v4647
        %v4649 = vsel %vm451, %v4549, 0.0
        %v4650 = vrot.slane %v4649, 4
        %v4651 = vadd.f32 %v4649, %v4650
        %v4652 = vrot.slane %v4651, 2
        %v4653 = vadd.f32 %v4651, %v4652
        %v4654 = vrot.slane %v4653, 1
        %v4655 = vadd.f32 %v4653, %v4654
        %v4656 = vsel %vm451, %v4550, 0.0
        %v4657 = vrot.slane %v4656, 4
        %v4658 = vadd.f32 %v4656, %v4657
        %v4659 = vrot.slane %v4658, 2
        %v4660 = vadd.f32 %v4658, %v4659
        %v4661 = vrot.slane %v4660, 1
        %v4662 = vadd.f32 %v4660, %v4661
        %s4663 = scalar_lea.vmem %s6, 1
        %v4664 = vld [vmem:[%s4663] sm:$0x1]
        %v4666 = vlaneseq
        %v4667 = vshrl.u32 %v4666, 7
        %v4668 = vsub.s32 0, %v4667
        %v4669 = vrot.slane %v4664, %v4668
        %v4671 = vmul.f32 %v4669, %v3673
        %v4672 = vmul.f32 %v4669, %v3675
        %v4675 = vrot.slane %v4671, 1
        %v4676 = vrot.slane %v4671, 2
        %v4677 = vrot.slane %v4671, 3
        %v4678 = vrot.slane %v4671, 4
        %v4679 = vrot.slane %v4671, 5
        %v4680 = vrot.slane %v4671, 6
        %v4681 = vrot.slane %v4671, 7
        %v4682 = vrot.slane %v4672, 1
        %v4683 = vrot.slane %v4672, 2
        %v4684 = vrot.slane %v4672, 3
        %v4685 = vrot.slane %v4672, 4
        %v4686 = vrot.slane %v4672, 5
        %v4687 = vrot.slane %v4672, 6
        %v4688 = vrot.slane %v4672, 7
        %v4705 = vadd.f32 %v4557, %v4671
        %v4706 = vadd.f32 %v4564, %v4675
        %v4707 = vadd.f32 %v4571, %v4676
        %v4708 = vadd.f32 %v4578, %v4677
        %v4709 = vadd.f32 %v4585, %v4678
        %v4710 = vadd.f32 %v4592, %v4679
        %v4711 = vadd.f32 %v4599, %v4680
        %v4712 = vadd.f32 %v4606, %v4681
        %v4713 = vadd.f32 %v4613, %v4672
        %v4714 = vadd.f32 %v4620, %v4682
        %v4715 = vadd.f32 %v4627, %v4683
        %v4716 = vadd.f32 %v4634, %v4684
        %v4717 = vadd.f32 %v4641, %v4685
        %v4718 = vadd.f32 %v4648, %v4686
        %v4719 = vadd.f32 %v4655, %v4687
        %v4720 = vadd.f32 %v4662, %v4688
        %v4723 = vrot.slane %v3201, 1
        %v4724 = vrot.slane %v3201, 2
        %v4725 = vrot.slane %v3201, 3
        %v4726 = vrot.slane %v3201, 4
        %v4727 = vrot.slane %v3201, 5
        %v4728 = vrot.slane %v3201, 6
        %v4729 = vrot.slane %v3201, 7
        %v4730 = vrot.slane %v3202, 1
        %v4731 = vrot.slane %v3202, 2
        %v4732 = vrot.slane %v3202, 3
        %v4733 = vrot.slane %v3202, 4
        %v4734 = vrot.slane %v3202, 5
        %v4735 = vrot.slane %v3202, 6
        %v4736 = vrot.slane %v3202, 7
        %v4753 = vmul.f32 %v4705, %v3201
        %v4754 = vmul.f32 %v4706, %v4723
        %v4755 = vmul.f32 %v4707, %v4724
        %v4756 = vmul.f32 %v4708, %v4725
        %v4757 = vmul.f32 %v4709, %v4726
        %v4758 = vmul.f32 %v4710, %v4727
        %v4759 = vmul.f32 %v4711, %v4728
        %v4760 = vmul.f32 %v4712, %v4729
        %v4761 = vmul.f32 %v4713, %v3202
        %v4762 = vmul.f32 %v4714, %v4730
        %v4763 = vmul.f32 %v4715, %v4731
        %v4764 = vmul.f32 %v4716, %v4732
        %v4765 = vmul.f32 %v4717, %v4733
        %v4766 = vmul.f32 %v4718, %v4734
        %v4767 = vmul.f32 %v4719, %v4735
        %v4768 = vmul.f32 %v4720, %v4736
        %s4769 = scalar_lea.vmem [#allocation12], 32
        %v4770 = vld [vmem:[%s4769] sm:$0xff]
        %v4771 = vld [vmem:[%s4769 + $0x8] sm:$0xff]
        %v4772 = vld [vmem:[%s4769 + $0x10] sm:$0xff]
        %v4773 = vld [vmem:[%s4769 + $0x18] sm:$0xff]
        %v4790 = vrot.slane %v4754, 7
        %v4791 = vsel %vm2561, %v4790, %v4753
        %v4792 = vrot.slane %v4755, 6
        %v4793 = vsel %vm2564, %v4792, %v4791
        %v4794 = vrot.slane %v4756, 5
        %v4795 = vsel %vm2567, %v4794, %v4793
        %v4796 = vrot.slane %v4757, 4
        %v4797 = vsel %vm2570, %v4796, %v4795
        %v4798 = vrot.slane %v4758, 3
        %v4799 = vsel %vm2573, %v4798, %v4797
        %v4800 = vrot.slane %v4759, 2
        %v4801 = vsel %vm2576, %v4800, %v4799
        %v4802 = vrot.slane %v4760, 1
        %v4803 = vsel %vm2579, %v4802, %v4801
        %v4804 = vrot.slane %v4762, 7
        %v4805 = vsel %vm2561, %v4804, %v4761
        %v4806 = vrot.slane %v4763, 6
        %v4807 = vsel %vm2564, %v4806, %v4805
        %v4808 = vrot.slane %v4764, 5
        %v4809 = vsel %vm2567, %v4808, %v4807
        %v4810 = vrot.slane %v4765, 4
        %v4811 = vsel %vm2570, %v4810, %v4809
        %v4812 = vrot.slane %v4766, 3
        %v4813 = vsel %vm2573, %v4812, %v4811
        %v4814 = vrot.slane %v4767, 2
        %v4815 = vsel %vm2576, %v4814, %v4813
        %v4816 = vrot.slane %v4768, 1
        %v4817 = vsel %vm2579, %v4816, %v4815
        %v4818 = vsel %vm451, %v4803, 0
        %v4820 = vsel %vm451, %v4817, 0
        %4822 = vmatprep.subr.mxu0 0.0
        %4823 = vmatpush1.msra.mxu0 0.0
        %4824 = vmatprep.subr.mxu0 0.0
        %4825 = vmatpush1.msra.mxu0 0.0
        %4826 = vmatprep.subr.mxu0 0.0
        %4827 = vmatpush1.msra.mxu0 0.0
        %4828 = vmatprep.subr.mxu0 0.0
        %4829 = vmatpush1.msra.mxu0 0.0
        %4830 = vmatprep.subr.mxu0 0.0
        %4831 = vmatpush1.msra.mxu0 0.0
        %4832 = vmatprep.subr.mxu0 0.0
        %4833 = vmatpush1.msra.mxu0 0.0
        %4834 = vmatprep.subr.mxu0 0.0
        %4835 = vmatpush1.msra.mxu0 0.0
        %4836 = vmatprep.subr.mxu0 0.0
        %4837 = vmatpush1.msra.mxu0 0.0
        %4838 = vmatprep.subr.mxu0 0.0
        %4839 = vmatpush1.msra.mxu0 0.0
        %4840 = vmatprep.subr.mxu0 0.0
        %4841 = vmatpush1.msra.mxu0 0.0
        %4842 = vmatprep.subr.mxu0 0.0
        %4843 = vmatpush1.msra.mxu0 0.0
        %4844 = vmatprep.subr.mxu0 0.0
        %4845 = vmatpush1.msra.mxu0 0.0
        %4846 = vmatprep.subr.mxu0 0.0
        %4847 = vmatpush1.msra.mxu0 %v4773
        %4848 = vmatprep.subr.mxu0 0.0
        %4849 = vmatpush1.msra.mxu0 %v4772
        %4850 = vmatprep.subr.mxu0 0.0
        %4851 = vmatpush1.msra.mxu0 %v4771
        %4852 = vmatprep.subr.mxu0 0.0
        %4853 = vmatpush1.msra.mxu0 %v4770
        %4854 = vmatprep.subr.mxu0 0.0
        %4855 = vmatpush2.msra.mxu0 0.0
        %4856 = vmatprep.subr.mxu0 0.0
        %4857 = vmatpush2.msra.mxu0 0.0
        %4858 = vmatprep.subr.mxu0 0.0
        %4859 = vmatpush2.msra.mxu0 0.0
        %4860 = vmatprep.subr.mxu0 0.0
        %4861 = vmatpush2.msra.mxu0 0.0
        %4862 = vmatprep.subr.mxu0 0.0
        %4863 = vmatpush2.msra.mxu0 0.0
        %4864 = vmatprep.subr.mxu0 0.0
        %4865 = vmatpush2.msra.mxu0 0.0
        %4866 = vmatprep.subr.mxu0 0.0
        %4867 = vmatpush2.msra.mxu0 0.0
        %4868 = vmatprep.subr.mxu0 0.0
        %4869 = vmatpush2.msra.mxu0 0.0
        %4870 = vmatprep.subr.mxu0 0.0
        %4871 = vmatpush2.msra.mxu0 0.0
        %4872 = vmatprep.subr.mxu0 0.0
        %4873 = vmatpush2.msra.mxu0 0.0
        %4874 = vmatprep.subr.mxu0 0.0
        %4875 = vmatpush2.msra.mxu0 0.0
        %4876 = vmatprep.subr.mxu0 0.0
        %4877 = vmatpush2.msra.mxu0 0.0
        %4878 = vmatprep.subr.mxu0 0.0
        %4879 = vmatpush2.msra.mxu0 0.0
        %4880 = vmatprep.subr.mxu0 0.0
        %4881 = vmatpush2.msra.mxu0 0.0
        %4882 = vmatprep.subr.mxu0 0.0
        %4883 = vmatpush2.msra.mxu0 0.0
        %4884 = vmatprep.subr.mxu0 0.0
        %4885 = vmatpush2.msra.mxu0 0.0
        %4886 = vmatprep.mubr.f32.mxu0 0.0
        %4887 = vmatmul.mubr.f32.gmra.mxu0 %v4818
        %v4888 = vpop.f32.mrf.mxu0
        %v4889 = vadd.f32 0.0, %v4888
        %v4890 = vpop.f32.mrf.mxu0
        %4891 = vmatprep.mubr.f32.mxu0 0.0
        %4892 = vmatmul.mubr.f32.gmra.mxu0 %v4820
        %v4893 = vpop.f32.mrf.mxu0
        %v4894 = vadd.f32 0.0, %v4893
        %v4895 = vpop.f32.mrf.mxu0
        %4896 = vdwg.mxu0
        %v4897 = vadd.f32 %v2683, %v4889
        %v4898 = vadd.f32 %v2684, %v4894
        %s4899 = scalar_lea.vmem %s8, 1
        %v4900 = vld [vmem:[%s4899] sm:$0x1]
        %v4902 = vlaneseq
        %v4903 = vshrl.u32 %v4902, 7
        %v4904 = vsub.s32 0, %v4903
        %v4905 = vrot.slane %v4900, %v4904
        %v4907 = vadd.f32 %v4897, %v4905
        %v4908 = vadd.f32 %v4898, %v4905
        %s4909 = sld [smem:[#allocation14 + $0x8]]
        %s4910 = sld [smem:[#allocation14 + $0x9]]
        %v4911 = vand.u32 2147483647, %v4907
        %vm4912 = vcmp.le.f32.partialorder %v4911, 0.7853982
        %vm4913 = vcmp.lt.s32.totalorder %v4907, 0
        %v4914 = vand.u32 %v4907, 2139095040
        %v4915 = vshrl.u32 %v4914, 23
        %v4916 = vsub.s32 %v4915, 127
        %v4917 = vand.u32 2147483647, %v4907
        %v4918 = vand.u32 %v4917, 8388607
        %v4919 = vor.u32 %v4918, 8388608
        %v4920 = vsub.s32 0, %v4919
        %v4921 = vadd.s32 %v4916, 1
        %vm4922 = vcmp.gt.s32.totalorder %v4921, 0
        %v4923 = vsel %vm4922, %v4921, 0
        %v4924 = vshrl.u32 %v4923, 5
        %v4925 = vand.u32 %v4923, 31
        %v4926 = vsub.s32 32, %v4925
        %v4927 = vshrl.u32 683565275, %v4926
        %v4928 = vshll.u32 683565275, %v4925
        %v4929 = vshrl.u32 2475754826, %v4926
        %v4930 = vor.u32 %v4928, %v4929
        %v4931 = vshll.u32 2475754826, %v4925
        %v4932 = vshrl.u32 2131351028, %v4926
        %v4933 = vor.u32 %v4931, %v4932
        %v4934 = vshll.u32 2131351028, %v4925
        %v4935 = vshrl.u32 2102212464, %v4926
        %v4936 = vor.u32 %v4934, %v4935
        %v4937 = vshll.u32 2102212464, %v4925
        %v4938 = vshrl.u32 920167782, %v4926
        %v4939 = vor.u32 %v4937, %v4938
        %v4940 = vshll.u32 920167782, %v4925
        %v4941 = vshrl.u32 1326507024, %v4926
        %v4942 = vor.u32 %v4940, %v4941
        %vm4943 = vcmp.lt.s32.totalorder %v4924, 1
        %vm4944 = vcmp.lt.s32.totalorder %v4924, 2
        %vm4945 = vcmp.lt.s32.totalorder %v4924, 3
        %vm4946 = vcmp.lt.s32.totalorder %v4924, 4
        %v4947 = vsel %vm4943, %v4927, %v4930
        %v4948 = vsel %vm4946, %v4936, 2102212464
        %v4949 = vsel %vm4945, %v4933, %v4948
        %v4950 = vsel %vm4944, %v4947, %v4949
        %v4951 = vsel %vm4943, %v4930, %v4933
        %v4952 = vsel %vm4946, %v4939, 920167782
        %v4953 = vsel %vm4945, %v4936, %v4952
        %v4954 = vsel %vm4944, %v4951, %v4953
        %v4955 = vsel %vm4943, %v4933, %v4936
        %v4956 = vsel %vm4946, %v4942, 1326507024
        %v4957 = vsel %vm4945, %v4939, %v4956
        %v4958 = vsel %vm4944, %v4955, %v4957
        %v4959 = vshll.u32 %v4919, 8
        %v4960 = vmul.u32.u64.compose %v4959, %v4958
        %v4961 = vextract.low.u32 %v4960
        %v4962 = vextract.high.u32 %v4960
        %v4963 = vmul.u32.u64.compose %v4959, %v4954
        %v4964 = vextract.low.u32 %v4963
        %v4965 = vextract.high.u32 %v4963
        %v4966 = vmul.u32 %v4959, %v4950
        %v4967 = vadd.s32 %v4962, %v4964
        %vm4968 = vc.u32 %v4962, %v4964
        %v4969 = vadd.s32 %v4965, 1
        %v4970 = vsel %vm4968, %v4969, %v4965
        %v4971 = vadd.s32 %v4966, %v4970
        %v4972 = vadd.s32 %v4971, 536870912
        %v4973 = vshrl.u32 %v4972, 30
        %v4974 = vshll.u32 %v4973, 30
        %v4975 = vsub.s32 %v4971, %v4974
        %vm4976 = vcmp.lt.s32.totalorder %v4975, 0
        %v4977 = vsub.s32 0, %v4975
        %v4978 = vsel %vm4976, %v4977, %v4975
        %v4979 = vclz %v4978
        %v4980 = vsub.s32 %v4979, 2
        %vm4981 = vcmp.gt.s32.totalorder 0, %v4980
        %v4982 = vsel %vm4981, 0, %v4980
        %v4983 = vsub.s32 32, %v4982
        %v4984 = vshll.u32 %v4975, %v4982
        %v4985 = vshrl.u32 %v4967, %v4983
        %v4986 = vor.u32 %v4984, %v4985
        %v4987 = vsub.s32 4294967266, %v4982
        %v4988 = vadd.s32 %v4987, 127
        %v4989 = vshll.u32 %v4988, 23
        %v4990 = vor.u32 4788187, %v4989
        %v4991 = vand.u32 2147483647, %v4990
        %v4993 = vcvt.s32.f32 %v4986
        %v4994 = vmul.f32 %v4993, %v4991
        %v4995 = vxor.u32 %v4994, 2147483648
        %v4996 = vsel %vm4913, %v4995, %v4994
        %v4997 = vsub.s32 4, %v4973
        %v4998 = vsel %vm4913, %v4997, %v4973
        %v4999 = vsel %vm4912, %v4907, %v4996
        %v5000 = vsel %vm4912, 0, %v4998
        %v5001 = vcosq.f32.pop %v4999
        %v5002 = vsinq.f32.pop %v4999
        %vm5003 = vweird.f32 %v4907
        %v5004 = vadd.s32 %v5000, 3
        %v5005 = vand.u32 %v5004, 3
        %vm5006 = vcmp.lt.s32.totalorder %v5005, 2
        %vm5007 = vcmp.eq.s32.totalorder %v5005, 0
        %v5008 = vxor.u32 %v5002, 2147483648
        %v5009 = vsel %vm5007, %v5001, %v5008
        %vm5010 = vcmp.eq.s32.totalorder %v5005, 2
        %v5011 = vxor.u32 %v5001, 2147483648
        %v5012 = vsel %vm5010, %v5011, %v5002
        %v5013 = vsel %vm5006, %v5009, %v5012
        %v5014 = vsel %vm5003, nan, %v5013
        %v5015 = vand.u32 2147483647, %v4908
        %vm5016 = vcmp.le.f32.partialorder %v5015, 0.7853982
        %vm5017 = vcmp.lt.s32.totalorder %v4908, 0
        %v5018 = vand.u32 %v4908, 2139095040
        %v5019 = vshrl.u32 %v5018, 23
        %v5020 = vsub.s32 %v5019, 127
        %v5021 = vand.u32 2147483647, %v4908
        %v5022 = vand.u32 %v5021, 8388607
        %v5023 = vor.u32 %v5022, 8388608
        %v5024 = vsub.s32 0, %v5023
        %v5025 = vadd.s32 %v5020, 1
        %vm5026 = vcmp.gt.s32.totalorder %v5025, 0
        %v5027 = vsel %vm5026, %v5025, 0
        %v5028 = vshrl.u32 %v5027, 5
        %v5029 = vand.u32 %v5027, 31
        %v5030 = vsub.s32 32, %v5029
        %v5031 = vshrl.u32 683565275, %v5030
        %v5032 = vshll.u32 683565275, %v5029
        %v5033 = vshrl.u32 2475754826, %v5030
        %v5034 = vor.u32 %v5032, %v5033
        %v5035 = vshll.u32 2475754826, %v5029
        %v5036 = vshrl.u32 2131351028, %v5030
        %v5037 = vor.u32 %v5035, %v5036
        %v5038 = vshll.u32 2131351028, %v5029
        %v5039 = vshrl.u32 2102212464, %v5030
        %v5040 = vor.u32 %v5038, %v5039
        %v5041 = vshll.u32 2102212464, %v5029
        %v5042 = vshrl.u32 920167782, %v5030
        %v5043 = vor.u32 %v5041, %v5042
        %v5044 = vshll.u32 920167782, %v5029
        %v5045 = vshrl.u32 1326507024, %v5030
        %v5046 = vor.u32 %v5044, %v5045
        %vm5047 = vcmp.lt.s32.totalorder %v5028, 1
        %vm5048 = vcmp.lt.s32.totalorder %v5028, 2
        %vm5049 = vcmp.lt.s32.totalorder %v5028, 3
        %vm5050 = vcmp.lt.s32.totalorder %v5028, 4
        %v5051 = vsel %vm5047, %v5031, %v5034
        %v5052 = vsel %vm5050, %v5040, 2102212464
        %v5053 = vsel %vm5049, %v5037, %v5052
        %v5054 = vsel %vm5048, %v5051, %v5053
        %v5055 = vsel %vm5047, %v5034, %v5037
        %v5056 = vsel %vm5050, %v5043, 920167782
        %v5057 = vsel %vm5049, %v5040, %v5056
        %v5058 = vsel %vm5048, %v5055, %v5057
        %v5059 = vsel %vm5047, %v5037, %v5040
        %v5060 = vsel %vm5050, %v5046, 1326507024
        %v5061 = vsel %vm5049, %v5043, %v5060
        %v5062 = vsel %vm5048, %v5059, %v5061
        %v5063 = vshll.u32 %v5023, 8
        %v5064 = vmul.u32.u64.compose %v5063, %v5062
        %v5065 = vextract.low.u32 %v5064
        %v5066 = vextract.high.u32 %v5064
        %v5067 = vmul.u32.u64.compose %v5063, %v5058
        %v5068 = vextract.low.u32 %v5067
        %v5069 = vextract.high.u32 %v5067
        %v5070 = vmul.u32 %v5063, %v5054
        %v5071 = vadd.s32 %v5066, %v5068
        %vm5072 = vc.u32 %v5066, %v5068
        %v5073 = vadd.s32 %v5069, 1
        %v5074 = vsel %vm5072, %v5073, %v5069
        %v5075 = vadd.s32 %v5070, %v5074
        %v5076 = vadd.s32 %v5075, 536870912
        %v5077 = vshrl.u32 %v5076, 30
        %v5078 = vshll.u32 %v5077, 30
        %v5079 = vsub.s32 %v5075, %v5078
        %vm5080 = vcmp.lt.s32.totalorder %v5079, 0
        %v5081 = vsub.s32 0, %v5079
        %v5082 = vsel %vm5080, %v5081, %v5079
        %v5083 = vclz %v5082
        %v5084 = vsub.s32 %v5083, 2
        %vm5085 = vcmp.gt.s32.totalorder 0, %v5084
        %v5086 = vsel %vm5085, 0, %v5084
        %v5087 = vsub.s32 32, %v5086
        %v5088 = vshll.u32 %v5079, %v5086
        %v5089 = vshrl.u32 %v5071, %v5087
        %v5090 = vor.u32 %v5088, %v5089
        %v5091 = vsub.s32 4294967266, %v5086
        %v5092 = vadd.s32 %v5091, 127
        %v5093 = vshll.u32 %v5092, 23
        %v5094 = vor.u32 4788187, %v5093
        %v5095 = vand.u32 2147483647, %v5094
        %v5097 = vcvt.s32.f32 %v5090
        %v5098 = vmul.f32 %v5097, %v5095
        %v5099 = vxor.u32 %v5098, 2147483648
        %v5100 = vsel %vm5017, %v5099, %v5098
        %v5101 = vsub.s32 4, %v5077
        %v5102 = vsel %vm5017, %v5101, %v5077
        %v5103 = vsel %vm5016, %v4908, %v5100
        %v5104 = vsel %vm5016, 0, %v5102
        %v5105 = vcosq.f32.pop %v5103
        %v5106 = vsinq.f32.pop %v5103
        %vm5107 = vweird.f32 %v4908
        %v5108 = vadd.s32 %v5104, 3
        %v5109 = vand.u32 %v5108, 3
        %vm5110 = vcmp.lt.s32.totalorder %v5109, 2
        %vm5111 = vcmp.eq.s32.totalorder %v5109, 0
        %v5112 = vxor.u32 %v5106, 2147483648
        %v5113 = vsel %vm5111, %v5105, %v5112
        %vm5114 = vcmp.eq.s32.totalorder %v5109, 2
        %v5115 = vxor.u32 %v5105, 2147483648
        %v5116 = vsel %vm5114, %v5115, %v5106
        %v5117 = vsel %vm5110, %v5113, %v5116
        %v5118 = vsel %vm5107, nan, %v5117
        %v5119 = vstv %s4909
        %v5120 = vmul.f32 %v5119, %v5014
        %v5121 = vmul.f32 %v5119, %v5118
        %v5122 = vand.u32 2147483647, %v4907
        %vm5123 = vcmp.le.f32.partialorder %v5122, 0.7853982
        %vm5124 = vcmp.lt.s32.totalorder %v4907, 0
        %v5125 = vand.u32 %v4907, 2139095040
        %v5126 = vshrl.u32 %v5125, 23
        %v5127 = vsub.s32 %v5126, 127
        %v5128 = vand.u32 2147483647, %v4907
        %v5129 = vand.u32 %v5128, 8388607
        %v5130 = vor.u32 %v5129, 8388608
        %v5131 = vsub.s32 0, %v5130
        %v5132 = vadd.s32 %v5127, 1
        %vm5133 = vcmp.gt.s32.totalorder %v5132, 0
        %v5134 = vsel %vm5133, %v5132, 0
        %v5135 = vshrl.u32 %v5134, 5
        %v5136 = vand.u32 %v5134, 31
        %v5137 = vsub.s32 32, %v5136
        %v5138 = vshrl.u32 683565275, %v5137
        %v5139 = vshll.u32 683565275, %v5136
        %v5140 = vshrl.u32 2475754826, %v5137
        %v5141 = vor.u32 %v5139, %v5140
        %v5142 = vshll.u32 2475754826, %v5136
        %v5143 = vshrl.u32 2131351028, %v5137
        %v5144 = vor.u32 %v5142, %v5143
        %v5145 = vshll.u32 2131351028, %v5136
        %v5146 = vshrl.u32 2102212464, %v5137
        %v5147 = vor.u32 %v5145, %v5146
        %v5148 = vshll.u32 2102212464, %v5136
        %v5149 = vshrl.u32 920167782, %v5137
        %v5150 = vor.u32 %v5148, %v5149
        %v5151 = vshll.u32 920167782, %v5136
        %v5152 = vshrl.u32 1326507024, %v5137
        %v5153 = vor.u32 %v5151, %v5152
        %vm5154 = vcmp.lt.s32.totalorder %v5135, 1
        %vm5155 = vcmp.lt.s32.totalorder %v5135, 2
        %vm5156 = vcmp.lt.s32.totalorder %v5135, 3
        %vm5157 = vcmp.lt.s32.totalorder %v5135, 4
        %v5158 = vsel %vm5154, %v5138, %v5141
        %v5159 = vsel %vm5157, %v5147, 2102212464
        %v5160 = vsel %vm5156, %v5144, %v5159
        %v5161 = vsel %vm5155, %v5158, %v5160
        %v5162 = vsel %vm5154, %v5141, %v5144
        %v5163 = vsel %vm5157, %v5150, 920167782
        %v5164 = vsel %vm5156, %v5147, %v5163
        %v5165 = vsel %vm5155, %v5162, %v5164
        %v5166 = vsel %vm5154, %v5144, %v5147
        %v5167 = vsel %vm5157, %v5153, 1326507024
        %v5168 = vsel %vm5156, %v5150, %v5167
        %v5169 = vsel %vm5155, %v5166, %v5168
        %v5170 = vshll.u32 %v5130, 8
        %v5171 = vmul.u32.u64.compose %v5170, %v5169
        %v5172 = vextract.low.u32 %v5171
        %v5173 = vextract.high.u32 %v5171
        %v5174 = vmul.u32.u64.compose %v5170, %v5165
        %v5175 = vextract.low.u32 %v5174
        %v5176 = vextract.high.u32 %v5174
        %v5177 = vmul.u32 %v5170, %v5161
        %v5178 = vadd.s32 %v5173, %v5175
        %vm5179 = vc.u32 %v5173, %v5175
        %v5180 = vadd.s32 %v5176, 1
        %v5181 = vsel %vm5179, %v5180, %v5176
        %v5182 = vadd.s32 %v5177, %v5181
        %v5183 = vadd.s32 %v5182, 536870912
        %v5184 = vshrl.u32 %v5183, 30
        %v5185 = vshll.u32 %v5184, 30
        %v5186 = vsub.s32 %v5182, %v5185
        %vm5187 = vcmp.lt.s32.totalorder %v5186, 0
        %v5188 = vsub.s32 0, %v5186
        %v5189 = vsel %vm5187, %v5188, %v5186
        %v5190 = vclz %v5189
        %v5191 = vsub.s32 %v5190, 2
        %vm5192 = vcmp.gt.s32.totalorder 0, %v5191
        %v5193 = vsel %vm5192, 0, %v5191
        %v5194 = vsub.s32 32, %v5193
        %v5195 = vshll.u32 %v5186, %v5193
        %v5196 = vshrl.u32 %v5178, %v5194
        %v5197 = vor.u32 %v5195, %v5196
        %v5198 = vsub.s32 4294967266, %v5193
        %v5199 = vadd.s32 %v5198, 127
        %v5200 = vshll.u32 %v5199, 23
        %v5201 = vor.u32 4788187, %v5200
        %v5202 = vand.u32 2147483647, %v5201
        %v5204 = vcvt.s32.f32 %v5197
        %v5205 = vmul.f32 %v5204, %v5202
        %v5206 = vxor.u32 %v5205, 2147483648
        %v5207 = vsel %vm5124, %v5206, %v5205
        %v5208 = vsub.s32 4, %v5184
        %v5209 = vsel %vm5124, %v5208, %v5184
        %v5210 = vsel %vm5123, %v4907, %v5207
        %v5211 = vsel %vm5123, 0, %v5209
        %v5212 = vcosq.f32.pop %v5210
        %v5213 = vsinq.f32.pop %v5210
        %vm5214 = vweird.f32 %v4907
        %v5215 = vand.u32 %v5211, 3
        %vm5216 = vcmp.lt.s32.totalorder %v5215, 2
        %vm5217 = vcmp.eq.s32.totalorder %v5215, 0
        %v5218 = vxor.u32 %v5213, 2147483648
        %v5219 = vsel %vm5217, %v5212, %v5218
        %vm5220 = vcmp.eq.s32.totalorder %v5215, 2
        %v5221 = vxor.u32 %v5212, 2147483648
        %v5222 = vsel %vm5220, %v5221, %v5213
        %v5223 = vsel %vm5216, %v5219, %v5222
        %v5224 = vsel %vm5214, nan, %v5223
        %v5225 = vand.u32 2147483647, %v4908
        %vm5226 = vcmp.le.f32.partialorder %v5225, 0.7853982
        %vm5227 = vcmp.lt.s32.totalorder %v4908, 0
        %v5228 = vand.u32 %v4908, 2139095040
        %v5229 = vshrl.u32 %v5228, 23
        %v5230 = vsub.s32 %v5229, 127
        %v5231 = vand.u32 2147483647, %v4908
        %v5232 = vand.u32 %v5231, 8388607
        %v5233 = vor.u32 %v5232, 8388608
        %v5234 = vsub.s32 0, %v5233
        %v5235 = vadd.s32 %v5230, 1
        %vm5236 = vcmp.gt.s32.totalorder %v5235, 0
        %v5237 = vsel %vm5236, %v5235, 0
        %v5238 = vshrl.u32 %v5237, 5
        %v5239 = vand.u32 %v5237, 31
        %v5240 = vsub.s32 32, %v5239
        %v5241 = vshrl.u32 683565275, %v5240
        %v5242 = vshll.u32 683565275, %v5239
        %v5243 = vshrl.u32 2475754826, %v5240
        %v5244 = vor.u32 %v5242, %v5243
        %v5245 = vshll.u32 2475754826, %v5239
        %v5246 = vshrl.u32 2131351028, %v5240
        %v5247 = vor.u32 %v5245, %v5246
        %v5248 = vshll.u32 2131351028, %v5239
        %v5249 = vshrl.u32 2102212464, %v5240
        %v5250 = vor.u32 %v5248, %v5249
        %v5251 = vshll.u32 2102212464, %v5239
        %v5252 = vshrl.u32 920167782, %v5240
        %v5253 = vor.u32 %v5251, %v5252
        %v5254 = vshll.u32 920167782, %v5239
        %v5255 = vshrl.u32 1326507024, %v5240
        %v5256 = vor.u32 %v5254, %v5255
        %vm5257 = vcmp.lt.s32.totalorder %v5238, 1
        %vm5258 = vcmp.lt.s32.totalorder %v5238, 2
        %vm5259 = vcmp.lt.s32.totalorder %v5238, 3
        %vm5260 = vcmp.lt.s32.totalorder %v5238, 4
        %v5261 = vsel %vm5257, %v5241, %v5244
        %v5262 = vsel %vm5260, %v5250, 2102212464
        %v5263 = vsel %vm5259, %v5247, %v5262
        %v5264 = vsel %vm5258, %v5261, %v5263
        %v5265 = vsel %vm5257, %v5244, %v5247
        %v5266 = vsel %vm5260, %v5253, 920167782
        %v5267 = vsel %vm5259, %v5250, %v5266
        %v5268 = vsel %vm5258, %v5265, %v5267
        %v5269 = vsel %vm5257, %v5247, %v5250
        %v5270 = vsel %vm5260, %v5256, 1326507024
        %v5271 = vsel %vm5259, %v5253, %v5270
        %v5272 = vsel %vm5258, %v5269, %v5271
        %v5273 = vshll.u32 %v5233, 8
        %v5274 = vmul.u32.u64.compose %v5273, %v5272
        %v5275 = vextract.low.u32 %v5274
        %v5276 = vextract.high.u32 %v5274
        %v5277 = vmul.u32.u64.compose %v5273, %v5268
        %v5278 = vextract.low.u32 %v5277
        %v5279 = vextract.high.u32 %v5277
        %v5280 = vmul.u32 %v5273, %v5264
        %v5281 = vadd.s32 %v5276, %v5278
        %vm5282 = vc.u32 %v5276, %v5278
        %v5283 = vadd.s32 %v5279, 1
        %v5284 = vsel %vm5282, %v5283, %v5279
        %v5285 = vadd.s32 %v5280, %v5284
        %v5286 = vadd.s32 %v5285, 536870912
        %v5287 = vshrl.u32 %v5286, 30
        %v5288 = vshll.u32 %v5287, 30
        %v5289 = vsub.s32 %v5285, %v5288
        %vm5290 = vcmp.lt.s32.totalorder %v5289, 0
        %v5291 = vsub.s32 0, %v5289
        %v5292 = vsel %vm5290, %v5291, %v5289
        %v5293 = vclz %v5292
        %v5294 = vsub.s32 %v5293, 2
        %vm5295 = vcmp.gt.s32.totalorder 0, %v5294
        %v5296 = vsel %vm5295, 0, %v5294
        %v5297 = vsub.s32 32, %v5296
        %v5298 = vshll.u32 %v5289, %v5296
        %v5299 = vshrl.u32 %v5281, %v5297
        %v5300 = vor.u32 %v5298, %v5299
        %v5301 = vsub.s32 4294967266, %v5296
        %v5302 = vadd.s32 %v5301, 127
        %v5303 = vshll.u32 %v5302, 23
        %v5304 = vor.u32 4788187, %v5303
        %v5305 = vand.u32 2147483647, %v5304
        %v5307 = vcvt.s32.f32 %v5300
        %v5308 = vmul.f32 %v5307, %v5305
        %v5309 = vxor.u32 %v5308, 2147483648
        %v5310 = vsel %vm5227, %v5309, %v5308
        %v5311 = vsub.s32 4, %v5287
        %v5312 = vsel %vm5227, %v5311, %v5287
        %v5313 = vsel %vm5226, %v4908, %v5310
        %v5314 = vsel %vm5226, 0, %v5312
        %v5315 = vcosq.f32.pop %v5313
        %v5316 = vsinq.f32.pop %v5313
        %vm5317 = vweird.f32 %v4908
        %v5318 = vand.u32 %v5314, 3
        %vm5319 = vcmp.lt.s32.totalorder %v5318, 2
        %vm5320 = vcmp.eq.s32.totalorder %v5318, 0
        %v5321 = vxor.u32 %v5316, 2147483648
        %v5322 = vsel %vm5320, %v5315, %v5321
        %vm5323 = vcmp.eq.s32.totalorder %v5318, 2
        %v5324 = vxor.u32 %v5315, 2147483648
        %v5325 = vsel %vm5323, %v5324, %v5316
        %v5326 = vsel %vm5319, %v5322, %v5325
        %v5327 = vsel %vm5317, nan, %v5326
        %v5328 = vstv %s4910
        %v5329 = vmul.f32 %v5328, %v5224
        %v5330 = vmul.f32 %v5328, %v5327
        %v5331 = vadd.f32 %v5120, %v5329
        %v5332 = vadd.f32 %v5121, %v5330
        %5333 = vst.msk [vmem:[%s435] sm:$0xff] %vm451, %v5331
        %5334 = vst.msk [vmem:[%s435 + $0x8] sm:$0xff] %vm451, %v5332
        %s5335 = sand.u32 %s253, 1
        %s5336 = scalar_lea.sflag [#allocation7], %s5335
        %s5337 = sand.u32 %s253, 1
        %s5338 = smul.addr %s5337, 16
        %s5339 = scalar_lea.vmem [#allocation15], %s5338
        // Predicated region
        $region81: #{tpu_custom_call.1} parent=59 // pred_check
          %p5340 = pneg %p263
        $region82: #{tpu_custom_call.1} parent=59 // pred_check_branch
          %5342 = sbr.rel (%p5340) target = $region84
        $region83: #{tpu_custom_call.1} parent=59 // pred_region
          %s5343 = smul.u32 2, %s30
          %s5345 = ssub.s32 256, 256
          %5346 = vsyncadd %s5336, %s5345
          %s5347 = smul.addr %s5343, 128
          %s5348 = scalar_lea.hbm %s10, %s5347
          %s5349 = sshll.u32 %s5339, 4
          %s5350 = int_to_ptr.vmem [resolvable:$true] %s5349
          %5355 = dma.vmem_to_hbm [thread:$0]  %s5350, 256, %s5348, %s5336, 128, 128, 8
        $region84: #{tpu_custom_call.1} parent=59 // pred_fallthru
          _
      $region60: #{tpu_custom_call.1} parent=5 // pred_fallthru
        _
      %p5356 = scmp.le.s32.totalorder 2, %s25
      // Predicated region
      $region85: #{tpu_custom_call.1} parent=5 // pred_check
        %p5357 = pneg %p5356
      $region86: #{tpu_custom_call.1} parent=5 // pred_check_branch
        %5359 = sbr.rel (%p5357) target = $region88
      $region87: #{tpu_custom_call.1} parent=5 // pred_region
        %s5360 = ssub.s32 %s25, 2
        // Predicated region
        $region89: #{tpu_custom_call.1} parent=87 // pred_check
          %p5361 = pneg %p269
        $region90: #{tpu_custom_call.1} parent=87 // pred_check_branch
          %5363 = sbr.rel (%p5361) target = $region92
        $region91: #{tpu_custom_call.1} parent=87 // pred_region
          %s5364 = sand.u32 %s254, 1
          %s5365 = scalar_lea.sflag [#allocation7], %s5364
          %s5366 = sand.u32 %s254, 1
          %s5367 = smul.addr %s5366, 16
          %s5368 = scalar_lea.vmem [#allocation15], %s5367
          %5369 = dma.done %s5365, 256
        $region92: #{tpu_custom_call.1} parent=87 // pred_fallthru
          _
      $region88: #{tpu_custom_call.1} parent=5 // pred_fallthru
        _
    $region6: #{tpu_custom_call.1} parent=1 // loop_footer
      %s29 = sadd.s32 1, %s25
    $region7: #{tpu_custom_call.1} parent=1 // loop_footer_branch
      %24 = sbr.rel target = $region3
    $region8: #{tpu_custom_call.1} parent=1 // loop_exit
      _
    %5370 = vsyncpa [#allocation6], 1
    %s5371 = scalar_lea.sflag [#allocation6], 1
    %5372 = vsyncpa %s5371, 1
    %5373 = vsyncpa [#allocation10], 1
    %5374 = vsyncpa [#allocation13], 1
    %5375 = vsyncpa [#allocation7], 1
    %s5376 = scalar_lea.sflag [#allocation7], 1
    %5377 = vsyncpa %s5376, 1
    %5378 = vsyncpa [#allocation8], 1
    %s5379 = scalar_lea.sflag [#allocation8], 1
    %5380 = vsyncpa %s5379, 1

</llo_original>
